<compile_context>
chip_gen: v7x
topology: tpu7x:2x2x1
jax: 0.10.0
libtpu: 0.0.40
codegen_flags: <defaults>
</compile_context>

<pallas_src>
import functools

import jax
import jax.numpy as jnp
from jax import lax
from jax.experimental import pallas as pl
from jax.experimental.pallas import tpu as pltpu


# -----------------------------------------------------------------------------
# Fused Pallas kernel: GCN x L (both graphs) -> sim -> Sinkhorn -> partial_x ->
#                      diff_feat  +  attention pooling (both graphs)
# -----------------------------------------------------------------------------
def _fused_encoder_kernel(a_ref, x_ref, w_ref, b_ref, watt_ref, px_ref,
                          m_ref, m2r_ref,
                          diff_ref, nf2_ref, gf_ref,
                          *, num_layers, n, tau, max_iter):
    # ---------------- siamese GCN (shared stacked weights), fully unrolled -------
    a = a_ref[0]                              # (2N, 2N) block-diag A_norm, bf16
    h = x_ref[0]                              # (2N, D)  zero-padded input feats, f32
    for l in range(num_layers):               # unrolled at trace time (static idx)
        agg = jnp.dot(a, h.astype(jnp.bfloat16),
                      preferred_element_type=jnp.float32)             # (2N, D)
        h = jnp.dot(agg.astype(jnp.bfloat16), w_ref[l],
                    preferred_element_type=jnp.float32) + b_ref[l]
        h = jnp.maximum(h, 0.0)

    h1 = h[:n]                                # (N, D) graph-1 node features
    h2 = h[n:]                                # (N, D) graph-2 node features
    m = m_ref[0]                              # (2N, 1) valid-node mask (column)
    m1 = m[:n]                                # (N, 1)
    m2c = m[n:]                               # (N, 1) graph-2 mask, column form
    m2r = m2r_ref[0]                          # (1, N) graph-2 mask, row form

    # ---------------- similarity + log-space Sinkhorn ----------------------------
    # Kept in f32: tau = 0.005 amplifies rounding of sim by 200x in log space.
    sim = lax.dot_general(h1, h2, (((1,), (1,)), ((), ())),
                          preferred_element_type=jnp.float32)          # (N, N)
    valid = (m1 * m2r) > 0.0                  # (N, N) bool, hoisted out of the loop
    neg = jnp.float32(-1e30)
    log_s = jnp.where(valid, sim * jnp.float32(1.0 / tau), neg)

    # Reference order (log-forward Sinkhorn): even iterations normalize rows
    # (last dim), odd iterations normalize columns.  Pairwise-unrolled.
    for _ in range(max_iter // 2):
        rmax = jnp.max(log_s, axis=1, keepdims=True)
        log_s = log_s - (rmax + jnp.log(
            jnp.sum(jnp.exp(log_s - rmax), axis=1, keepdims=True)))
        cmax = jnp.max(log_s, axis=0, keepdims=True)
        log_s = log_s - (cmax + jnp.log(
            jnp.sum(jnp.exp(log_s - cmax), axis=0, keepdims=True)))
    s = jnp.where(valid, jnp.exp(log_s), 0.0)

    # ---------------- partial_x handling (force already-matched rows/cols) -------
    px = px_ref[0]                                                     # (N, N)
    g1_matched = jnp.sum(px, axis=1, keepdims=True) > 0.0              # (N, 1)
    g2_matched = jnp.sum(px, axis=0, keepdims=True) > 0.0              # (1, N)
    s = jnp.where(g1_matched, 0.0, s)
    s = jnp.where(g2_matched, 0.0, s)
    s = s + px

    # diff_feat = node_feat_1 - sim_mat @ node_feat_2
    diff_ref[0] = h1 - jnp.dot(s, h2, preferred_element_type=jnp.float32)
    nf2_ref[0] = h2

    # ---------------- GraphAttentionPooling (both graphs, batched) ---------------
    hm1 = h1 * m1                                                      # (N, D)
    hm2 = h2 * m2c                                                     # (N, D)
    cnt1 = jnp.sum(m1, axis=0, keepdims=True)                          # (1, 1)
    cnt2 = jnp.sum(m2c, axis=0, keepdims=True)                         # (1, 1)
    means = jnp.concatenate(
        [jnp.sum(hm1, axis=0, keepdims=True) * pl.reciprocal(cnt1, approx=True),
         jnp.sum(hm2, axis=0, keepdims=True) * pl.reciprocal(cnt2, approx=True)],
        axis=0)                                                        # (2, D)
    g = jnp.tanh(jnp.dot(means, watt_ref[...],
                         preferred_element_type=jnp.float32))          # (2, D)
    coef1 = jax.nn.sigmoid(lax.dot_general(h1, g[0:1], (((1,), (1,)), ((), ())),
                                           preferred_element_type=jnp.float32))
    coef2 = jax.nn.sigmoid(lax.dot_general(h2, g[1:2], (((1,), (1,)), ((), ())),
                                           preferred_element_type=jnp.float32))
    gf_ref[0, 0:1, :] = jnp.sum(coef1 * hm1, axis=0, keepdims=True)    # graph-1 pool
    gf_ref[0, 1:2, :] = jnp.sum(coef2 * hm2, axis=0, keepdims=True)    # graph-2 pool


def fused_graph_encoder(a_blk, x0, w_stack, b_stack, w_att, px,
                        node_mask, node_mask2_row, *, tau=0.005, max_iter=20):
    """Single pallas_call over the batch of siamese pairs."""
    assert max_iter % 2 == 0
    B, two_n, D = x0.shape
    n = two_n // 2
    L = w_stack.shape[0]
    kernel = functools.partial(_fused_encoder_kernel, num_layers=L, n=n,
                               tau=tau, max_iter=max_iter)
    diff, nf2, gf = pl.pallas_call(
        kernel,
        out_shape=(
            jax.ShapeDtypeStruct((B, n, D), jnp.float32),   # diff_feat
            jax.ShapeDtypeStruct((B, n, D), jnp.float32),   # node_feat_2
            jax.ShapeDtypeStruct((B, 2, D), jnp.float32),   # [global_feat_1; global_feat_2]
        ),
        grid=(B,),
        in_specs=[
            pl.BlockSpec((1, two_n, two_n), lambda i: (i, 0, 0)),  # block-diag A_norm (bf16)
            pl.BlockSpec((1, two_n, D), lambda i: (i, 0, 0)),      # padded input features
            pl.BlockSpec((L, D, D), lambda i: (0, 0, 0)),          # stacked GCN weights (shared, bf16)
            pl.BlockSpec((L, 1, D), lambda i: (0, 0, 0)),          # stacked GCN biases (shared)
            pl.BlockSpec((D, D), lambda i: (0, 0)),                # attention-pool weight
            pl.BlockSpec((1, n, n), lambda i: (i, 0, 0)),          # partial assignment
            pl.BlockSpec((1, two_n, 1), lambda i: (i, 0, 0)),      # valid-node mask (column)
            pl.BlockSpec((1, 1, n), lambda i: (i, 0, 0)),          # graph-2 mask (row)
        ],
        out_specs=(
            pl.BlockSpec((1, n, D), lambda i: (i, 0, 0)),
            pl.BlockSpec((1, n, D), lambda i: (i, 0, 0)),
            pl.BlockSpec((1, 2, D), lambda i: (i, 0, 0)),
        ),
        compiler_params=pltpu.CompilerParams(
            dimension_semantics=("parallel",)),   # pairs shard across TCs on v7x
    )(a_blk, x0, w_stack, b_stack, w_att, px, node_mask, node_mask2_row)
    return diff, nf2, gf


# -----------------------------------------------------------------------------
# Plain-JAX glue (graph construction, parameter init)
# -----------------------------------------------------------------------------
def _glorot(key, shape):
    fan_in, fan_out = shape
    limit = jnp.sqrt(6.0 / (fan_in + fan_out))
    return jax.random.uniform(key, shape, jnp.float32, -limit, limit)


def init_graph_encoder_params(key, node_feature_dim, node_output_size,
                              one_hot_degree, num_layers):
    one_hot_dim = one_hot_degree + 1 if one_hot_degree > 0 else 0
    in_dim = node_feature_dim + one_hot_dim
    D = node_output_size
    assert in_dim <= D, "fused kernel zero-pads the first layer's fin up to D"
    dims = [in_dim] + [D] * num_layers
    # Stack per-layer weights into one array so the kernel DMAs them once.
    w_stack = jnp.zeros((num_layers, D, D), jnp.float32)
    b_stack = jnp.zeros((num_layers, 1, D), jnp.float32)
    for l in range(num_layers):
        key, kw = jax.random.split(key)
        w = _glorot(kw, (dims[l], dims[l + 1]))
        w_stack = w_stack.at[l, :dims[l], :].set(w)   # zero-pad first layer's fin
    key, ka = jax.random.split(key)
    w_att = _glorot(ka, (D, D))
    return {"w_gcn": w_stack.astype(jnp.bfloat16),    # bf16 MXU inputs, f32 accumulate
            "b_gcn": b_stack,
            "att": w_att}


def construct_dense_graphs(adj, x, one_hot_degree):
    """construct_graph_batch: append one-hot node-degree features, normalize adjacency."""
    B, N, _ = adj.shape
    if one_hot_degree > 0:
        deg = jnp.sum(adj, axis=-1).astype(jnp.int32)
        deg = jnp.clip(deg, 0, one_hot_degree)
        feat = jnp.concatenate(
            [x, jax.nn.one_hot(deg, one_hot_degree + 1, dtype=jnp.float32)], axis=-1)
    else:
        feat = x
    a_hat = adj + jnp.eye(N, dtype=jnp.float32)[None]
    d_inv_sqrt = 1.0 / jnp.sqrt(jnp.sum(a_hat, axis=-1))
    a_norm = d_inv_sqrt[:, :, None] * a_hat * d_inv_sqrt[:, None, :]
    return feat.astype(jnp.float32), a_norm.astype(jnp.float32)


@functools.partial(jax.jit, static_argnames=("one_hot_degree",))
def graph_encoder_forward(params, adj1, x1, adj2, x2, partial_x, one_hot_degree):
    B, N, _ = adj1.shape
    D = params["att"].shape[0]
    feat1, a1 = construct_dense_graphs(adj1, x1, one_hot_degree)
    feat2, a2 = construct_dense_graphs(adj2, x2, one_hot_degree)
    in_dim = feat1.shape[-1]

    # Pack each siamese pair: graph-1 nodes then graph-2 nodes along the sublane
    # axis, block-diagonal normalized adjacency, features zero-padded to D columns.
    a_blk = jnp.zeros((B, 2 * N, 2 * N), jnp.float32)
    a_blk = a_blk.at[:, :N, :N].set(a1).at[:, N:, N:].set(a2)
    x0 = jnp.zeros((B, 2 * N, D), jnp.float32)
    x0 = x0.at[:, :N, :in_dim].set(feat1).at[:, N:, :in_dim].set(feat2)

    # partial_x: drop the dummy last row/col (px[:-1, :-1]) before the kernel
    px = partial_x[:, :-1, :-1].astype(jnp.float32)

    # dense uniform batch: all N nodes valid in every graph
    node_mask = jnp.ones((B, 2 * N, 1), jnp.float32)
    node_mask2_row = jnp.ones((B, 1, N), jnp.float32)

    diff_feat, node_feat_2, gfeat = fused_graph_encoder(
        a_blk.astype(jnp.bfloat16), x0, params["w_gcn"], params["b_gcn"],
        params["att"], px, node_mask, node_mask2_row, tau=0.005, max_iter=20)

    global_feat_1 = gfeat[:, 0, :]   # pooled graph-1 features
    global_feat_2 = gfeat[:, 1, :]   # pooled graph-2 features (computed from h2)
    return diff_feat, node_feat_2, global_feat_1, global_feat_2


def random_adjacency(key, B, N, p=0.3):
    u = jax.random.uniform(key, (B, N, N))
    upper = jnp.triu((u < p).astype(jnp.float32), k=1)
    return upper + jnp.swapaxes(upper, 1, 2)


# -----------------------------------------------------------------------------
# Main
# -----------------------------------------------------------------------------
if __name__ == "__main__":
    B, N = 2, 16
    node_feature_dim = 2
    one_hot_degree = 5
    node_output_size = 32
    num_layers = 10
    batch_norm = False  # see TODO(synk) above

    key = jax.random.PRNGKey(0)
    ka1, ka2, kx1, kx2 = jax.random.split(key, 4)
    adj1 = random_adjacency(ka1, B, N)
    adj2 = random_adjacency(ka2, B, N)
    x1 = jax.random.normal(kx1, (B, N, node_feature_dim), jnp.float32)
    x2 = jax.random.normal(kx2, (B, N, node_feature_dim), jnp.float32)

    # partial assignment (with dummy last row/col, as in the PyTorch code)
    partial_x = jnp.zeros((B, N + 1, N + 1), jnp.float32)
    partial_x = partial_x.at[:, 0, 3].set(1.0).at[:, 1, 0].set(1.0)

    params = init_graph_encoder_params(
        jax.random.PRNGKey(42), node_feature_dim, node_output_size,
        one_hot_degree, num_layers)

    outs = graph_encoder_forward(params, adj1, x1, adj2, x2, partial_x,
                                 one_hot_degree=one_hot_degree)
    outs = jax.block_until_ready(outs)
    diff_feat, node_feat_2, global_feat_1, global_feat_2 = outs

    assert diff_feat.shape == (B, N, node_output_size)
    assert node_feat_2.shape == (B, N, node_output_size)
    assert global_feat_1.shape == (B, node_output_size)
    assert global_feat_2.shape == (B, node_output_size)
    for o in outs:
        assert bool(jnp.all(jnp.isfinite(o)))

    print("KERNEL_OK")
</pallas_src>

<mosaic_0001>
module attributes {stable_mosaic.version = 11 : i64} {
  func.func @_fused_encoder_kernel(%arg0: i32, %arg1: memref<1x32x32xbf16, #tpu.memory_space<vmem>>, %arg2: memref<1x32x32xf32, #tpu.memory_space<vmem>>, %arg3: memref<10x32x32xbf16, #tpu.memory_space<vmem>>, %arg4: memref<10x1x32xf32, #tpu.memory_space<vmem>>, %arg5: memref<32x32xf32, #tpu.memory_space<vmem>>, %arg6: memref<1x16x16xf32, #tpu.memory_space<vmem>>, %arg7: memref<1x32x1xf32, #tpu.memory_space<vmem>>, %arg8: memref<1x1x16xf32, #tpu.memory_space<vmem>>, %arg9: memref<1x16x32xf32, #tpu.memory_space<vmem>>, %arg10: memref<1x16x32xf32, #tpu.memory_space<vmem>>, %arg11: memref<1x2x32xf32, #tpu.memory_space<vmem>>) attributes {dimension_semantics = [#tpu.dimension_semantics<parallel>], iteration_bounds = array<i64: 2>, scalar_prefetch = 0 : i64, scratch_operands = 0 : i64, tpu.core_type = #tpu.core_type<tc>, window_params = [{transform_indices = @transform_0, window_bounds = array<i64: 1, 32, 32>}, {transform_indices = @transform_1, window_bounds = array<i64: 1, 32, 32>}, {pipeline_mode = #tpu.pipeline_mode<synchronous>, transform_indices = @transform_2, window_bounds = array<i64: 10, 32, 32>}, {pipeline_mode = #tpu.pipeline_mode<synchronous>, transform_indices = @transform_3, window_bounds = array<i64: 10, 1, 32>}, {pipeline_mode = #tpu.pipeline_mode<synchronous>, transform_indices = @transform_4, window_bounds = array<i64: 32, 32>}, {transform_indices = @transform_5, window_bounds = array<i64: 1, 16, 16>}, {transform_indices = @transform_6, window_bounds = array<i64: 1, 32, 1>}, {transform_indices = @transform_7, window_bounds = array<i64: 1, 1, 16>}, {transform_indices = @transform_8, window_bounds = array<i64: 1, 16, 32>}, {transform_indices = @transform_9, window_bounds = array<i64: 1, 16, 32>}, {transform_indices = @transform_10, window_bounds = array<i64: 1, 2, 32>}]} {
    %c0 = arith.constant 0 : index
    %c0_0 = arith.constant 0 : index
    %c0_1 = arith.constant 0 : index
    %0 = vector.load %arg1[%c0, %c0_0, %c0_1] : memref<1x32x32xbf16, #tpu.memory_space<vmem>>, vector<1x32x32xbf16>
    %1 = vector.shape_cast %0 : vector<1x32x32xbf16> to vector<32x32xbf16>
    %c0_2 = arith.constant 0 : index
    %c0_3 = arith.constant 0 : index
    %c0_4 = arith.constant 0 : index
    %2 = vector.load %arg2[%c0_2, %c0_3, %c0_4] : memref<1x32x32xf32, #tpu.memory_space<vmem>>, vector<1x32x32xf32>
    %3 = vector.shape_cast %2 : vector<1x32x32xf32> to vector<32x32xf32>
    %4 = arith.truncf %3 : vector<32x32xf32> to vector<32x32xbf16>
    %cst = arith.constant dense<0.000000e+00> : vector<32x32xf32>
    %5 = tpu.matmul %1, %4, %cst {dimension_numbers = #tpu.dot_dimension_numbers<[1], [0], [0], [1], [0, 0, 1, 1], [], []>} : vector<32x32xbf16>, vector<32x32xbf16>, vector<32x32xf32> -> vector<32x32xf32>
    %6 = arith.truncf %5 : vector<32x32xf32> to vector<32x32xbf16>
    %c0_5 = arith.constant 0 : index
    %c0_6 = arith.constant 0 : index
    %c0_7 = arith.constant 0 : index
    %7 = vector.load %arg3[%c0_5, %c0_6, %c0_7] : memref<10x32x32xbf16, #tpu.memory_space<vmem>>, vector<1x32x32xbf16>
    %8 = vector.shape_cast %7 : vector<1x32x32xbf16> to vector<32x32xbf16>
    %cst_8 = arith.constant dense<0.000000e+00> : vector<32x32xf32>
    %9 = tpu.matmul %6, %8, %cst_8 {dimension_numbers = #tpu.dot_dimension_numbers<[1], [0], [0], [1], [0, 0, 1, 1], [], []>} : vector<32x32xbf16>, vector<32x32xbf16>, vector<32x32xf32> -> vector<32x32xf32>
    %c0_9 = arith.constant 0 : index
    %c0_10 = arith.constant 0 : index
    %c0_11 = arith.constant 0 : index
    %10 = vector.load %arg4[%c0_9, %c0_10, %c0_11] : memref<10x1x32xf32, #tpu.memory_space<vmem>>, vector<1x1x32xf32>
    %11 = vector.shape_cast %10 : vector<1x1x32xf32> to vector<1x32xf32>
    %12 = vector.broadcast %11 : vector<1x32xf32> to vector<32x32xf32>
    %13 = arith.addf %9, %12 : vector<32x32xf32>
    %cst_12 = arith.constant 0.000000e+00 : f32
    %14 = vector.broadcast %cst_12 : f32 to vector<32x32xf32>
    %15 = arith.maximumf %13, %14 : vector<32x32xf32>
    %16 = arith.truncf %15 : vector<32x32xf32> to vector<32x32xbf16>
    %cst_13 = arith.constant dense<0.000000e+00> : vector<32x32xf32>
    %17 = tpu.matmul %1, %16, %cst_13 {dimension_numbers = #tpu.dot_dimension_numbers<[1], [0], [0], [1], [0, 0, 1, 1], [], []>} : vector<32x32xbf16>, vector<32x32xbf16>, vector<32x32xf32> -> vector<32x32xf32>
    %18 = arith.truncf %17 : vector<32x32xf32> to vector<32x32xbf16>
    %c1 = arith.constant 1 : index
    %c0_14 = arith.constant 0 : index
    %c0_15 = arith.constant 0 : index
    %19 = vector.load %arg3[%c1, %c0_14, %c0_15] : memref<10x32x32xbf16, #tpu.memory_space<vmem>>, vector<1x32x32xbf16>
    %20 = vector.shape_cast %19 : vector<1x32x32xbf16> to vector<32x32xbf16>
    %cst_16 = arith.constant dense<0.000000e+00> : vector<32x32xf32>
    %21 = tpu.matmul %18, %20, %cst_16 {dimension_numbers = #tpu.dot_dimension_numbers<[1], [0], [0], [1], [0, 0, 1, 1], [], []>} : vector<32x32xbf16>, vector<32x32xbf16>, vector<32x32xf32> -> vector<32x32xf32>
    %c1_17 = arith.constant 1 : index
    %c0_18 = arith.constant 0 : index
    %c0_19 = arith.constant 0 : index
    %22 = vector.load %arg4[%c1_17, %c0_18, %c0_19] : memref<10x1x32xf32, #tpu.memory_space<vmem>>, vector<1x1x32xf32>
    %23 = vector.shape_cast %22 : vector<1x1x32xf32> to vector<1x32xf32>
    %24 = vector.broadcast %23 : vector<1x32xf32> to vector<32x32xf32>
    %25 = arith.addf %21, %24 : vector<32x32xf32>
    %cst_20 = arith.constant 0.000000e+00 : f32
    %26 = vector.broadcast %cst_20 : f32 to vector<32x32xf32>
    %27 = arith.maximumf %25, %26 : vector<32x32xf32>
    %28 = arith.truncf %27 : vector<32x32xf32> to vector<32x32xbf16>
    %cst_21 = arith.constant dense<0.000000e+00> : vector<32x32xf32>
    %29 = tpu.matmul %1, %28, %cst_21 {dimension_numbers = #tpu.dot_dimension_numbers<[1], [0], [0], [1], [0, 0, 1, 1], [], []>} : vector<32x32xbf16>, vector<32x32xbf16>, vector<32x32xf32> -> vector<32x32xf32>
    %30 = arith.truncf %29 : vector<32x32xf32> to vector<32x32xbf16>
    %c2 = arith.constant 2 : index
    %c0_22 = arith.constant 0 : index
    %c0_23 = arith.constant 0 : index
    %31 = vector.load %arg3[%c2, %c0_22, %c0_23] : memref<10x32x32xbf16, #tpu.memory_space<vmem>>, vector<1x32x32xbf16>
    %32 = vector.shape_cast %31 : vector<1x32x32xbf16> to vector<32x32xbf16>
    %cst_24 = arith.constant dense<0.000000e+00> : vector<32x32xf32>
    %33 = tpu.matmul %30, %32, %cst_24 {dimension_numbers = #tpu.dot_dimension_numbers<[1], [0], [0], [1], [0, 0, 1, 1], [], []>} : vector<32x32xbf16>, vector<32x32xbf16>, vector<32x32xf32> -> vector<32x32xf32>
    %c2_25 = arith.constant 2 : index
    %c0_26 = arith.constant 0 : index
    %c0_27 = arith.constant 0 : index
    %34 = vector.load %arg4[%c2_25, %c0_26, %c0_27] : memref<10x1x32xf32, #tpu.memory_space<vmem>>, vector<1x1x32xf32>
    %35 = vector.shape_cast %34 : vector<1x1x32xf32> to vector<1x32xf32>
    %36 = vector.broadcast %35 : vector<1x32xf32> to vector<32x32xf32>
    %37 = arith.addf %33, %36 : vector<32x32xf32>
    %cst_28 = arith.constant 0.000000e+00 : f32
    %38 = vector.broadcast %cst_28 : f32 to vector<32x32xf32>
    %39 = arith.maximumf %37, %38 : vector<32x32xf32>
    %40 = arith.truncf %39 : vector<32x32xf32> to vector<32x32xbf16>
    %cst_29 = arith.constant dense<0.000000e+00> : vector<32x32xf32>
    %41 = tpu.matmul %1, %40, %cst_29 {dimension_numbers = #tpu.dot_dimension_numbers<[1], [0], [0], [1], [0, 0, 1, 1], [], []>} : vector<32x32xbf16>, vector<32x32xbf16>, vector<32x32xf32> -> vector<32x32xf32>
    %42 = arith.truncf %41 : vector<32x32xf32> to vector<32x32xbf16>
    %c3 = arith.constant 3 : index
    %c0_30 = arith.constant 0 : index
    %c0_31 = arith.constant 0 : index
    %43 = vector.load %arg3[%c3, %c0_30, %c0_31] : memref<10x32x32xbf16, #tpu.memory_space<vmem>>, vector<1x32x32xbf16>
    %44 = vector.shape_cast %43 : vector<1x32x32xbf16> to vector<32x32xbf16>
    %cst_32 = arith.constant dense<0.000000e+00> : vector<32x32xf32>
    %45 = tpu.matmul %42, %44, %cst_32 {dimension_numbers = #tpu.dot_dimension_numbers<[1], [0], [0], [1], [0, 0, 1, 1], [], []>} : vector<32x32xbf16>, vector<32x32xbf16>, vector<32x32xf32> -> vector<32x32xf32>
    %c3_33 = arith.constant 3 : index
    %c0_34 = arith.constant 0 : index
    %c0_35 = arith.constant 0 : index
    %46 = vector.load %arg4[%c3_33, %c0_34, %c0_35] : memref<10x1x32xf32, #tpu.memory_space<vmem>>, vector<1x1x32xf32>
    %47 = vector.shape_cast %46 : vector<1x1x32xf32> to vector<1x32xf32>
    %48 = vector.broadcast %47 : vector<1x32xf32> to vector<32x32xf32>
    %49 = arith.addf %45, %48 : vector<32x32xf32>
    %cst_36 = arith.constant 0.000000e+00 : f32
    %50 = vector.broadcast %cst_36 : f32 to vector<32x32xf32>
    %51 = arith.maximumf %49, %50 : vector<32x32xf32>
    %52 = arith.truncf %51 : vector<32x32xf32> to vector<32x32xbf16>
    %cst_37 = arith.constant dense<0.000000e+00> : vector<32x32xf32>
    %53 = tpu.matmul %1, %52, %cst_37 {dimension_numbers = #tpu.dot_dimension_numbers<[1], [0], [0], [1], [0, 0, 1, 1], [], []>} : vector<32x32xbf16>, vector<32x32xbf16>, vector<32x32xf32> -> vector<32x32xf32>
    %54 = arith.truncf %53 : vector<32x32xf32> to vector<32x32xbf16>
    %c4 = arith.constant 4 : index
    %c0_38 = arith.constant 0 : index
    %c0_39 = arith.constant 0 : index
    %55 = vector.load %arg3[%c4, %c0_38, %c0_39] : memref<10x32x32xbf16, #tpu.memory_space<vmem>>, vector<1x32x32xbf16>
    %56 = vector.shape_cast %55 : vector<1x32x32xbf16> to vector<32x32xbf16>
    %cst_40 = arith.constant dense<0.000000e+00> : vector<32x32xf32>
    %57 = tpu.matmul %54, %56, %cst_40 {dimension_numbers = #tpu.dot_dimension_numbers<[1], [0], [0], [1], [0, 0, 1, 1], [], []>} : vector<32x32xbf16>, vector<32x32xbf16>, vector<32x32xf32> -> vector<32x32xf32>
    %c4_41 = arith.constant 4 : index
    %c0_42 = arith.constant 0 : index
    %c0_43 = arith.constant 0 : index
    %58 = vector.load %arg4[%c4_41, %c0_42, %c0_43] : memref<10x1x32xf32, #tpu.memory_space<vmem>>, vector<1x1x32xf32>
    %59 = vector.shape_cast %58 : vector<1x1x32xf32> to vector<1x32xf32>
    %60 = vector.broadcast %59 : vector<1x32xf32> to vector<32x32xf32>
    %61 = arith.addf %57, %60 : vector<32x32xf32>
    %cst_44 = arith.constant 0.000000e+00 : f32
    %62 = vector.broadcast %cst_44 : f32 to vector<32x32xf32>
    %63 = arith.maximumf %61, %62 : vector<32x32xf32>
    %64 = arith.truncf %63 : vector<32x32xf32> to vector<32x32xbf16>
    %cst_45 = arith.constant dense<0.000000e+00> : vector<32x32xf32>
    %65 = tpu.matmul %1, %64, %cst_45 {dimension_numbers = #tpu.dot_dimension_numbers<[1], [0], [0], [1], [0, 0, 1, 1], [], []>} : vector<32x32xbf16>, vector<32x32xbf16>, vector<32x32xf32> -> vector<32x32xf32>
    %66 = arith.truncf %65 : vector<32x32xf32> to vector<32x32xbf16>
    %c5 = arith.constant 5 : index
    %c0_46 = arith.constant 0 : index
    %c0_47 = arith.constant 0 : index
    %67 = vector.load %arg3[%c5, %c0_46, %c0_47] : memref<10x32x32xbf16, #tpu.memory_space<vmem>>, vector<1x32x32xbf16>
    %68 = vector.shape_cast %67 : vector<1x32x32xbf16> to vector<32x32xbf16>
    %cst_48 = arith.constant dense<0.000000e+00> : vector<32x32xf32>
    %69 = tpu.matmul %66, %68, %cst_48 {dimension_numbers = #tpu.dot_dimension_numbers<[1], [0], [0], [1], [0, 0, 1, 1], [], []>} : vector<32x32xbf16>, vector<32x32xbf16>, vector<32x32xf32> -> vector<32x32xf32>
    %c5_49 = arith.constant 5 : index
    %c0_50 = arith.constant 0 : index
    %c0_51 = arith.constant 0 : index
    %70 = vector.load %arg4[%c5_49, %c0_50, %c0_51] : memref<10x1x32xf32, #tpu.memory_space<vmem>>, vector<1x1x32xf32>
    %71 = vector.shape_cast %70 : vector<1x1x32xf32> to vector<1x32xf32>
    %72 = vector.broadcast %71 : vector<1x32xf32> to vector<32x32xf32>
    %73 = arith.addf %69, %72 : vector<32x32xf32>
    %cst_52 = arith.constant 0.000000e+00 : f32
    %74 = vector.broadcast %cst_52 : f32 to vector<32x32xf32>
    %75 = arith.maximumf %73, %74 : vector<32x32xf32>
    %76 = arith.truncf %75 : vector<32x32xf32> to vector<32x32xbf16>
    %cst_53 = arith.constant dense<0.000000e+00> : vector<32x32xf32>
    %77 = tpu.matmul %1, %76, %cst_53 {dimension_numbers = #tpu.dot_dimension_numbers<[1], [0], [0], [1], [0, 0, 1, 1], [], []>} : vector<32x32xbf16>, vector<32x32xbf16>, vector<32x32xf32> -> vector<32x32xf32>
    %78 = arith.truncf %77 : vector<32x32xf32> to vector<32x32xbf16>
    %c6 = arith.constant 6 : index
    %c0_54 = arith.constant 0 : index
    %c0_55 = arith.constant 0 : index
    %79 = vector.load %arg3[%c6, %c0_54, %c0_55] : memref<10x32x32xbf16, #tpu.memory_space<vmem>>, vector<1x32x32xbf16>
    %80 = vector.shape_cast %79 : vector<1x32x32xbf16> to vector<32x32xbf16>
    %cst_56 = arith.constant dense<0.000000e+00> : vector<32x32xf32>
    %81 = tpu.matmul %78, %80, %cst_56 {dimension_numbers = #tpu.dot_dimension_numbers<[1], [0], [0], [1], [0, 0, 1, 1], [], []>} : vector<32x32xbf16>, vector<32x32xbf16>, vector<32x32xf32> -> vector<32x32xf32>
    %c6_57 = arith.constant 6 : index
    %c0_58 = arith.constant 0 : index
    %c0_59 = arith.constant 0 : index
    %82 = vector.load %arg4[%c6_57, %c0_58, %c0_59] : memref<10x1x32xf32, #tpu.memory_space<vmem>>, vector<1x1x32xf32>
    %83 = vector.shape_cast %82 : vector<1x1x32xf32> to vector<1x32xf32>
    %84 = vector.broadcast %83 : vector<1x32xf32> to vector<32x32xf32>
    %85 = arith.addf %81, %84 : vector<32x32xf32>
    %cst_60 = arith.constant 0.000000e+00 : f32
    %86 = vector.broadcast %cst_60 : f32 to vector<32x32xf32>
    %87 = arith.maximumf %85, %86 : vector<32x32xf32>
    %88 = arith.truncf %87 : vector<32x32xf32> to vector<32x32xbf16>
    %cst_61 = arith.constant dense<0.000000e+00> : vector<32x32xf32>
    %89 = tpu.matmul %1, %88, %cst_61 {dimension_numbers = #tpu.dot_dimension_numbers<[1], [0], [0], [1], [0, 0, 1, 1], [], []>} : vector<32x32xbf16>, vector<32x32xbf16>, vector<32x32xf32> -> vector<32x32xf32>
    %90 = arith.truncf %89 : vector<32x32xf32> to vector<32x32xbf16>
    %c7 = arith.constant 7 : index
    %c0_62 = arith.constant 0 : index
    %c0_63 = arith.constant 0 : index
    %91 = vector.load %arg3[%c7, %c0_62, %c0_63] : memref<10x32x32xbf16, #tpu.memory_space<vmem>>, vector<1x32x32xbf16>
    %92 = vector.shape_cast %91 : vector<1x32x32xbf16> to vector<32x32xbf16>
    %cst_64 = arith.constant dense<0.000000e+00> : vector<32x32xf32>
    %93 = tpu.matmul %90, %92, %cst_64 {dimension_numbers = #tpu.dot_dimension_numbers<[1], [0], [0], [1], [0, 0, 1, 1], [], []>} : vector<32x32xbf16>, vector<32x32xbf16>, vector<32x32xf32> -> vector<32x32xf32>
    %c7_65 = arith.constant 7 : index
    %c0_66 = arith.constant 0 : index
    %c0_67 = arith.constant 0 : index
    %94 = vector.load %arg4[%c7_65, %c0_66, %c0_67] : memref<10x1x32xf32, #tpu.memory_space<vmem>>, vector<1x1x32xf32>
    %95 = vector.shape_cast %94 : vector<1x1x32xf32> to vector<1x32xf32>
    %96 = vector.broadcast %95 : vector<1x32xf32> to vector<32x32xf32>
    %97 = arith.addf %93, %96 : vector<32x32xf32>
    %cst_68 = arith.constant 0.000000e+00 : f32
    %98 = vector.broadcast %cst_68 : f32 to vector<32x32xf32>
    %99 = arith.maximumf %97, %98 : vector<32x32xf32>
    %100 = arith.truncf %99 : vector<32x32xf32> to vector<32x32xbf16>
    %cst_69 = arith.constant dense<0.000000e+00> : vector<32x32xf32>
    %101 = tpu.matmul %1, %100, %cst_69 {dimension_numbers = #tpu.dot_dimension_numbers<[1], [0], [0], [1], [0, 0, 1, 1], [], []>} : vector<32x32xbf16>, vector<32x32xbf16>, vector<32x32xf32> -> vector<32x32xf32>
    %102 = arith.truncf %101 : vector<32x32xf32> to vector<32x32xbf16>
    %c8 = arith.constant 8 : index
    %c0_70 = arith.constant 0 : index
    %c0_71 = arith.constant 0 : index
    %103 = vector.load %arg3[%c8, %c0_70, %c0_71] : memref<10x32x32xbf16, #tpu.memory_space<vmem>>, vector<1x32x32xbf16>
    %104 = vector.shape_cast %103 : vector<1x32x32xbf16> to vector<32x32xbf16>
    %cst_72 = arith.constant dense<0.000000e+00> : vector<32x32xf32>
    %105 = tpu.matmul %102, %104, %cst_72 {dimension_numbers = #tpu.dot_dimension_numbers<[1], [0], [0], [1], [0, 0, 1, 1], [], []>} : vector<32x32xbf16>, vector<32x32xbf16>, vector<32x32xf32> -> vector<32x32xf32>
    %c8_73 = arith.constant 8 : index
    %c0_74 = arith.constant 0 : index
    %c0_75 = arith.constant 0 : index
    %106 = vector.load %arg4[%c8_73, %c0_74, %c0_75] : memref<10x1x32xf32, #tpu.memory_space<vmem>>, vector<1x1x32xf32>
    %107 = vector.shape_cast %106 : vector<1x1x32xf32> to vector<1x32xf32>
    %108 = vector.broadcast %107 : vector<1x32xf32> to vector<32x32xf32>
    %109 = arith.addf %105, %108 : vector<32x32xf32>
    %cst_76 = arith.constant 0.000000e+00 : f32
    %110 = vector.broadcast %cst_76 : f32 to vector<32x32xf32>
    %111 = arith.maximumf %109, %110 : vector<32x32xf32>
    %112 = arith.truncf %111 : vector<32x32xf32> to vector<32x32xbf16>
    %cst_77 = arith.constant dense<0.000000e+00> : vector<32x32xf32>
    %113 = tpu.matmul %1, %112, %cst_77 {dimension_numbers = #tpu.dot_dimension_numbers<[1], [0], [0], [1], [0, 0, 1, 1], [], []>} : vector<32x32xbf16>, vector<32x32xbf16>, vector<32x32xf32> -> vector<32x32xf32>
    %114 = arith.truncf %113 : vector<32x32xf32> to vector<32x32xbf16>
    %c9 = arith.constant 9 : index
    %c0_78 = arith.constant 0 : index
    %c0_79 = arith.constant 0 : index
    %115 = vector.load %arg3[%c9, %c0_78, %c0_79] : memref<10x32x32xbf16, #tpu.memory_space<vmem>>, vector<1x32x32xbf16>
    %116 = vector.shape_cast %115 : vector<1x32x32xbf16> to vector<32x32xbf16>
    %cst_80 = arith.constant dense<0.000000e+00> : vector<32x32xf32>
    %117 = tpu.matmul %114, %116, %cst_80 {dimension_numbers = #tpu.dot_dimension_numbers<[1], [0], [0], [1], [0, 0, 1, 1], [], []>} : vector<32x32xbf16>, vector<32x32xbf16>, vector<32x32xf32> -> vector<32x32xf32>
    %c9_81 = arith.constant 9 : index
    %c0_82 = arith.constant 0 : index
    %c0_83 = arith.constant 0 : index
    %118 = vector.load %arg4[%c9_81, %c0_82, %c0_83] : memref<10x1x32xf32, #tpu.memory_space<vmem>>, vector<1x1x32xf32>
    %119 = vector.shape_cast %118 : vector<1x1x32xf32> to vector<1x32xf32>
    %120 = vector.broadcast %119 : vector<1x32xf32> to vector<32x32xf32>
    %121 = arith.addf %117, %120 : vector<32x32xf32>
    %cst_84 = arith.constant 0.000000e+00 : f32
    %122 = vector.broadcast %cst_84 : f32 to vector<32x32xf32>
    %123 = arith.maximumf %121, %122 : vector<32x32xf32>
    %124 = vector.extract_strided_slice %123 {offsets = [0, 0], sizes = [16, 32], strides = [1, 1]} : vector<32x32xf32> to vector<16x32xf32>
    %125 = vector.extract_strided_slice %123 {offsets = [16, 0], sizes = [16, 32], strides = [1, 1]} : vector<32x32xf32> to vector<16x32xf32>
    %c0_85 = arith.constant 0 : index
    %c0_86 = arith.constant 0 : index
    %c0_87 = arith.constant 0 : index
    %126 = vector.load %arg7[%c0_85, %c0_86, %c0_87] : memref<1x32x1xf32, #tpu.memory_space<vmem>>, vector<1x32x1xf32>
    %127 = vector.shape_cast %126 : vector<1x32x1xf32> to vector<32x1xf32>
    %128 = vector.extract_strided_slice %127 {offsets = [0, 0], sizes = [16, 1], strides = [1, 1]} : vector<32x1xf32> to vector<16x1xf32>
    %129 = vector.extract_strided_slice %127 {offsets = [16, 0], sizes = [16, 1], strides = [1, 1]} : vector<32x1xf32> to vector<16x1xf32>
    %c0_88 = arith.constant 0 : index
    %c0_89 = arith.constant 0 : index
    %c0_90 = arith.constant 0 : index
    %130 = vector.load %arg8[%c0_88, %c0_89, %c0_90] : memref<1x1x16xf32, #tpu.memory_space<vmem>>, vector<1x1x16xf32>
    %131 = vector.shape_cast %130 : vector<1x1x16xf32> to vector<1x16xf32>
    %cst_91 = arith.constant dense<0.000000e+00> : vector<16x16xf32>
    %132 = tpu.matmul %124, %125, %cst_91 {dimension_numbers = #tpu.dot_dimension_numbers<[1], [1], [0], [0], [0, 0, 1, 0], [], []>} : vector<16x32xf32>, vector<16x32xf32>, vector<16x16xf32> -> vector<16x16xf32>
    %133 = vector.broadcast %128 : vector<16x1xf32> to vector<16x16xf32>
    %134 = vector.broadcast %131 : vector<1x16xf32> to vector<16x16xf32>
    %135 = arith.mulf %133, %134 : vector<16x16xf32>
    %cst_92 = arith.constant 0.000000e+00 : f32
    %136 = vector.broadcast %cst_92 : f32 to vector<16x16xf32>
    %137 = arith.cmpf ogt, %135, %136 : vector<16x16xf32>
    %cst_93 = arith.constant 2.000000e+02 : f32
    %138 = vector.broadcast %cst_93 : f32 to vector<16x16xf32>
    %139 = arith.mulf %132, %138 : vector<16x16xf32>
    %cst_94 = arith.constant -1.000000e+30 : f32
    %140 = vector.broadcast %cst_94 : f32 to vector<16x16xf32>
    %141 = arith.select %137, %139, %140 : vector<16x16xi1>, vector<16x16xf32>
    %cst_95 = arith.constant dense<0xFF800000> : vector<16xf32>
    %142 = vector.multi_reduction <maximumf>, %141, %cst_95 [1] : vector<16x16xf32> to vector<16xf32>
    %143 = vector.shape_cast %142 : vector<16xf32> to vector<16x1xf32>
    %144 = vector.broadcast %143 : vector<16x1xf32> to vector<16x16xf32>
    %145 = arith.subf %141, %144 : vector<16x16xf32>
    %146 = math.exp %145 : vector<16x16xf32>
    %cst_96 = arith.constant dense<0.000000e+00> : vector<16xf32>
    %147 = vector.multi_reduction <add>, %146, %cst_96 [1] : vector<16x16xf32> to vector<16xf32>
    %148 = vector.shape_cast %147 : vector<16xf32> to vector<16x1xf32>
    %149 = math.log %148 : vector<16x1xf32>
    %150 = arith.addf %143, %149 : vector<16x1xf32>
    %151 = vector.broadcast %150 : vector<16x1xf32> to vector<16x16xf32>
    %152 = arith.subf %141, %151 : vector<16x16xf32>
    %cst_97 = arith.constant dense<0xFF800000> : vector<16xf32>
    %153 = vector.multi_reduction <maximumf>, %152, %cst_97 [0] : vector<16x16xf32> to vector<16xf32>
    %154 = vector.shape_cast %153 : vector<16xf32> to vector<1x16xf32>
    %155 = vector.broadcast %154 : vector<1x16xf32> to vector<16x16xf32>
    %156 = arith.subf %152, %155 : vector<16x16xf32>
    %157 = math.exp %156 : vector<16x16xf32>
    %cst_98 = arith.constant dense<0.000000e+00> : vector<16xf32>
    %158 = vector.multi_reduction <add>, %157, %cst_98 [0] : vector<16x16xf32> to vector<16xf32>
    %159 = vector.shape_cast %158 : vector<16xf32> to vector<1x16xf32>
    %160 = math.log %159 : vector<1x16xf32>
    %161 = arith.addf %154, %160 : vector<1x16xf32>
    %162 = vector.broadcast %161 : vector<1x16xf32> to vector<16x16xf32>
    %163 = arith.subf %152, %162 : vector<16x16xf32>
    %cst_99 = arith.constant dense<0xFF800000> : vector<16xf32>
    %164 = vector.multi_reduction <maximumf>, %163, %cst_99 [1] : vector<16x16xf32> to vector<16xf32>
    %165 = vector.shape_cast %164 : vector<16xf32> to vector<16x1xf32>
    %166 = vector.broadcast %165 : vector<16x1xf32> to vector<16x16xf32>
    %167 = arith.subf %163, %166 : vector<16x16xf32>
    %168 = math.exp %167 : vector<16x16xf32>
    %cst_100 = arith.constant dense<0.000000e+00> : vector<16xf32>
    %169 = vector.multi_reduction <add>, %168, %cst_100 [1] : vector<16x16xf32> to vector<16xf32>
    %170 = vector.shape_cast %169 : vector<16xf32> to vector<16x1xf32>
    %171 = math.log %170 : vector<16x1xf32>
    %172 = arith.addf %165, %171 : vector<16x1xf32>
    %173 = vector.broadcast %172 : vector<16x1xf32> to vector<16x16xf32>
    %174 = arith.subf %163, %173 : vector<16x16xf32>
    %cst_101 = arith.constant dense<0xFF800000> : vector<16xf32>
    %175 = vector.multi_reduction <maximumf>, %174, %cst_101 [0] : vector<16x16xf32> to vector<16xf32>
    %176 = vector.shape_cast %175 : vector<16xf32> to vector<1x16xf32>
    %177 = vector.broadcast %176 : vector<1x16xf32> to vector<16x16xf32>
    %178 = arith.subf %174, %177 : vector<16x16xf32>
    %179 = math.exp %178 : vector<16x16xf32>
    %cst_102 = arith.constant dense<0.000000e+00> : vector<16xf32>
    %180 = vector.multi_reduction <add>, %179, %cst_102 [0] : vector<16x16xf32> to vector<16xf32>
    %181 = vector.shape_cast %180 : vector<16xf32> to vector<1x16xf32>
    %182 = math.log %181 : vector<1x16xf32>
    %183 = arith.addf %176, %182 : vector<1x16xf32>
    %184 = vector.broadcast %183 : vector<1x16xf32> to vector<16x16xf32>
    %185 = arith.subf %174, %184 : vector<16x16xf32>
    %cst_103 = arith.constant dense<0xFF800000> : vector<16xf32>
    %186 = vector.multi_reduction <maximumf>, %185, %cst_103 [1] : vector<16x16xf32> to vector<16xf32>
    %187 = vector.shape_cast %186 : vector<16xf32> to vector<16x1xf32>
    %188 = vector.broadcast %187 : vector<16x1xf32> to vector<16x16xf32>
    %189 = arith.subf %185, %188 : vector<16x16xf32>
    %190 = math.exp %189 : vector<16x16xf32>
    %cst_104 = arith.constant dense<0.000000e+00> : vector<16xf32>
    %191 = vector.multi_reduction <add>, %190, %cst_104 [1] : vector<16x16xf32> to vector<16xf32>
    %192 = vector.shape_cast %191 : vector<16xf32> to vector<16x1xf32>
    %193 = math.log %192 : vector<16x1xf32>
    %194 = arith.addf %187, %193 : vector<16x1xf32>
    %195 = vector.broadcast %194 : vector<16x1xf32> to vector<16x16xf32>
    %196 = arith.subf %185, %195 : vector<16x16xf32>
    %cst_105 = arith.constant dense<0xFF800000> : vector<16xf32>
    %197 = vector.multi_reduction <maximumf>, %196, %cst_105 [0] : vector<16x16xf32> to vector<16xf32>
    %198 = vector.shape_cast %197 : vector<16xf32> to vector<1x16xf32>
    %199 = vector.broadcast %198 : vector<1x16xf32> to vector<16x16xf32>
    %200 = arith.subf %196, %199 : vector<16x16xf32>
    %201 = math.exp %200 : vector<16x16xf32>
    %cst_106 = arith.constant dense<0.000000e+00> : vector<16xf32>
    %202 = vector.multi_reduction <add>, %201, %cst_106 [0] : vector<16x16xf32> to vector<16xf32>
    %203 = vector.shape_cast %202 : vector<16xf32> to vector<1x16xf32>
    %204 = math.log %203 : vector<1x16xf32>
    %205 = arith.addf %198, %204 : vector<1x16xf32>
    %206 = vector.broadcast %205 : vector<1x16xf32> to vector<16x16xf32>
    %207 = arith.subf %196, %206 : vector<16x16xf32>
    %cst_107 = arith.constant dense<0xFF800000> : vector<16xf32>
    %208 = vector.multi_reduction <maximumf>, %207, %cst_107 [1] : vector<16x16xf32> to vector<16xf32>
    %209 = vector.shape_cast %208 : vector<16xf32> to vector<16x1xf32>
    %210 = vector.broadcast %209 : vector<16x1xf32> to vector<16x16xf32>
    %211 = arith.subf %207, %210 : vector<16x16xf32>
    %212 = math.exp %211 : vector<16x16xf32>
    %cst_108 = arith.constant dense<0.000000e+00> : vector<16xf32>
    %213 = vector.multi_reduction <add>, %212, %cst_108 [1] : vector<16x16xf32> to vector<16xf32>
    %214 = vector.shape_cast %213 : vector<16xf32> to vector<16x1xf32>
    %215 = math.log %214 : vector<16x1xf32>
    %216 = arith.addf %209, %215 : vector<16x1xf32>
    %217 = vector.broadcast %216 : vector<16x1xf32> to vector<16x16xf32>
    %218 = arith.subf %207, %217 : vector<16x16xf32>
    %cst_109 = arith.constant dense<0xFF800000> : vector<16xf32>
    %219 = vector.multi_reduction <maximumf>, %218, %cst_109 [0] : vector<16x16xf32> to vector<16xf32>
    %220 = vector.shape_cast %219 : vector<16xf32> to vector<1x16xf32>
    %221 = vector.broadcast %220 : vector<1x16xf32> to vector<16x16xf32>
    %222 = arith.subf %218, %221 : vector<16x16xf32>
    %223 = math.exp %222 : vector<16x16xf32>
    %cst_110 = arith.constant dense<0.000000e+00> : vector<16xf32>
    %224 = vector.multi_reduction <add>, %223, %cst_110 [0] : vector<16x16xf32> to vector<16xf32>
    %225 = vector.shape_cast %224 : vector<16xf32> to vector<1x16xf32>
    %226 = math.log %225 : vector<1x16xf32>
    %227 = arith.addf %220, %226 : vector<1x16xf32>
    %228 = vector.broadcast %227 : vector<1x16xf32> to vector<16x16xf32>
    %229 = arith.subf %218, %228 : vector<16x16xf32>
    %cst_111 = arith.constant dense<0xFF800000> : vector<16xf32>
    %230 = vector.multi_reduction <maximumf>, %229, %cst_111 [1] : vector<16x16xf32> to vector<16xf32>
    %231 = vector.shape_cast %230 : vector<16xf32> to vector<16x1xf32>
    %232 = vector.broadcast %231 : vector<16x1xf32> to vector<16x16xf32>
    %233 = arith.subf %229, %232 : vector<16x16xf32>
    %234 = math.exp %233 : vector<16x16xf32>
    %cst_112 = arith.constant dense<0.000000e+00> : vector<16xf32>
    %235 = vector.multi_reduction <add>, %234, %cst_112 [1] : vector<16x16xf32> to vector<16xf32>
    %236 = vector.shape_cast %235 : vector<16xf32> to vector<16x1xf32>
    %237 = math.log %236 : vector<16x1xf32>
    %238 = arith.addf %231, %237 : vector<16x1xf32>
    %239 = vector.broadcast %238 : vector<16x1xf32> to vector<16x16xf32>
    %240 = arith.subf %229, %239 : vector<16x16xf32>
    %cst_113 = arith.constant dense<0xFF800000> : vector<16xf32>
    %241 = vector.multi_reduction <maximumf>, %240, %cst_113 [0] : vector<16x16xf32> to vector<16xf32>
    %242 = vector.shape_cast %241 : vector<16xf32> to vector<1x16xf32>
    %243 = vector.broadcast %242 : vector<1x16xf32> to vector<16x16xf32>
    %244 = arith.subf %240, %243 : vector<16x16xf32>
    %245 = math.exp %244 : vector<16x16xf32>
    %cst_114 = arith.constant dense<0.000000e+00> : vector<16xf32>
    %246 = vector.multi_reduction <add>, %245, %cst_114 [0] : vector<16x16xf32> to vector<16xf32>
    %247 = vector.shape_cast %246 : vector<16xf32> to vector<1x16xf32>
    %248 = math.log %247 : vector<1x16xf32>
    %249 = arith.addf %242, %248 : vector<1x16xf32>
    %250 = vector.broadcast %249 : vector<1x16xf32> to vector<16x16xf32>
    %251 = arith.subf %240, %250 : vector<16x16xf32>
    %cst_115 = arith.constant dense<0xFF800000> : vector<16xf32>
    %252 = vector.multi_reduction <maximumf>, %251, %cst_115 [1] : vector<16x16xf32> to vector<16xf32>
    %253 = vector.shape_cast %252 : vector<16xf32> to vector<16x1xf32>
    %254 = vector.broadcast %253 : vector<16x1xf32> to vector<16x16xf32>
    %255 = arith.subf %251, %254 : vector<16x16xf32>
    %256 = math.exp %255 : vector<16x16xf32>
    %cst_116 = arith.constant dense<0.000000e+00> : vector<16xf32>
    %257 = vector.multi_reduction <add>, %256, %cst_116 [1] : vector<16x16xf32> to vector<16xf32>
    %258 = vector.shape_cast %257 : vector<16xf32> to vector<16x1xf32>
    %259 = math.log %258 : vector<16x1xf32>
    %260 = arith.addf %253, %259 : vector<16x1xf32>
    %261 = vector.broadcast %260 : vector<16x1xf32> to vector<16x16xf32>
    %262 = arith.subf %251, %261 : vector<16x16xf32>
    %cst_117 = arith.constant dense<0xFF800000> : vector<16xf32>
    %263 = vector.multi_reduction <maximumf>, %262, %cst_117 [0] : vector<16x16xf32> to vector<16xf32>
    %264 = vector.shape_cast %263 : vector<16xf32> to vector<1x16xf32>
    %265 = vector.broadcast %264 : vector<1x16xf32> to vector<16x16xf32>
    %266 = arith.subf %262, %265 : vector<16x16xf32>
    %267 = math.exp %266 : vector<16x16xf32>
    %cst_118 = arith.constant dense<0.000000e+00> : vector<16xf32>
    %268 = vector.multi_reduction <add>, %267, %cst_118 [0] : vector<16x16xf32> to vector<16xf32>
    %269 = vector.shape_cast %268 : vector<16xf32> to vector<1x16xf32>
    %270 = math.log %269 : vector<1x16xf32>
    %271 = arith.addf %264, %270 : vector<1x16xf32>
    %272 = vector.broadcast %271 : vector<1x16xf32> to vector<16x16xf32>
    %273 = arith.subf %262, %272 : vector<16x16xf32>
    %cst_119 = arith.constant dense<0xFF800000> : vector<16xf32>
    %274 = vector.multi_reduction <maximumf>, %273, %cst_119 [1] : vector<16x16xf32> to vector<16xf32>
    %275 = vector.shape_cast %274 : vector<16xf32> to vector<16x1xf32>
    %276 = vector.broadcast %275 : vector<16x1xf32> to vector<16x16xf32>
    %277 = arith.subf %273, %276 : vector<16x16xf32>
    %278 = math.exp %277 : vector<16x16xf32>
    %cst_120 = arith.constant dense<0.000000e+00> : vector<16xf32>
    %279 = vector.multi_reduction <add>, %278, %cst_120 [1] : vector<16x16xf32> to vector<16xf32>
    %280 = vector.shape_cast %279 : vector<16xf32> to vector<16x1xf32>
    %281 = math.log %280 : vector<16x1xf32>
    %282 = arith.addf %275, %281 : vector<16x1xf32>
    %283 = vector.broadcast %282 : vector<16x1xf32> to vector<16x16xf32>
    %284 = arith.subf %273, %283 : vector<16x16xf32>
    %cst_121 = arith.constant dense<0xFF800000> : vector<16xf32>
    %285 = vector.multi_reduction <maximumf>, %284, %cst_121 [0] : vector<16x16xf32> to vector<16xf32>
    %286 = vector.shape_cast %285 : vector<16xf32> to vector<1x16xf32>
    %287 = vector.broadcast %286 : vector<1x16xf32> to vector<16x16xf32>
    %288 = arith.subf %284, %287 : vector<16x16xf32>
    %289 = math.exp %288 : vector<16x16xf32>
    %cst_122 = arith.constant dense<0.000000e+00> : vector<16xf32>
    %290 = vector.multi_reduction <add>, %289, %cst_122 [0] : vector<16x16xf32> to vector<16xf32>
    %291 = vector.shape_cast %290 : vector<16xf32> to vector<1x16xf32>
    %292 = math.log %291 : vector<1x16xf32>
    %293 = arith.addf %286, %292 : vector<1x16xf32>
    %294 = vector.broadcast %293 : vector<1x16xf32> to vector<16x16xf32>
    %295 = arith.subf %284, %294 : vector<16x16xf32>
    %cst_123 = arith.constant dense<0xFF800000> : vector<16xf32>
    %296 = vector.multi_reduction <maximumf>, %295, %cst_123 [1] : vector<16x16xf32> to vector<16xf32>
    %297 = vector.shape_cast %296 : vector<16xf32> to vector<16x1xf32>
    %298 = vector.broadcast %297 : vector<16x1xf32> to vector<16x16xf32>
    %299 = arith.subf %295, %298 : vector<16x16xf32>
    %300 = math.exp %299 : vector<16x16xf32>
    %cst_124 = arith.constant dense<0.000000e+00> : vector<16xf32>
    %301 = vector.multi_reduction <add>, %300, %cst_124 [1] : vector<16x16xf32> to vector<16xf32>
    %302 = vector.shape_cast %301 : vector<16xf32> to vector<16x1xf32>
    %303 = math.log %302 : vector<16x1xf32>
    %304 = arith.addf %297, %303 : vector<16x1xf32>
    %305 = vector.broadcast %304 : vector<16x1xf32> to vector<16x16xf32>
    %306 = arith.subf %295, %305 : vector<16x16xf32>
    %cst_125 = arith.constant dense<0xFF800000> : vector<16xf32>
    %307 = vector.multi_reduction <maximumf>, %306, %cst_125 [0] : vector<16x16xf32> to vector<16xf32>
    %308 = vector.shape_cast %307 : vector<16xf32> to vector<1x16xf32>
    %309 = vector.broadcast %308 : vector<1x16xf32> to vector<16x16xf32>
    %310 = arith.subf %306, %309 : vector<16x16xf32>
    %311 = math.exp %310 : vector<16x16xf32>
    %cst_126 = arith.constant dense<0.000000e+00> : vector<16xf32>
    %312 = vector.multi_reduction <add>, %311, %cst_126 [0] : vector<16x16xf32> to vector<16xf32>
    %313 = vector.shape_cast %312 : vector<16xf32> to vector<1x16xf32>
    %314 = math.log %313 : vector<1x16xf32>
    %315 = arith.addf %308, %314 : vector<1x16xf32>
    %316 = vector.broadcast %315 : vector<1x16xf32> to vector<16x16xf32>
    %317 = arith.subf %306, %316 : vector<16x16xf32>
    %cst_127 = arith.constant dense<0xFF800000> : vector<16xf32>
    %318 = vector.multi_reduction <maximumf>, %317, %cst_127 [1] : vector<16x16xf32> to vector<16xf32>
    %319 = vector.shape_cast %318 : vector<16xf32> to vector<16x1xf32>
    %320 = vector.broadcast %319 : vector<16x1xf32> to vector<16x16xf32>
    %321 = arith.subf %317, %320 : vector<16x16xf32>
    %322 = math.exp %321 : vector<16x16xf32>
    %cst_128 = arith.constant dense<0.000000e+00> : vector<16xf32>
    %323 = vector.multi_reduction <add>, %322, %cst_128 [1] : vector<16x16xf32> to vector<16xf32>
    %324 = vector.shape_cast %323 : vector<16xf32> to vector<16x1xf32>
    %325 = math.log %324 : vector<16x1xf32>
    %326 = arith.addf %319, %325 : vector<16x1xf32>
    %327 = vector.broadcast %326 : vector<16x1xf32> to vector<16x16xf32>
    %328 = arith.subf %317, %327 : vector<16x16xf32>
    %cst_129 = arith.constant dense<0xFF800000> : vector<16xf32>
    %329 = vector.multi_reduction <maximumf>, %328, %cst_129 [0] : vector<16x16xf32> to vector<16xf32>
    %330 = vector.shape_cast %329 : vector<16xf32> to vector<1x16xf32>
    %331 = vector.broadcast %330 : vector<1x16xf32> to vector<16x16xf32>
    %332 = arith.subf %328, %331 : vector<16x16xf32>
    %333 = math.exp %332 : vector<16x16xf32>
    %cst_130 = arith.constant dense<0.000000e+00> : vector<16xf32>
    %334 = vector.multi_reduction <add>, %333, %cst_130 [0] : vector<16x16xf32> to vector<16xf32>
    %335 = vector.shape_cast %334 : vector<16xf32> to vector<1x16xf32>
    %336 = math.log %335 : vector<1x16xf32>
    %337 = arith.addf %330, %336 : vector<1x16xf32>
    %338 = vector.broadcast %337 : vector<1x16xf32> to vector<16x16xf32>
    %339 = arith.subf %328, %338 : vector<16x16xf32>
    %cst_131 = arith.constant dense<0xFF800000> : vector<16xf32>
    %340 = vector.multi_reduction <maximumf>, %339, %cst_131 [1] : vector<16x16xf32> to vector<16xf32>
    %341 = vector.shape_cast %340 : vector<16xf32> to vector<16x1xf32>
    %342 = vector.broadcast %341 : vector<16x1xf32> to vector<16x16xf32>
    %343 = arith.subf %339, %342 : vector<16x16xf32>
    %344 = math.exp %343 : vector<16x16xf32>
    %cst_132 = arith.constant dense<0.000000e+00> : vector<16xf32>
    %345 = vector.multi_reduction <add>, %344, %cst_132 [1] : vector<16x16xf32> to vector<16xf32>
    %346 = vector.shape_cast %345 : vector<16xf32> to vector<16x1xf32>
    %347 = math.log %346 : vector<16x1xf32>
    %348 = arith.addf %341, %347 : vector<16x1xf32>
    %349 = vector.broadcast %348 : vector<16x1xf32> to vector<16x16xf32>
    %350 = arith.subf %339, %349 : vector<16x16xf32>
    %cst_133 = arith.constant dense<0xFF800000> : vector<16xf32>
    %351 = vector.multi_reduction <maximumf>, %350, %cst_133 [0] : vector<16x16xf32> to vector<16xf32>
    %352 = vector.shape_cast %351 : vector<16xf32> to vector<1x16xf32>
    %353 = vector.broadcast %352 : vector<1x16xf32> to vector<16x16xf32>
    %354 = arith.subf %350, %353 : vector<16x16xf32>
    %355 = math.exp %354 : vector<16x16xf32>
    %cst_134 = arith.constant dense<0.000000e+00> : vector<16xf32>
    %356 = vector.multi_reduction <add>, %355, %cst_134 [0] : vector<16x16xf32> to vector<16xf32>
    %357 = vector.shape_cast %356 : vector<16xf32> to vector<1x16xf32>
    %358 = math.log %357 : vector<1x16xf32>
    %359 = arith.addf %352, %358 : vector<1x16xf32>
    %360 = vector.broadcast %359 : vector<1x16xf32> to vector<16x16xf32>
    %361 = arith.subf %350, %360 : vector<16x16xf32>
    %362 = math.exp %361 : vector<16x16xf32>
    %cst_135 = arith.constant 0.000000e+00 : f32
    %363 = vector.broadcast %cst_135 : f32 to vector<16x16xf32>
    %364 = arith.select %137, %362, %363 : vector<16x16xi1>, vector<16x16xf32>
    %c0_136 = arith.constant 0 : index
    %c0_137 = arith.constant 0 : index
    %c0_138 = arith.constant 0 : index
    %365 = vector.load %arg6[%c0_136, %c0_137, %c0_138] : memref<1x16x16xf32, #tpu.memory_space<vmem>>, vector<1x16x16xf32>
    %366 = vector.shape_cast %365 : vector<1x16x16xf32> to vector<16x16xf32>
    %cst_139 = arith.constant dense<0.000000e+00> : vector<16xf32>
    %367 = vector.multi_reduction <add>, %366, %cst_139 [1] : vector<16x16xf32> to vector<16xf32>
    %368 = vector.shape_cast %367 : vector<16xf32> to vector<16x1xf32>
    %cst_140 = arith.constant 0.000000e+00 : f32
    %369 = vector.broadcast %cst_140 : f32 to vector<16x1xf32>
    %370 = arith.cmpf ogt, %368, %369 : vector<16x1xf32>
    %cst_141 = arith.constant dense<0.000000e+00> : vector<16xf32>
    %371 = vector.multi_reduction <add>, %366, %cst_141 [0] : vector<16x16xf32> to vector<16xf32>
    %372 = vector.shape_cast %371 : vector<16xf32> to vector<1x16xf32>
    %cst_142 = arith.constant 0.000000e+00 : f32
    %373 = vector.broadcast %cst_142 : f32 to vector<1x16xf32>
    %374 = arith.cmpf ogt, %372, %373 : vector<1x16xf32>
    %cst_143 = arith.constant 0.000000e+00 : f32
    %375 = vector.shape_cast %370 : vector<16x1xi1> to vector<16x1xi1>
    %376 = vector.broadcast %375 : vector<16x1xi1> to vector<16x16xi1>
    %377 = vector.broadcast %cst_143 : f32 to vector<16x16xf32>
    %378 = arith.select %376, %377, %364 : vector<16x16xi1>, vector<16x16xf32>
    %cst_144 = arith.constant 0.000000e+00 : f32
    %379 = vector.shape_cast %374 : vector<1x16xi1> to vector<1x16xi1>
    %380 = vector.broadcast %379 : vector<1x16xi1> to vector<16x16xi1>
    %381 = vector.broadcast %cst_144 : f32 to vector<16x16xf32>
    %382 = arith.select %380, %381, %378 : vector<16x16xi1>, vector<16x16xf32>
    %383 = arith.addf %382, %366 : vector<16x16xf32>
    %cst_145 = arith.constant dense<0.000000e+00> : vector<16x32xf32>
    %384 = tpu.matmul %383, %125, %cst_145 {dimension_numbers = #tpu.dot_dimension_numbers<[1], [0], [0], [1], [0, 0, 1, 1], [], []>} : vector<16x16xf32>, vector<16x32xf32>, vector<16x32xf32> -> vector<16x32xf32>
    %385 = arith.subf %124, %384 : vector<16x32xf32>
    %c0_146 = arith.constant 0 : index
    %c0_147 = arith.constant 0 : index
    %c0_148 = arith.constant 0 : index
    %386 = vector.load %arg9[%c0_146, %c0_147, %c0_148] : memref<1x16x32xf32, #tpu.memory_space<vmem>>, vector<1x16x32xf32>
    %387 = vector.shape_cast %386 : vector<1x16x32xf32> to vector<16x32xf32>
    %388 = vector.shape_cast %385 : vector<16x32xf32> to vector<1x16x32xf32>
    tpu.vector_store %arg9[%c0_146, %c0_147, %c0_148], %388 {strides = array<i32>} : memref<1x16x32xf32, #tpu.memory_space<vmem>>, vector<1x16x32xf32>,
    %c0_149 = arith.constant 0 : index
    %c0_150 = arith.constant 0 : index
    %c0_151 = arith.constant 0 : index
    %389 = vector.load %arg10[%c0_149, %c0_150, %c0_151] : memref<1x16x32xf32, #tpu.memory_space<vmem>>, vector<1x16x32xf32>
    %390 = vector.shape_cast %389 : vector<1x16x32xf32> to vector<16x32xf32>
    %391 = vector.shape_cast %125 : vector<16x32xf32> to vector<1x16x32xf32>
    tpu.vector_store %arg10[%c0_149, %c0_150, %c0_151], %391 {strides = array<i32>} : memref<1x16x32xf32, #tpu.memory_space<vmem>>, vector<1x16x32xf32>,
    %392 = vector.broadcast %128 : vector<16x1xf32> to vector<16x32xf32>
    %393 = arith.mulf %124, %392 : vector<16x32xf32>
    %394 = vector.broadcast %129 : vector<16x1xf32> to vector<16x32xf32>
    %395 = arith.mulf %125, %394 : vector<16x32xf32>
    %cst_152 = arith.constant dense<0.000000e+00> : vector<1xf32>
    %396 = vector.multi_reduction <add>, %128, %cst_152 [0] : vector<16x1xf32> to vector<1xf32>
    %397 = vector.shape_cast %396 : vector<1xf32> to vector<1x1xf32>
    %cst_153 = arith.constant dense<0.000000e+00> : vector<1xf32>
    %398 = vector.multi_reduction <add>, %129, %cst_153 [0] : vector<16x1xf32> to vector<1xf32>
    %399 = vector.shape_cast %398 : vector<1xf32> to vector<1x1xf32>
    %cst_154 = arith.constant dense<0.000000e+00> : vector<32xf32>
    %400 = vector.multi_reduction <add>, %393, %cst_154 [0] : vector<16x32xf32> to vector<32xf32>
    %401 = vector.shape_cast %400 : vector<32xf32> to vector<1x32xf32>
    %402 = tpu.reciprocal %397 {approx = true} : vector<1x1xf32> -> vector<1x1xf32>
    %403 = vector.broadcast %402 : vector<1x1xf32> to vector<1x32xf32>
    %404 = arith.mulf %401, %403 : vector<1x32xf32>
    %cst_155 = arith.constant dense<0.000000e+00> : vector<32xf32>
    %405 = vector.multi_reduction <add>, %395, %cst_155 [0] : vector<16x32xf32> to vector<32xf32>
    %406 = vector.shape_cast %405 : vector<32xf32> to vector<1x32xf32>
    %407 = tpu.reciprocal %399 {approx = true} : vector<1x1xf32> -> vector<1x1xf32>
    %408 = vector.broadcast %407 : vector<1x1xf32> to vector<1x32xf32>
    %409 = arith.mulf %406, %408 : vector<1x32xf32>
    %410 = tpu.concatenate %404, %409 in 0 : vector<1x32xf32>, vector<1x32xf32> -> vector<2x32xf32>
    %c0_156 = arith.constant 0 : index
    %c0_157 = arith.constant 0 : index
    %411 = vector.load %arg5[%c0_156, %c0_157] : memref<32x32xf32, #tpu.memory_space<vmem>>, vector<32x32xf32>
    %cst_158 = arith.constant dense<0.000000e+00> : vector<2x32xf32>
    %412 = tpu.matmul %410, %411, %cst_158 {dimension_numbers = #tpu.dot_dimension_numbers<[1], [0], [0], [1], [0, 0, 1, 1], [], []>} : vector<2x32xf32>, vector<32x32xf32>, vector<2x32xf32> -> vector<2x32xf32>
    %413 = math.tanh %412 : vector<2x32xf32>
    %414 = vector.extract_strided_slice %413 {offsets = [0, 0], sizes = [1, 32], strides = [1, 1]} : vector<2x32xf32> to vector<1x32xf32>
    %cst_159 = arith.constant dense<0.000000e+00> : vector<16x1xf32>
    %415 = tpu.matmul %124, %414, %cst_159 {dimension_numbers = #tpu.dot_dimension_numbers<[1], [1], [0], [0], [0, 0, 1, 0], [], []>} : vector<16x32xf32>, vector<1x32xf32>, vector<16x1xf32> -> vector<16x1xf32>
    %416 = arith.negf %415 : vector<16x1xf32>
    %417 = math.exp %416 : vector<16x1xf32>
    %cst_160 = arith.constant 1.000000e+00 : f32
    %418 = vector.broadcast %cst_160 : f32 to vector<16x1xf32>
    %419 = arith.addf %418, %417 : vector<16x1xf32>
    %420 = arith.divf %418, %419 : vector<16x1xf32>
    %421 = vector.extract_strided_slice %413 {offsets = [1, 0], sizes = [1, 32], strides = [1, 1]} : vector<2x32xf32> to vector<1x32xf32>
    %cst_161 = arith.constant dense<0.000000e+00> : vector<16x1xf32>
    %422 = tpu.matmul %125, %421, %cst_161 {dimension_numbers = #tpu.dot_dimension_numbers<[1], [1], [0], [0], [0, 0, 1, 0], [], []>} : vector<16x32xf32>, vector<1x32xf32>, vector<16x1xf32> -> vector<16x1xf32>
    %423 = arith.negf %422 : vector<16x1xf32>
    %424 = math.exp %423 : vector<16x1xf32>
    %cst_162 = arith.constant 1.000000e+00 : f32
    %425 = vector.broadcast %cst_162 : f32 to vector<16x1xf32>
    %426 = arith.addf %425, %424 : vector<16x1xf32>
    %427 = arith.divf %425, %426 : vector<16x1xf32>
    %428 = vector.broadcast %420 : vector<16x1xf32> to vector<16x32xf32>
    %429 = arith.mulf %428, %393 : vector<16x32xf32>
    %cst_163 = arith.constant dense<0.000000e+00> : vector<32xf32>
    %430 = vector.multi_reduction <add>, %429, %cst_163 [0] : vector<16x32xf32> to vector<32xf32>
    %431 = vector.shape_cast %430 : vector<32xf32> to vector<1x32xf32>
    %c0_164 = arith.constant 0 : index
    %c0_165 = arith.constant 0 : index
    %c0_166 = arith.constant 0 : index
    %432 = vector.load %arg11[%c0_164, %c0_165, %c0_166] : memref<1x2x32xf32, #tpu.memory_space<vmem>>, vector<1x1x32xf32>
    %433 = vector.shape_cast %432 : vector<1x1x32xf32> to vector<1x32xf32>
    %434 = vector.shape_cast %431 : vector<1x32xf32> to vector<1x1x32xf32>
    tpu.vector_store %arg11[%c0_164, %c0_165, %c0_166], %434 {strides = array<i32>} : memref<1x2x32xf32, #tpu.memory_space<vmem>>, vector<1x1x32xf32>,
    %435 = vector.broadcast %427 : vector<16x1xf32> to vector<16x32xf32>
    %436 = arith.mulf %435, %395 : vector<16x32xf32>
    %cst_167 = arith.constant dense<0.000000e+00> : vector<32xf32>
    %437 = vector.multi_reduction <add>, %436, %cst_167 [0] : vector<16x32xf32> to vector<32xf32>
    %438 = vector.shape_cast %437 : vector<32xf32> to vector<1x32xf32>
    %c0_168 = arith.constant 0 : index
    %c1_169 = arith.constant 1 : index
    %c0_170 = arith.constant 0 : index
    %439 = vector.load %arg11[%c0_168, %c1_169, %c0_170] : memref<1x2x32xf32, #tpu.memory_space<vmem>>, vector<1x1x32xf32>
    %440 = vector.shape_cast %439 : vector<1x1x32xf32> to vector<1x32xf32>
    %441 = vector.shape_cast %438 : vector<1x32xf32> to vector<1x1x32xf32>
    tpu.vector_store %arg11[%c0_168, %c1_169, %c0_170], %441 {strides = array<i32>} : memref<1x2x32xf32, #tpu.memory_space<vmem>>, vector<1x1x32xf32>,
    return
  }
  func.func @transform_0(%arg0: i32) -> (i32, i32, i32) {
    %c0_i32 = arith.constant 0 : i32
    %c0_i32_0 = arith.constant 0 : i32
    %c0_i32_1 = arith.constant 0 : i32
    return %arg0, %c0_i32, %c0_i32_0 : i32, i32, i32
  }
  func.func @transform_1(%arg0: i32) -> (i32, i32, i32) {
    %c0_i32 = arith.constant 0 : i32
    %c0_i32_0 = arith.constant 0 : i32
    %c0_i32_1 = arith.constant 0 : i32
    return %arg0, %c0_i32, %c0_i32_0 : i32, i32, i32
  }
  func.func @transform_2(%arg0: i32) -> (i32, i32, i32) {
    %c0_i32 = arith.constant 0 : i32
    %c0_i32_0 = arith.constant 0 : i32
    %c0_i32_1 = arith.constant 0 : i32
    %c0_i32_2 = arith.constant 0 : i32
    return %c0_i32, %c0_i32_0, %c0_i32_1 : i32, i32, i32
  }
  func.func @transform_3(%arg0: i32) -> (i32, i32, i32) {
    %c0_i32 = arith.constant 0 : i32
    %c0_i32_0 = arith.constant 0 : i32
    %c0_i32_1 = arith.constant 0 : i32
    %c0_i32_2 = arith.constant 0 : i32
    return %c0_i32, %c0_i32_0, %c0_i32_1 : i32, i32, i32
  }
  func.func @transform_4(%arg0: i32) -> (i32, i32) {
    %c0_i32 = arith.constant 0 : i32
    %c0_i32_0 = arith.constant 0 : i32
    %c0_i32_1 = arith.constant 0 : i32
    return %c0_i32, %c0_i32_0 : i32, i32
  }
  func.func @transform_5(%arg0: i32) -> (i32, i32, i32) {
    %c0_i32 = arith.constant 0 : i32
    %c0_i32_0 = arith.constant 0 : i32
    %c0_i32_1 = arith.constant 0 : i32
    return %arg0, %c0_i32, %c0_i32_0 : i32, i32, i32
  }
  func.func @transform_6(%arg0: i32) -> (i32, i32, i32) {
    %c0_i32 = arith.constant 0 : i32
    %c0_i32_0 = arith.constant 0 : i32
    %c0_i32_1 = arith.constant 0 : i32
    return %arg0, %c0_i32, %c0_i32_0 : i32, i32, i32
  }
  func.func @transform_7(%arg0: i32) -> (i32, i32, i32) {
    %c0_i32 = arith.constant 0 : i32
    %c0_i32_0 = arith.constant 0 : i32
    %c0_i32_1 = arith.constant 0 : i32
    return %arg0, %c0_i32, %c0_i32_0 : i32, i32, i32
  }
  func.func @transform_8(%arg0: i32) -> (i32, i32, i32) {
    %c0_i32 = arith.constant 0 : i32
    %c0_i32_0 = arith.constant 0 : i32
    %c0_i32_1 = arith.constant 0 : i32
    return %arg0, %c0_i32, %c0_i32_0 : i32, i32, i32
  }
  func.func @transform_9(%arg0: i32) -> (i32, i32, i32) {
    %c0_i32 = arith.constant 0 : i32
    %c0_i32_0 = arith.constant 0 : i32
    %c0_i32_1 = arith.constant 0 : i32
    return %arg0, %c0_i32, %c0_i32_0 : i32, i32, i32
  }
  func.func @transform_10(%arg0: i32) -> (i32, i32, i32) {
    %c0_i32 = arith.constant 0 : i32
    %c0_i32_0 = arith.constant 0 : i32
    %c0_i32_1 = arith.constant 0 : i32
    return %arg0, %c0_i32, %c0_i32_0 : i32, i32, i32
  }
}

</mosaic_0001>

<llo_original>
// kernel: graph_encoder_forward.1
$region0: #{graph_encoder_forward.1}
  #allocation0 [shape = 'u32[]', space=smem, size = 0x4, offset = 0x4, fixed_abs, tag = 'smem constant byte address 0x4 - core index']
  #allocation1 [shape = 'u32[144,128]{1,0:T(1,128)}', space=vmem, size = 0x12000, scoped, tag = 'internal scratch']
  %s0 = inlined_call_operand.vmem [shape: bf16[2,32,32], index: 0, kind: input, shape index: {}]
  %s1 = inlined_call_operand.vmem [shape: f32[2,32,32], index: 1, kind: input, shape index: {}]
  %s2 = inlined_call_operand.vmem [shape: bf16[10,32,32], index: 2, kind: input, shape index: {}]
  %s3 = inlined_call_operand.vmem [shape: f32[10,1,32], index: 3, kind: input, shape index: {}]
  %s4 = inlined_call_operand.vmem [shape: f32[32,32], index: 4, kind: input, shape index: {}]
  %s5 = inlined_call_operand.vmem [shape: f32[2,16,16], index: 5, kind: input, shape index: {}]
  %s6 = inlined_call_operand.vmem [shape: f32[2,32,1], index: 6, kind: input, shape index: {}]
  %s7 = inlined_call_operand.vmem [shape: f32[2,1,16], index: 7, kind: input, shape index: {}]
  %s8 = inlined_call_operand.hbm [shape: f32[2,16,32], index: 8, kind: output, shape index: {0}]
  %s9 = inlined_call_operand.hbm [shape: f32[2,16,32], index: 9, kind: output, shape index: {1}]
  %s10 = inlined_call_operand.vmem [shape: f32[2,2,32], index: 10, kind: output, shape index: {2}]
  %11 = xla_tuple %s8, %s9, %s10
  %s12 = sld [smem:[#allocation0]]
  $region81: #{graph_encoder_forward.1} parent=0
    _
  %s14 = ssub.s32 1, %s12
  %s15 = scalar_select 0, %s14, %s12
  $region1: #{graph_encoder_forward.1} parent=0
    #allocation2 [shape = 'u8[16384]{0}', space=vmem, size = 0x4000, scoped, tag = 'output window, operand 0']
    #allocation3 [shape = 's32[2]{0}', space=sflag, size = 0x8, scoped, tag = 'scoped memory for graph_encoder_forward.1']
    #allocation4 [shape = 'u8[16384]{0}', space=vmem, size = 0x4000, scoped, tag = 'output window, operand 1']
    #allocation5 [shape = 's32[2]{0}', space=sflag, size = 0x8, scoped, tag = 'scoped memory for graph_encoder_forward.1']
    %16 = vsyncpa [#allocation3], 0
    %s17 = scalar_lea.sflag [#allocation3], 1
    %18 = vsyncpa %s17, 0
    %19 = vsyncpa [#allocation5], 0
    %s20 = scalar_lea.sflag [#allocation5], 1
    %21 = vsyncpa %s20, 0
    loop: start=0, step=1, limit=4
    $region2: #{graph_encoder_forward.1} parent=1 // loop_pre_header
      _
    $region3: #{graph_encoder_forward.1} parent=1 // loop_header
      %s23 = sphi 0, %s27
      %p24 = scmp.ge.s32.totalorder %s23, 4
      %s33 = sphi 0, %s35
      %s36 = sphi 0, %s33
      %s37 = sphi 0, %s36
      %s53 = sphi 0, %s37
      %s59 = sphi 0, %s61
      %s62 = sphi 0, %s59
      %s63 = sphi 0, %s62
      %s79 = sphi 0, %s63
      %s83 = sphi 0, %s83
      %s85 = sphi 0, %s83
      %s86 = sphi 0, %s85
      %s100 = sphi 0, %s86
      %s104 = sphi 0, %s104
      %s106 = sphi 0, %s104
      %s107 = sphi 0, %s106
      %s121 = sphi 0, %s107
      %s125 = sphi 0, %s125
      %s127 = sphi 0, %s125
      %s128 = sphi 0, %s127
      %s142 = sphi 0, %s128
      %s148 = sphi 0, %s150
      %s151 = sphi 0, %s148
      %s152 = sphi 0, %s151
      %s168 = sphi 0, %s152
      %s174 = sphi 0, %s176
      %s177 = sphi 0, %s174
      %s178 = sphi 0, %s177
      %s194 = sphi 0, %s178
      %s200 = sphi 0, %s202
      %s203 = sphi 0, %s200
      %s204 = sphi 0, %s203
      %s220 = sphi 0, %s204
      %s226 = sphi 0, %s228
      %s229 = sphi 0, %s226
      %s230 = sphi 0, %s229
      %s246 = sphi 0, %s230
      %s252 = sphi 0, %s254
      %s255 = sphi 0, %s252
      %s256 = sphi 0, %s255
      %s272 = sphi 0, %s256
      %s278 = sphi 0, %s280
      %s281 = sphi 0, %s278
      %s282 = sphi 0, %s281
      %s298 = sphi 0, %s282
    $region4: #{graph_encoder_forward.1} parent=1 // loop_header_branch
      %26 = sbr.rel (%p24) target = $region8
    $region5: #{graph_encoder_forward.1} parent=1 // loop_body
      %s28 = ssub.s32 %s23, 1
      %s29 = ssub.s32 %s23, 2
      %s30 = sadd.s32 %s23, 1
      %s31 = ssub.s32 %s23, %s30
      %p32 = scmp.eq.s32.totalorder %s31, 0
      %s34 = sadd.s32 %s33, 1
      %s35 = scalar_select %p32, %s33, %s34
      %p38 = pneg %p32
      %p39 = scmp.eq.s32.totalorder %s23, 1
      %p40 = por %p38, %p39
      %p41 = scmp.ne.s32.totalorder %s33, %s36
      %p42 = scmp.eq.s32.totalorder %s23, 0
      %p43 = por %p41, %p42
      %p44 = scmp.ne.s32.totalorder %s33, %s36
      %p45 = scmp.eq.s32.totalorder %s28, 1
      %p46 = por %p44, %p45
      %p47 = scmp.ne.s32.totalorder %s36, %s37
      %p48 = scmp.eq.s32.totalorder %s28, 0
      %p49 = por %p47, %p48
      %p50 = scmp.ne.s32.totalorder %s36, %s37
      %p51 = scmp.eq.s32.totalorder %s29, 1
      %p52 = por %p50, %p51
      %p54 = scmp.ne.s32.totalorder %s37, %s53
      %p55 = scmp.eq.s32.totalorder %s29, 0
      %p56 = por %p54, %p55
      %s57 = ssub.s32 %s23, %s30
      %p58 = scmp.eq.s32.totalorder %s57, 0
      %s60 = sadd.s32 %s59, 1
      %s61 = scalar_select %p58, %s59, %s60
      %p64 = pneg %p58
      %p65 = scmp.eq.s32.totalorder %s23, 1
      %p66 = por %p64, %p65
      %p67 = scmp.ne.s32.totalorder %s59, %s62
      %p68 = scmp.eq.s32.totalorder %s23, 0
      %p69 = por %p67, %p68
      %p70 = scmp.ne.s32.totalorder %s59, %s62
      %p71 = scmp.eq.s32.totalorder %s28, 1
      %p72 = por %p70, %p71
      %p73 = scmp.ne.s32.totalorder %s62, %s63
      %p74 = scmp.eq.s32.totalorder %s28, 0
      %p75 = por %p73, %p74
      %p76 = scmp.ne.s32.totalorder %s62, %s63
      %p77 = scmp.eq.s32.totalorder %s29, 1
      %p78 = por %p76, %p77
      %p80 = scmp.ne.s32.totalorder %s63, %s79
      %p81 = scmp.eq.s32.totalorder %s29, 0
      %p82 = por %p80, %p81
      %s84 = sadd.s32 %s83, 1
      %p87 = scmp.eq.s32.totalorder %s23, 1
      %p88 = scmp.ne.s32.totalorder %s83, %s85
      %p89 = scmp.eq.s32.totalorder %s23, 0
      %p90 = por %p88, %p89
      %p91 = scmp.ne.s32.totalorder %s83, %s85
      %p92 = scmp.eq.s32.totalorder %s28, 1
      %p93 = por %p91, %p92
      %p94 = scmp.ne.s32.totalorder %s85, %s86
      %p95 = scmp.eq.s32.totalorder %s28, 0
      %p96 = por %p94, %p95
      %p97 = scmp.ne.s32.totalorder %s85, %s86
      %p98 = scmp.eq.s32.totalorder %s29, 1
      %p99 = por %p97, %p98
      %p101 = scmp.ne.s32.totalorder %s86, %s100
      %p102 = scmp.eq.s32.totalorder %s29, 0
      %p103 = por %p101, %p102
      %s105 = sadd.s32 %s104, 1
      %p108 = scmp.eq.s32.totalorder %s23, 1
      %p109 = scmp.ne.s32.totalorder %s104, %s106
      %p110 = scmp.eq.s32.totalorder %s23, 0
      %p111 = por %p109, %p110
      %p112 = scmp.ne.s32.totalorder %s104, %s106
      %p113 = scmp.eq.s32.totalorder %s28, 1
      %p114 = por %p112, %p113
      %p115 = scmp.ne.s32.totalorder %s106, %s107
      %p116 = scmp.eq.s32.totalorder %s28, 0
      %p117 = por %p115, %p116
      %p118 = scmp.ne.s32.totalorder %s106, %s107
      %p119 = scmp.eq.s32.totalorder %s29, 1
      %p120 = por %p118, %p119
      %p122 = scmp.ne.s32.totalorder %s107, %s121
      %p123 = scmp.eq.s32.totalorder %s29, 0
      %p124 = por %p122, %p123
      %s126 = sadd.s32 %s125, 1
      %p129 = scmp.eq.s32.totalorder %s23, 1
      %p130 = scmp.ne.s32.totalorder %s125, %s127
      %p131 = scmp.eq.s32.totalorder %s23, 0
      %p132 = por %p130, %p131
      %p133 = scmp.ne.s32.totalorder %s125, %s127
      %p134 = scmp.eq.s32.totalorder %s28, 1
      %p135 = por %p133, %p134
      %p136 = scmp.ne.s32.totalorder %s127, %s128
      %p137 = scmp.eq.s32.totalorder %s28, 0
      %p138 = por %p136, %p137
      %p139 = scmp.ne.s32.totalorder %s127, %s128
      %p140 = scmp.eq.s32.totalorder %s29, 1
      %p141 = por %p139, %p140
      %p143 = scmp.ne.s32.totalorder %s128, %s142
      %p144 = scmp.eq.s32.totalorder %s29, 0
      %p145 = por %p143, %p144
      %s146 = ssub.s32 %s23, %s30
      %p147 = scmp.eq.s32.totalorder %s146, 0
      %s149 = sadd.s32 %s148, 1
      %s150 = scalar_select %p147, %s148, %s149
      %p153 = pneg %p147
      %p154 = scmp.eq.s32.totalorder %s23, 1
      %p155 = por %p153, %p154
      %p156 = scmp.ne.s32.totalorder %s148, %s151
      %p157 = scmp.eq.s32.totalorder %s23, 0
      %p158 = por %p156, %p157
      %p159 = scmp.ne.s32.totalorder %s148, %s151
      %p160 = scmp.eq.s32.totalorder %s28, 1
      %p161 = por %p159, %p160
      %p162 = scmp.ne.s32.totalorder %s151, %s152
      %p163 = scmp.eq.s32.totalorder %s28, 0
      %p164 = por %p162, %p163
      %p165 = scmp.ne.s32.totalorder %s151, %s152
      %p166 = scmp.eq.s32.totalorder %s29, 1
      %p167 = por %p165, %p166
      %p169 = scmp.ne.s32.totalorder %s152, %s168
      %p170 = scmp.eq.s32.totalorder %s29, 0
      %p171 = por %p169, %p170
      %s172 = ssub.s32 %s23, %s30
      %p173 = scmp.eq.s32.totalorder %s172, 0
      %s175 = sadd.s32 %s174, 1
      %s176 = scalar_select %p173, %s174, %s175
      %p179 = pneg %p173
      %p180 = scmp.eq.s32.totalorder %s23, 1
      %p181 = por %p179, %p180
      %p182 = scmp.ne.s32.totalorder %s174, %s177
      %p183 = scmp.eq.s32.totalorder %s23, 0
      %p184 = por %p182, %p183
      %p185 = scmp.ne.s32.totalorder %s174, %s177
      %p186 = scmp.eq.s32.totalorder %s28, 1
      %p187 = por %p185, %p186
      %p188 = scmp.ne.s32.totalorder %s177, %s178
      %p189 = scmp.eq.s32.totalorder %s28, 0
      %p190 = por %p188, %p189
      %p191 = scmp.ne.s32.totalorder %s177, %s178
      %p192 = scmp.eq.s32.totalorder %s29, 1
      %p193 = por %p191, %p192
      %p195 = scmp.ne.s32.totalorder %s178, %s194
      %p196 = scmp.eq.s32.totalorder %s29, 0
      %p197 = por %p195, %p196
      %s198 = ssub.s32 %s23, %s30
      %p199 = scmp.eq.s32.totalorder %s198, 0
      %s201 = sadd.s32 %s200, 1
      %s202 = scalar_select %p199, %s200, %s201
      %p205 = pneg %p199
      %p206 = scmp.eq.s32.totalorder %s23, 1
      %p207 = por %p205, %p206
      %p208 = scmp.ne.s32.totalorder %s200, %s203
      %p209 = scmp.eq.s32.totalorder %s23, 0
      %p210 = por %p208, %p209
      %p211 = scmp.ne.s32.totalorder %s200, %s203
      %p212 = scmp.eq.s32.totalorder %s28, 1
      %p213 = por %p211, %p212
      %p214 = scmp.ne.s32.totalorder %s203, %s204
      %p215 = scmp.eq.s32.totalorder %s28, 0
      %p216 = por %p214, %p215
      %p217 = scmp.ne.s32.totalorder %s203, %s204
      %p218 = scmp.eq.s32.totalorder %s29, 1
      %p219 = por %p217, %p218
      %p221 = scmp.ne.s32.totalorder %s204, %s220
      %p222 = scmp.eq.s32.totalorder %s29, 0
      %p223 = por %p221, %p222
      %s224 = ssub.s32 %s23, %s30
      %p225 = scmp.eq.s32.totalorder %s224, 0
      %s227 = sadd.s32 %s226, 1
      %s228 = scalar_select %p225, %s226, %s227
      %p231 = pneg %p225
      %p232 = scmp.eq.s32.totalorder %s23, 1
      %p233 = por %p231, %p232
      %p234 = scmp.ne.s32.totalorder %s226, %s229
      %p235 = scmp.eq.s32.totalorder %s23, 0
      %p236 = por %p234, %p235
      %p237 = scmp.ne.s32.totalorder %s226, %s229
      %p238 = scmp.eq.s32.totalorder %s28, 1
      %p239 = por %p237, %p238
      %p240 = scmp.ne.s32.totalorder %s229, %s230
      %p241 = scmp.eq.s32.totalorder %s28, 0
      %p242 = por %p240, %p241
      %p243 = scmp.ne.s32.totalorder %s229, %s230
      %p244 = scmp.eq.s32.totalorder %s29, 1
      %p245 = por %p243, %p244
      %p247 = scmp.ne.s32.totalorder %s230, %s246
      %p248 = scmp.eq.s32.totalorder %s29, 0
      %p249 = por %p247, %p248
      %s250 = ssub.s32 %s23, %s30
      %p251 = scmp.eq.s32.totalorder %s250, 0
      %s253 = sadd.s32 %s252, 1
      %s254 = scalar_select %p251, %s252, %s253
      %p257 = pneg %p251
      %p258 = scmp.eq.s32.totalorder %s23, 1
      %p259 = por %p257, %p258
      %p260 = scmp.ne.s32.totalorder %s252, %s255
      %p261 = scmp.eq.s32.totalorder %s23, 0
      %p262 = por %p260, %p261
      %p263 = scmp.ne.s32.totalorder %s252, %s255
      %p264 = scmp.eq.s32.totalorder %s28, 1
      %p265 = por %p263, %p264
      %p266 = scmp.ne.s32.totalorder %s255, %s256
      %p267 = scmp.eq.s32.totalorder %s28, 0
      %p268 = por %p266, %p267
      %p269 = scmp.ne.s32.totalorder %s255, %s256
      %p270 = scmp.eq.s32.totalorder %s29, 1
      %p271 = por %p269, %p270
      %p273 = scmp.ne.s32.totalorder %s256, %s272
      %p274 = scmp.eq.s32.totalorder %s29, 0
      %p275 = por %p273, %p274
      %s276 = ssub.s32 %s23, %s30
      %p277 = scmp.eq.s32.totalorder %s276, 0
      %s279 = sadd.s32 %s278, 1
      %s280 = scalar_select %p277, %s278, %s279
      %p283 = pneg %p277
      %p284 = scmp.eq.s32.totalorder %s23, 1
      %p285 = por %p283, %p284
      %p286 = scmp.ne.s32.totalorder %s278, %s281
      %p287 = scmp.eq.s32.totalorder %s23, 0
      %p288 = por %p286, %p287
      %p289 = scmp.ne.s32.totalorder %s278, %s281
      %p290 = scmp.eq.s32.totalorder %s28, 1
      %p291 = por %p289, %p290
      %p292 = scmp.ne.s32.totalorder %s281, %s282
      %p293 = scmp.eq.s32.totalorder %s28, 0
      %p294 = por %p292, %p293
      %p295 = scmp.ne.s32.totalorder %s281, %s282
      %p296 = scmp.eq.s32.totalorder %s29, 1
      %p297 = por %p295, %p296
      %p299 = scmp.ne.s32.totalorder %s282, %s298
      %p300 = scmp.eq.s32.totalorder %s29, 0
      %p301 = por %p299, %p300
      %p302 = scmp.le.s32.totalorder 1, %s23
      %p303 = scmp.lt.s32.totalorder %s23, 3
      %p304 = pnand %p302, %p303
      %p305 = pneg %p304
      // Predicated region
      $region9: #{graph_encoder_forward.1} parent=5 // pred_check
        _
      $region10: #{graph_encoder_forward.1} parent=5 // pred_check_branch
        %307 = sbr.rel (%p304) target = $region12
      $region11: #{graph_encoder_forward.1} parent=5 // pred_region
        %s308 = ssub.s32 %s23, 1
        // Predicated region
        $region13: #{graph_encoder_forward.1} parent=11 // pred_check
          %p309 = pneg %p96
        $region14: #{graph_encoder_forward.1} parent=11 // pred_check_branch
          %311 = sbr.rel (%p309) target = $region16
        $region15: #{graph_encoder_forward.1} parent=11 // pred_region
          _
        $region16: #{graph_encoder_forward.1} parent=11 // pred_fallthru
          _
        // Predicated region
        $region17: #{graph_encoder_forward.1} parent=11 // pred_check
          %p312 = pneg %p117
        $region18: #{graph_encoder_forward.1} parent=11 // pred_check_branch
          %314 = sbr.rel (%p312) target = $region20
        $region19: #{graph_encoder_forward.1} parent=11 // pred_region
          _
        $region20: #{graph_encoder_forward.1} parent=11 // pred_fallthru
          _
        // Predicated region
        $region21: #{graph_encoder_forward.1} parent=11 // pred_check
          %p315 = pneg %p138
        $region22: #{graph_encoder_forward.1} parent=11 // pred_check_branch
          %317 = sbr.rel (%p315) target = $region24
        $region23: #{graph_encoder_forward.1} parent=11 // pred_region
          _
        $region24: #{graph_encoder_forward.1} parent=11 // pred_fallthru
          _
      $region12: #{graph_encoder_forward.1} parent=5 // pred_fallthru
        _
      %p318 = scmp.lt.s32.totalorder %s23, 2
      // Predicated region
      $region25: #{graph_encoder_forward.1} parent=5 // pred_check
        %p319 = pneg %p318
      $region26: #{graph_encoder_forward.1} parent=5 // pred_check_branch
        %321 = sbr.rel (%p319) target = $region28
      $region27: #{graph_encoder_forward.1} parent=5 // pred_region
        // Predicated region
        $region29: #{graph_encoder_forward.1} parent=27 // pred_check
          %p322 = pneg %p43
        $region30: #{graph_encoder_forward.1} parent=27 // pred_check_branch
          %324 = sbr.rel (%p322) target = $region32
        $region31: #{graph_encoder_forward.1} parent=27 // pred_region
          %p325 = scmp.lt.s32.totalorder %s23, 1
          %s326 = scalar_select %p325, %s23, 1
          %s327 = smul.addr %s326, 4
          %s328 = smul.addr %s327, 4
          %s329 = scalar_lea.vmem %s0, %s328
        $region32: #{graph_encoder_forward.1} parent=27 // pred_fallthru
          _
        // Predicated region
        $region33: #{graph_encoder_forward.1} parent=27 // pred_check
          %p330 = pneg %p69
        $region34: #{graph_encoder_forward.1} parent=27 // pred_check_branch
          %332 = sbr.rel (%p330) target = $region36
        $region35: #{graph_encoder_forward.1} parent=27 // pred_region
          %p333 = scmp.lt.s32.totalorder %s23, 1
          %s334 = scalar_select %p333, %s23, 1
          %s335 = smul.addr %s334, 4
          %s336 = smul.addr %s335, 8
          %s337 = scalar_lea.vmem %s1, %s336
        $region36: #{graph_encoder_forward.1} parent=27 // pred_fallthru
          _
        // Predicated region
        $region37: #{graph_encoder_forward.1} parent=27 // pred_check
          %p338 = pneg %p158
        $region38: #{graph_encoder_forward.1} parent=27 // pred_check_branch
          %340 = sbr.rel (%p338) target = $region40
        $region39: #{graph_encoder_forward.1} parent=27 // pred_region
          %p341 = scmp.lt.s32.totalorder %s23, 1
          %s342 = scalar_select %p341, %s23, 1
          %s343 = smul.addr %s342, 2
          %s344 = smul.addr %s343, 8
          %s345 = scalar_lea.vmem %s5, %s344
        $region40: #{graph_encoder_forward.1} parent=27 // pred_fallthru
          _
        // Predicated region
        $region41: #{graph_encoder_forward.1} parent=27 // pred_check
          %p346 = pneg %p184
        $region42: #{graph_encoder_forward.1} parent=27 // pred_check_branch
          %348 = sbr.rel (%p346) target = $region44
        $region43: #{graph_encoder_forward.1} parent=27 // pred_region
          %p349 = scmp.lt.s32.totalorder %s23, 1
          %s350 = scalar_select %p349, %s23, 1
          %s351 = smul.addr %s350, 4
          %s352 = smul.addr %s351, 8
          %s353 = scalar_lea.vmem %s6, %s352
        $region44: #{graph_encoder_forward.1} parent=27 // pred_fallthru
          _
        // Predicated region
        $region45: #{graph_encoder_forward.1} parent=27 // pred_check
          %p354 = pneg %p210
        $region46: #{graph_encoder_forward.1} parent=27 // pred_check_branch
          %356 = sbr.rel (%p354) target = $region48
        $region47: #{graph_encoder_forward.1} parent=27 // pred_region
          %p357 = scmp.lt.s32.totalorder %s23, 1
          %s358 = scalar_select %p357, %s23, 1
          %s359 = scalar_lea.vmem %s7, %s358
        $region48: #{graph_encoder_forward.1} parent=27 // pred_fallthru
          _
      $region28: #{graph_encoder_forward.1} parent=5 // pred_fallthru
        _
      %p360 = scmp.le.s32.totalorder 1, %s23
      %p361 = scmp.lt.s32.totalorder %s23, 3
      %p362 = pnand %p360, %p361
      %p363 = pneg %p362
      // Predicated region
      $region49: #{graph_encoder_forward.1} parent=5 // pred_check
        _
      $region50: #{graph_encoder_forward.1} parent=5 // pred_check_branch
        %365 = sbr.rel (%p362) target = $region52
      $region51: #{graph_encoder_forward.1} parent=5 // pred_region
        %s366 = ssub.s32 %s23, 1
        %p367 = scmp.lt.s32.totalorder %s28, 1
        %s368 = scalar_select %p367, %s28, 1
        %s369 = smul.addr %s368, 4
        %s370 = smul.addr %s369, 4
        %s371 = scalar_lea.vmem %s0, %s370
        %p372 = pneg %p49
        %p373 = pneg %p46
        %p374 = scmp.lt.s32.totalorder %s28, 1
        %s375 = scalar_select %p374, %s28, 1
        %s376 = smul.addr %s375, 4
        %s377 = smul.addr %s376, 8
        %s378 = scalar_lea.vmem %s1, %s377
        %p379 = pneg %p75
        %p380 = pneg %p72
        %p381 = pneg %p96
        %p382 = pneg %p93
        %p383 = pneg %p117
        %p384 = pneg %p114
        %p385 = pneg %p138
        %p386 = pneg %p135
        %p387 = scmp.lt.s32.totalorder %s28, 1
        %s388 = scalar_select %p387, %s28, 1
        %s389 = smul.addr %s388, 2
        %s390 = smul.addr %s389, 8
        %s391 = scalar_lea.vmem %s5, %s390
        %p392 = pneg %p164
        %p393 = pneg %p161
        %p394 = scmp.lt.s32.totalorder %s28, 1
        %s395 = scalar_select %p394, %s28, 1
        %s396 = smul.addr %s395, 4
        %s397 = smul.addr %s396, 8
        %s398 = scalar_lea.vmem %s6, %s397
        %p399 = pneg %p190
        %p400 = pneg %p187
        %p401 = scmp.lt.s32.totalorder %s28, 1
        %s402 = scalar_select %p401, %s28, 1
        %s403 = scalar_lea.vmem %s7, %s402
        %p404 = pneg %p216
        %p405 = pneg %p213
        %p406 = pneg %p242
        %p407 = pneg %p239
        %s408 = sand.u32 %s229, 1
        %s409 = scalar_lea.sflag [#allocation3], %s408
        %s410 = sand.u32 %s229, 1
        %s411 = smul.addr %s410, 16
        %s412 = scalar_lea.vmem [#allocation2], %s411
        %p413 = pneg %p268
        %p414 = pneg %p265
        %s415 = sand.u32 %s255, 1
        %s416 = scalar_lea.sflag [#allocation5], %s415
        %s417 = sand.u32 %s255, 1
        %s418 = smul.addr %s417, 16
        %s419 = scalar_lea.vmem [#allocation4], %s418
        %p420 = pneg %p294
        %p421 = pneg %p291
        %p422 = scmp.lt.s32.totalorder %s28, 1
        %s423 = scalar_select %p422, %s28, 1
        %s424 = smul.addr %s423, 2
        %s425 = scalar_lea.vmem %s10, %s424
        %p426 = scmp.lt.s32.totalorder %s28, 1
        %s427 = scalar_select %p426, %s28, 1
        %s428 = smul.addr %s427, 4
        %s429 = smul.addr %s428, 4
        %s430 = scalar_lea.vmem %s0, %s429
        %p431 = scmp.lt.s32.totalorder %s28, 1
        %s432 = scalar_select %p431, %s28, 1
        %s433 = smul.addr %s432, 4
        %s434 = smul.addr %s433, 8
        %s435 = scalar_lea.vmem %s1, %s434
        %p436 = scmp.lt.s32.totalorder %s28, 1
        %s437 = scalar_select %p436, %s28, 1
        %s438 = smul.addr %s437, 2
        %s439 = smul.addr %s438, 8
        %s440 = scalar_lea.vmem %s5, %s439
        %p441 = scmp.lt.s32.totalorder %s28, 1
        %s442 = scalar_select %p441, %s28, 1
        %s443 = smul.addr %s442, 4
        %s444 = smul.addr %s443, 8
        %s445 = scalar_lea.vmem %s6, %s444
        %p446 = scmp.lt.s32.totalorder %s28, 1
        %s447 = scalar_select %p446, %s28, 1
        %s448 = scalar_lea.vmem %s7, %s447
        %p449 = scmp.lt.s32.totalorder %s28, 1
        %s450 = scalar_select %p449, %s28, 1
        %s451 = smul.addr %s450, 2
        %s452 = scalar_lea.vmem %s10, %s451
        %v454 = vld [vmem:[%s430] sm:$0xf]
        %v455 = vld [vmem:[%s430 + $0x4] sm:$0xf]
        %v456 = vld [vmem:[%s430 + $0x8] sm:$0xf]
        %v457 = vld [vmem:[%s430 + $0xc] sm:$0xf]
        %v458 = vld [vmem:[%s435] sm:$0xff]
        %v459 = vld [vmem:[%s435 + $0x8] sm:$0xff]
        %v460 = vld [vmem:[%s435 + $0x10] sm:$0xff]
        %v461 = vld [vmem:[%s435 + $0x18] sm:$0xff]
        %v462 = vpack.c.bf16 %v459, %v458
        %v463 = vpack.c.bf16 %v461, %v460
        %v468 = vunpack.c.l.b16 %v454
        %v469 = vunpack.c.l.b16 %v455
        %v470 = vunpack.c.l.b16 %v456
        %v471 = vunpack.c.l.b16 %v457
        %v472 = vpack.c.b16 %v469, %v468
        %v473 = vpack.c.b16 %v471, %v470
        %vm474 = vcmask 261120
        %v476 = vsel %vm474, %v472, 0
        %v479 = vsel %vm474, %v473, 0
        %481 = vmatprep.subr.bf16.mxu0 0
        %482 = vmatpush1.bf16.msra.mxu0 %v462
        %483 = vmatprep.subr.bf16.mxu0 0
        %484 = vmatpush1.bf16.msra.mxu0 %v463
        %485 = vmatprep.subr.bf16.mxu0 0
        %486 = vmatpush1.bf16.msra.mxu0 0
        %487 = vmatprep.subr.bf16.mxu0 0
        %488 = vmatpush1.bf16.msra.mxu0 0
        %489 = vmatprep.subr.bf16.mxu0 0
        %490 = vmatpush1.bf16.msra.mxu0 0
        %491 = vmatprep.subr.bf16.mxu0 0
        %492 = vmatpush1.bf16.msra.mxu0 0
        %493 = vmatprep.subr.bf16.mxu0 0
        %494 = vmatpush1.bf16.msra.mxu0 0
        %495 = vmatprep.subr.bf16.mxu0 0
        %496 = vmatpush1.bf16.msra.mxu0 0
        %497 = vmatprep.subr.bf16.mxu0 0
        %498 = vmatpush1.bf16.msra.mxu0 0
        %499 = vmatprep.subr.bf16.mxu0 0
        %500 = vmatpush1.bf16.msra.mxu0 0
        %501 = vmatprep.subr.bf16.mxu0 0
        %502 = vmatpush1.bf16.msra.mxu0 0
        %503 = vmatprep.subr.bf16.mxu0 0
        %504 = vmatpush1.bf16.msra.mxu0 0
        %505 = vmatprep.subr.bf16.mxu0 0
        %506 = vmatpush1.bf16.msra.mxu0 0
        %507 = vmatprep.subr.bf16.mxu0 0
        %508 = vmatpush1.bf16.msra.mxu0 0
        %509 = vmatprep.subr.bf16.mxu0 0
        %510 = vmatpush1.bf16.msra.mxu0 0
        %511 = vmatprep.subr.bf16.mxu0 0
        %512 = vmatpush1.bf16.msra.mxu0 0
        %513 = vmatprep.mubr.bf16.mxu0 0
        %514 = vmatmul.mubr.bf16.gmra.mrb[0].mxu0 %v476
        %v515 = vpop.f32.mrb[0].mxu0
        %v516 = vadd.f32 0.0, %v515
        %v517 = vpop.f32.mrb[0].mxu0
        %v518 = vpop.f32.mrb[0].mxu0
        %v519 = vadd.f32 0.0, %v518
        %v520 = vpop.f32.mrb[0].mxu0
        %521 = vmatprep.mubr.bf16.mxu0 0
        %522 = vmatmul.mubr.bf16.gmra.mrb[0].mxu0 %v479
        %v523 = vpop.f32.mrb[0].mxu0
        %v524 = vadd.f32 0.0, %v523
        %v525 = vpop.f32.mrb[0].mxu0
        %v526 = vpop.f32.mrb[0].mxu0
        %v527 = vadd.f32 0.0, %v526
        %v528 = vpop.f32.mrb[0].mxu0
        %529 = vdwg.mxu0
        %v530 = vpack.c.bf16 %v519, %v516
        %v531 = vpack.c.bf16 %v527, %v524
        %v532 = vld [vmem:[%s2] sm:$0xf]
        %v533 = vld [vmem:[%s2 + $0x4] sm:$0xf]
        %v534 = vld [vmem:[%s2 + $0x8] sm:$0xf]
        %v535 = vld [vmem:[%s2 + $0xc] sm:$0xf]
        %v536 = vld [vmem:[%s3] sm:$0x1]
        %v538 = vlaneseq
        %v539 = vshrl.u32 %v538, 7
        %v540 = vsub.s32 0, %v539
        %v541 = vrot.slane %v536, %v540
        %v547 = vunpack.c.l.b16 %v532
        %v548 = vunpack.c.l.b16 %v533
        %v549 = vunpack.c.l.b16 %v534
        %v550 = vunpack.c.l.b16 %v535
        %v551 = vpack.c.b16 %v548, %v547
        %v552 = vpack.c.b16 %v550, %v549
        %v556 = vsel %vm474, %v530, 0
        %v559 = vsel %vm474, %v531, 0
        %561 = vmatprep.subr.bf16.mxu0 0
        %562 = vmatpush1.bf16.msra.mxu0 %v551
        %563 = vmatprep.subr.bf16.mxu0 0
        %564 = vmatpush1.bf16.msra.mxu0 %v552
        %565 = vmatprep.subr.bf16.mxu0 0
        %566 = vmatpush1.bf16.msra.mxu0 0
        %567 = vmatprep.subr.bf16.mxu0 0
        %568 = vmatpush1.bf16.msra.mxu0 0
        %569 = vmatprep.subr.bf16.mxu0 0
        %570 = vmatpush1.bf16.msra.mxu0 0
        %571 = vmatprep.subr.bf16.mxu0 0
        %572 = vmatpush1.bf16.msra.mxu0 0
        %573 = vmatprep.subr.bf16.mxu0 0
        %574 = vmatpush1.bf16.msra.mxu0 0
        %575 = vmatprep.subr.bf16.mxu0 0
        %576 = vmatpush1.bf16.msra.mxu0 0
        %577 = vmatprep.subr.bf16.mxu0 0
        %578 = vmatpush1.bf16.msra.mxu0 0
        %579 = vmatprep.subr.bf16.mxu0 0
        %580 = vmatpush1.bf16.msra.mxu0 0
        %581 = vmatprep.subr.bf16.mxu0 0
        %582 = vmatpush1.bf16.msra.mxu0 0
        %583 = vmatprep.subr.bf16.mxu0 0
        %584 = vmatpush1.bf16.msra.mxu0 0
        %585 = vmatprep.subr.bf16.mxu0 0
        %586 = vmatpush1.bf16.msra.mxu0 0
        %587 = vmatprep.subr.bf16.mxu0 0
        %588 = vmatpush1.bf16.msra.mxu0 0
        %589 = vmatprep.subr.bf16.mxu0 0
        %590 = vmatpush1.bf16.msra.mxu0 0
        %591 = vmatprep.subr.bf16.mxu0 0
        %592 = vmatpush1.bf16.msra.mxu0 0
        %593 = vmatprep.mubr.bf16.mxu0 0
        %594 = vmatmul.mubr.bf16.gmra.mrb[0].mxu0 %v556
        %v595 = vpop.f32.mrb[0].mxu0
        %v596 = vadd.f32 %v541, %v595
        %v597 = vpop.f32.mrb[0].mxu0
        %v598 = vpop.f32.mrb[0].mxu0
        %v599 = vadd.f32 %v541, %v598
        %v600 = vpop.f32.mrb[0].mxu0
        %601 = vmatprep.mubr.bf16.mxu0 0
        %602 = vmatmul.mubr.bf16.gmra.mrb[0].mxu0 %v559
        %v603 = vpop.f32.mrb[0].mxu0
        %v604 = vadd.f32 %v541, %v603
        %v605 = vpop.f32.mrb[0].mxu0
        %v606 = vpop.f32.mrb[0].mxu0
        %v607 = vadd.f32 %v541, %v606
        %v608 = vpop.f32.mrb[0].mxu0
        %609 = vdwg.mxu0
        %v610 = vmax.f32 %v596, 0.0
        %v611 = vmax.f32 %v599, 0.0
        %v612 = vmax.f32 %v604, 0.0
        %v613 = vmax.f32 %v607, 0.0
        %v614 = vpack.c.bf16 %v611, %v610
        %v615 = vpack.c.bf16 %v613, %v612
        %616 = vmatprep.subr.bf16.mxu0 0
        %617 = vmatpush1.bf16.msra.mxu0 %v614
        %618 = vmatprep.subr.bf16.mxu0 0
        %619 = vmatpush1.bf16.msra.mxu0 %v615
        %620 = vmatprep.subr.bf16.mxu0 0
        %621 = vmatpush1.bf16.msra.mxu0 0
        %622 = vmatprep.subr.bf16.mxu0 0
        %623 = vmatpush1.bf16.msra.mxu0 0
        %624 = vmatprep.subr.bf16.mxu0 0
        %625 = vmatpush1.bf16.msra.mxu0 0
        %626 = vmatprep.subr.bf16.mxu0 0
        %627 = vmatpush1.bf16.msra.mxu0 0
        %628 = vmatprep.subr.bf16.mxu0 0
        %629 = vmatpush1.bf16.msra.mxu0 0
        %630 = vmatprep.subr.bf16.mxu0 0
        %631 = vmatpush1.bf16.msra.mxu0 0
        %632 = vmatprep.subr.bf16.mxu0 0
        %633 = vmatpush1.bf16.msra.mxu0 0
        %634 = vmatprep.subr.bf16.mxu0 0
        %635 = vmatpush1.bf16.msra.mxu0 0
        %636 = vmatprep.subr.bf16.mxu0 0
        %637 = vmatpush1.bf16.msra.mxu0 0
        %638 = vmatprep.subr.bf16.mxu0 0
        %639 = vmatpush1.bf16.msra.mxu0 0
        %640 = vmatprep.subr.bf16.mxu0 0
        %641 = vmatpush1.bf16.msra.mxu0 0
        %642 = vmatprep.subr.bf16.mxu0 0
        %643 = vmatpush1.bf16.msra.mxu0 0
        %644 = vmatprep.subr.bf16.mxu0 0
        %645 = vmatpush1.bf16.msra.mxu0 0
        %646 = vmatprep.subr.bf16.mxu0 0
        %647 = vmatpush1.bf16.msra.mxu0 0
        %648 = vmatprep.mubr.bf16.mxu0 0
        %649 = vmatmul.mubr.bf16.gmra.mrb[0].mxu0 %v476
        %v650 = vpop.f32.mrb[0].mxu0
        %v651 = vadd.f32 0.0, %v650
        %v652 = vpop.f32.mrb[0].mxu0
        %v653 = vpop.f32.mrb[0].mxu0
        %v654 = vadd.f32 0.0, %v653
        %v655 = vpop.f32.mrb[0].mxu0
        %656 = vmatprep.mubr.bf16.mxu0 0
        %657 = vmatmul.mubr.bf16.gmra.mrb[0].mxu0 %v479
        %v658 = vpop.f32.mrb[0].mxu0
        %v659 = vadd.f32 0.0, %v658
        %v660 = vpop.f32.mrb[0].mxu0
        %v661 = vpop.f32.mrb[0].mxu0
        %v662 = vadd.f32 0.0, %v661
        %v663 = vpop.f32.mrb[0].mxu0
        %664 = vdwg.mxu0
        %v665 = vpack.c.bf16 %v654, %v651
        %v666 = vpack.c.bf16 %v662, %v659
        %s667 = scalar_lea.vmem %s2, 16
        %v668 = vld [vmem:[%s667] sm:$0xf]
        %v669 = vld [vmem:[%s667 + $0x4] sm:$0xf]
        %v670 = vld [vmem:[%s667 + $0x8] sm:$0xf]
        %v671 = vld [vmem:[%s667 + $0xc] sm:$0xf]
        %s672 = scalar_lea.vmem %s3, 1
        %v673 = vld [vmem:[%s672] sm:$0x1]
        %v675 = vlaneseq
        %v676 = vshrl.u32 %v675, 7
        %v677 = vsub.s32 0, %v676
        %v678 = vrot.slane %v673, %v677
        %v684 = vunpack.c.l.b16 %v668
        %v685 = vunpack.c.l.b16 %v669
        %v686 = vunpack.c.l.b16 %v670
        %v687 = vunpack.c.l.b16 %v671
        %v688 = vpack.c.b16 %v685, %v684
        %v689 = vpack.c.b16 %v687, %v686
        %v693 = vsel %vm474, %v665, 0
        %v696 = vsel %vm474, %v666, 0
        %698 = vmatprep.subr.bf16.mxu0 0
        %699 = vmatpush1.bf16.msra.mxu0 %v688
        %700 = vmatprep.subr.bf16.mxu0 0
        %701 = vmatpush1.bf16.msra.mxu0 %v689
        %702 = vmatprep.subr.bf16.mxu0 0
        %703 = vmatpush1.bf16.msra.mxu0 0
        %704 = vmatprep.subr.bf16.mxu0 0
        %705 = vmatpush1.bf16.msra.mxu0 0
        %706 = vmatprep.subr.bf16.mxu0 0
        %707 = vmatpush1.bf16.msra.mxu0 0
        %708 = vmatprep.subr.bf16.mxu0 0
        %709 = vmatpush1.bf16.msra.mxu0 0
        %710 = vmatprep.subr.bf16.mxu0 0
        %711 = vmatpush1.bf16.msra.mxu0 0
        %712 = vmatprep.subr.bf16.mxu0 0
        %713 = vmatpush1.bf16.msra.mxu0 0
        %714 = vmatprep.subr.bf16.mxu0 0
        %715 = vmatpush1.bf16.msra.mxu0 0
        %716 = vmatprep.subr.bf16.mxu0 0
        %717 = vmatpush1.bf16.msra.mxu0 0
        %718 = vmatprep.subr.bf16.mxu0 0
        %719 = vmatpush1.bf16.msra.mxu0 0
        %720 = vmatprep.subr.bf16.mxu0 0
        %721 = vmatpush1.bf16.msra.mxu0 0
        %722 = vmatprep.subr.bf16.mxu0 0
        %723 = vmatpush1.bf16.msra.mxu0 0
        %724 = vmatprep.subr.bf16.mxu0 0
        %725 = vmatpush1.bf16.msra.mxu0 0
        %726 = vmatprep.subr.bf16.mxu0 0
        %727 = vmatpush1.bf16.msra.mxu0 0
        %728 = vmatprep.subr.bf16.mxu0 0
        %729 = vmatpush1.bf16.msra.mxu0 0
        %730 = vmatprep.mubr.bf16.mxu0 0
        %731 = vmatmul.mubr.bf16.gmra.mrb[0].mxu0 %v693
        %v732 = vpop.f32.mrb[0].mxu0
        %v733 = vadd.f32 %v678, %v732
        %v734 = vpop.f32.mrb[0].mxu0
        %v735 = vpop.f32.mrb[0].mxu0
        %v736 = vadd.f32 %v678, %v735
        %v737 = vpop.f32.mrb[0].mxu0
        %738 = vmatprep.mubr.bf16.mxu0 0
        %739 = vmatmul.mubr.bf16.gmra.mrb[0].mxu0 %v696
        %v740 = vpop.f32.mrb[0].mxu0
        %v741 = vadd.f32 %v678, %v740
        %v742 = vpop.f32.mrb[0].mxu0
        %v743 = vpop.f32.mrb[0].mxu0
        %v744 = vadd.f32 %v678, %v743
        %v745 = vpop.f32.mrb[0].mxu0
        %746 = vdwg.mxu0
        %v747 = vmax.f32 %v733, 0.0
        %v748 = vmax.f32 %v736, 0.0
        %v749 = vmax.f32 %v741, 0.0
        %v750 = vmax.f32 %v744, 0.0
        %v751 = vpack.c.bf16 %v748, %v747
        %v752 = vpack.c.bf16 %v750, %v749
        %753 = vmatprep.subr.bf16.mxu0 0
        %754 = vmatpush1.bf16.msra.mxu0 %v751
        %755 = vmatprep.subr.bf16.mxu0 0
        %756 = vmatpush1.bf16.msra.mxu0 %v752
        %757 = vmatprep.subr.bf16.mxu0 0
        %758 = vmatpush1.bf16.msra.mxu0 0
        %759 = vmatprep.subr.bf16.mxu0 0
        %760 = vmatpush1.bf16.msra.mxu0 0
        %761 = vmatprep.subr.bf16.mxu0 0
        %762 = vmatpush1.bf16.msra.mxu0 0
        %763 = vmatprep.subr.bf16.mxu0 0
        %764 = vmatpush1.bf16.msra.mxu0 0
        %765 = vmatprep.subr.bf16.mxu0 0
        %766 = vmatpush1.bf16.msra.mxu0 0
        %767 = vmatprep.subr.bf16.mxu0 0
        %768 = vmatpush1.bf16.msra.mxu0 0
        %769 = vmatprep.subr.bf16.mxu0 0
        %770 = vmatpush1.bf16.msra.mxu0 0
        %771 = vmatprep.subr.bf16.mxu0 0
        %772 = vmatpush1.bf16.msra.mxu0 0
        %773 = vmatprep.subr.bf16.mxu0 0
        %774 = vmatpush1.bf16.msra.mxu0 0
        %775 = vmatprep.subr.bf16.mxu0 0
        %776 = vmatpush1.bf16.msra.mxu0 0
        %777 = vmatprep.subr.bf16.mxu0 0
        %778 = vmatpush1.bf16.msra.mxu0 0
        %779 = vmatprep.subr.bf16.mxu0 0
        %780 = vmatpush1.bf16.msra.mxu0 0
        %781 = vmatprep.subr.bf16.mxu0 0
        %782 = vmatpush1.bf16.msra.mxu0 0
        %783 = vmatprep.subr.bf16.mxu0 0
        %784 = vmatpush1.bf16.msra.mxu0 0
        %785 = vmatprep.mubr.bf16.mxu0 0
        %786 = vmatmul.mubr.bf16.gmra.mrb[0].mxu0 %v476
        %v787 = vpop.f32.mrb[0].mxu0
        %v788 = vadd.f32 0.0, %v787
        %v789 = vpop.f32.mrb[0].mxu0
        %v790 = vpop.f32.mrb[0].mxu0
        %v791 = vadd.f32 0.0, %v790
        %v792 = vpop.f32.mrb[0].mxu0
        %793 = vmatprep.mubr.bf16.mxu0 0
        %794 = vmatmul.mubr.bf16.gmra.mrb[0].mxu0 %v479
        %v795 = vpop.f32.mrb[0].mxu0
        %v796 = vadd.f32 0.0, %v795
        %v797 = vpop.f32.mrb[0].mxu0
        %v798 = vpop.f32.mrb[0].mxu0
        %v799 = vadd.f32 0.0, %v798
        %v800 = vpop.f32.mrb[0].mxu0
        %801 = vdwg.mxu0
        %v802 = vpack.c.bf16 %v791, %v788
        %v803 = vpack.c.bf16 %v799, %v796
        %s804 = scalar_lea.vmem %s2, 32
        %v805 = vld [vmem:[%s804] sm:$0xf]
        %v806 = vld [vmem:[%s804 + $0x4] sm:$0xf]
        %v807 = vld [vmem:[%s804 + $0x8] sm:$0xf]
        %v808 = vld [vmem:[%s804 + $0xc] sm:$0xf]
        %s809 = scalar_lea.vmem %s3, 2
        %v810 = vld [vmem:[%s809] sm:$0x1]
        %v812 = vlaneseq
        %v813 = vshrl.u32 %v812, 7
        %v814 = vsub.s32 0, %v813
        %v815 = vrot.slane %v810, %v814
        %v821 = vunpack.c.l.b16 %v805
        %v822 = vunpack.c.l.b16 %v806
        %v823 = vunpack.c.l.b16 %v807
        %v824 = vunpack.c.l.b16 %v808
        %v825 = vpack.c.b16 %v822, %v821
        %v826 = vpack.c.b16 %v824, %v823
        %v830 = vsel %vm474, %v802, 0
        %v833 = vsel %vm474, %v803, 0
        %835 = vmatprep.subr.bf16.mxu0 0
        %836 = vmatpush1.bf16.msra.mxu0 %v825
        %837 = vmatprep.subr.bf16.mxu0 0
        %838 = vmatpush1.bf16.msra.mxu0 %v826
        %839 = vmatprep.subr.bf16.mxu0 0
        %840 = vmatpush1.bf16.msra.mxu0 0
        %841 = vmatprep.subr.bf16.mxu0 0
        %842 = vmatpush1.bf16.msra.mxu0 0
        %843 = vmatprep.subr.bf16.mxu0 0
        %844 = vmatpush1.bf16.msra.mxu0 0
        %845 = vmatprep.subr.bf16.mxu0 0
        %846 = vmatpush1.bf16.msra.mxu0 0
        %847 = vmatprep.subr.bf16.mxu0 0
        %848 = vmatpush1.bf16.msra.mxu0 0
        %849 = vmatprep.subr.bf16.mxu0 0
        %850 = vmatpush1.bf16.msra.mxu0 0
        %851 = vmatprep.subr.bf16.mxu0 0
        %852 = vmatpush1.bf16.msra.mxu0 0
        %853 = vmatprep.subr.bf16.mxu0 0
        %854 = vmatpush1.bf16.msra.mxu0 0
        %855 = vmatprep.subr.bf16.mxu0 0
        %856 = vmatpush1.bf16.msra.mxu0 0
        %857 = vmatprep.subr.bf16.mxu0 0
        %858 = vmatpush1.bf16.msra.mxu0 0
        %859 = vmatprep.subr.bf16.mxu0 0
        %860 = vmatpush1.bf16.msra.mxu0 0
        %861 = vmatprep.subr.bf16.mxu0 0
        %862 = vmatpush1.bf16.msra.mxu0 0
        %863 = vmatprep.subr.bf16.mxu0 0
        %864 = vmatpush1.bf16.msra.mxu0 0
        %865 = vmatprep.subr.bf16.mxu0 0
        %866 = vmatpush1.bf16.msra.mxu0 0
        %867 = vmatprep.mubr.bf16.mxu0 0
        %868 = vmatmul.mubr.bf16.gmra.mrb[0].mxu0 %v830
        %v869 = vpop.f32.mrb[0].mxu0
        %v870 = vadd.f32 %v815, %v869
        %v871 = vpop.f32.mrb[0].mxu0
        %v872 = vpop.f32.mrb[0].mxu0
        %v873 = vadd.f32 %v815, %v872
        %v874 = vpop.f32.mrb[0].mxu0
        %875 = vmatprep.mubr.bf16.mxu0 0
        %876 = vmatmul.mubr.bf16.gmra.mrb[0].mxu0 %v833
        %v877 = vpop.f32.mrb[0].mxu0
        %v878 = vadd.f32 %v815, %v877
        %v879 = vpop.f32.mrb[0].mxu0
        %v880 = vpop.f32.mrb[0].mxu0
        %v881 = vadd.f32 %v815, %v880
        %v882 = vpop.f32.mrb[0].mxu0
        %883 = vdwg.mxu0
        %v884 = vmax.f32 %v870, 0.0
        %v885 = vmax.f32 %v873, 0.0
        %v886 = vmax.f32 %v878, 0.0
        %v887 = vmax.f32 %v881, 0.0
        %v888 = vpack.c.bf16 %v885, %v884
        %v889 = vpack.c.bf16 %v887, %v886
        %890 = vmatprep.subr.bf16.mxu0 0
        %891 = vmatpush1.bf16.msra.mxu0 %v888
        %892 = vmatprep.subr.bf16.mxu0 0
        %893 = vmatpush1.bf16.msra.mxu0 %v889
        %894 = vmatprep.subr.bf16.mxu0 0
        %895 = vmatpush1.bf16.msra.mxu0 0
        %896 = vmatprep.subr.bf16.mxu0 0
        %897 = vmatpush1.bf16.msra.mxu0 0
        %898 = vmatprep.subr.bf16.mxu0 0
        %899 = vmatpush1.bf16.msra.mxu0 0
        %900 = vmatprep.subr.bf16.mxu0 0
        %901 = vmatpush1.bf16.msra.mxu0 0
        %902 = vmatprep.subr.bf16.mxu0 0
        %903 = vmatpush1.bf16.msra.mxu0 0
        %904 = vmatprep.subr.bf16.mxu0 0
        %905 = vmatpush1.bf16.msra.mxu0 0
        %906 = vmatprep.subr.bf16.mxu0 0
        %907 = vmatpush1.bf16.msra.mxu0 0
        %908 = vmatprep.subr.bf16.mxu0 0
        %909 = vmatpush1.bf16.msra.mxu0 0
        %910 = vmatprep.subr.bf16.mxu0 0
        %911 = vmatpush1.bf16.msra.mxu0 0
        %912 = vmatprep.subr.bf16.mxu0 0
        %913 = vmatpush1.bf16.msra.mxu0 0
        %914 = vmatprep.subr.bf16.mxu0 0
        %915 = vmatpush1.bf16.msra.mxu0 0
        %916 = vmatprep.subr.bf16.mxu0 0
        %917 = vmatpush1.bf16.msra.mxu0 0
        %918 = vmatprep.subr.bf16.mxu0 0
        %919 = vmatpush1.bf16.msra.mxu0 0
        %920 = vmatprep.subr.bf16.mxu0 0
        %921 = vmatpush1.bf16.msra.mxu0 0
        %922 = vmatprep.mubr.bf16.mxu0 0
        %923 = vmatmul.mubr.bf16.gmra.mrb[0].mxu0 %v476
        %v924 = vpop.f32.mrb[0].mxu0
        %v925 = vadd.f32 0.0, %v924
        %v926 = vpop.f32.mrb[0].mxu0
        %v927 = vpop.f32.mrb[0].mxu0
        %v928 = vadd.f32 0.0, %v927
        %v929 = vpop.f32.mrb[0].mxu0
        %930 = vmatprep.mubr.bf16.mxu0 0
        %931 = vmatmul.mubr.bf16.gmra.mrb[0].mxu0 %v479
        %v932 = vpop.f32.mrb[0].mxu0
        %v933 = vadd.f32 0.0, %v932
        %v934 = vpop.f32.mrb[0].mxu0
        %v935 = vpop.f32.mrb[0].mxu0
        %v936 = vadd.f32 0.0, %v935
        %v937 = vpop.f32.mrb[0].mxu0
        %938 = vdwg.mxu0
        %v939 = vpack.c.bf16 %v928, %v925
        %v940 = vpack.c.bf16 %v936, %v933
        %s941 = scalar_lea.vmem %s2, 48
        %v942 = vld [vmem:[%s941] sm:$0xf]
        %v943 = vld [vmem:[%s941 + $0x4] sm:$0xf]
        %v944 = vld [vmem:[%s941 + $0x8] sm:$0xf]
        %v945 = vld [vmem:[%s941 + $0xc] sm:$0xf]
        %s946 = scalar_lea.vmem %s3, 3
        %v947 = vld [vmem:[%s946] sm:$0x1]
        %v949 = vlaneseq
        %v950 = vshrl.u32 %v949, 7
        %v951 = vsub.s32 0, %v950
        %v952 = vrot.slane %v947, %v951
        %v958 = vunpack.c.l.b16 %v942
        %v959 = vunpack.c.l.b16 %v943
        %v960 = vunpack.c.l.b16 %v944
        %v961 = vunpack.c.l.b16 %v945
        %v962 = vpack.c.b16 %v959, %v958
        %v963 = vpack.c.b16 %v961, %v960
        %v967 = vsel %vm474, %v939, 0
        %v970 = vsel %vm474, %v940, 0
        %972 = vmatprep.subr.bf16.mxu0 0
        %973 = vmatpush1.bf16.msra.mxu0 %v962
        %974 = vmatprep.subr.bf16.mxu0 0
        %975 = vmatpush1.bf16.msra.mxu0 %v963
        %976 = vmatprep.subr.bf16.mxu0 0
        %977 = vmatpush1.bf16.msra.mxu0 0
        %978 = vmatprep.subr.bf16.mxu0 0
        %979 = vmatpush1.bf16.msra.mxu0 0
        %980 = vmatprep.subr.bf16.mxu0 0
        %981 = vmatpush1.bf16.msra.mxu0 0
        %982 = vmatprep.subr.bf16.mxu0 0
        %983 = vmatpush1.bf16.msra.mxu0 0
        %984 = vmatprep.subr.bf16.mxu0 0
        %985 = vmatpush1.bf16.msra.mxu0 0
        %986 = vmatprep.subr.bf16.mxu0 0
        %987 = vmatpush1.bf16.msra.mxu0 0
        %988 = vmatprep.subr.bf16.mxu0 0
        %989 = vmatpush1.bf16.msra.mxu0 0
        %990 = vmatprep.subr.bf16.mxu0 0
        %991 = vmatpush1.bf16.msra.mxu0 0
        %992 = vmatprep.subr.bf16.mxu0 0
        %993 = vmatpush1.bf16.msra.mxu0 0
        %994 = vmatprep.subr.bf16.mxu0 0
        %995 = vmatpush1.bf16.msra.mxu0 0
        %996 = vmatprep.subr.bf16.mxu0 0
        %997 = vmatpush1.bf16.msra.mxu0 0
        %998 = vmatprep.subr.bf16.mxu0 0
        %999 = vmatpush1.bf16.msra.mxu0 0
        %1000 = vmatprep.subr.bf16.mxu0 0
        %1001 = vmatpush1.bf16.msra.mxu0 0
        %1002 = vmatprep.subr.bf16.mxu0 0
        %1003 = vmatpush1.bf16.msra.mxu0 0
        %1004 = vmatprep.mubr.bf16.mxu0 0
        %1005 = vmatmul.mubr.bf16.gmra.mrb[0].mxu0 %v967
        %v1006 = vpop.f32.mrb[0].mxu0
        %v1007 = vadd.f32 %v952, %v1006
        %v1008 = vpop.f32.mrb[0].mxu0
        %v1009 = vpop.f32.mrb[0].mxu0
        %v1010 = vadd.f32 %v952, %v1009
        %v1011 = vpop.f32.mrb[0].mxu0
        %1012 = vmatprep.mubr.bf16.mxu0 0
        %1013 = vmatmul.mubr.bf16.gmra.mrb[0].mxu0 %v970
        %v1014 = vpop.f32.mrb[0].mxu0
        %v1015 = vadd.f32 %v952, %v1014
        %v1016 = vpop.f32.mrb[0].mxu0
        %v1017 = vpop.f32.mrb[0].mxu0
        %v1018 = vadd.f32 %v952, %v1017
        %v1019 = vpop.f32.mrb[0].mxu0
        %1020 = vdwg.mxu0
        %v1021 = vmax.f32 %v1007, 0.0
        %v1022 = vmax.f32 %v1010, 0.0
        %v1023 = vmax.f32 %v1015, 0.0
        %v1024 = vmax.f32 %v1018, 0.0
        %v1025 = vpack.c.bf16 %v1022, %v1021
        %v1026 = vpack.c.bf16 %v1024, %v1023
        %1027 = vmatprep.subr.bf16.mxu0 0
        %1028 = vmatpush1.bf16.msra.mxu0 %v1025
        %1029 = vmatprep.subr.bf16.mxu0 0
        %1030 = vmatpush1.bf16.msra.mxu0 %v1026
        %1031 = vmatprep.subr.bf16.mxu0 0
        %1032 = vmatpush1.bf16.msra.mxu0 0
        %1033 = vmatprep.subr.bf16.mxu0 0
        %1034 = vmatpush1.bf16.msra.mxu0 0
        %1035 = vmatprep.subr.bf16.mxu0 0
        %1036 = vmatpush1.bf16.msra.mxu0 0
        %1037 = vmatprep.subr.bf16.mxu0 0
        %1038 = vmatpush1.bf16.msra.mxu0 0
        %1039 = vmatprep.subr.bf16.mxu0 0
        %1040 = vmatpush1.bf16.msra.mxu0 0
        %1041 = vmatprep.subr.bf16.mxu0 0
        %1042 = vmatpush1.bf16.msra.mxu0 0
        %1043 = vmatprep.subr.bf16.mxu0 0
        %1044 = vmatpush1.bf16.msra.mxu0 0
        %1045 = vmatprep.subr.bf16.mxu0 0
        %1046 = vmatpush1.bf16.msra.mxu0 0
        %1047 = vmatprep.subr.bf16.mxu0 0
        %1048 = vmatpush1.bf16.msra.mxu0 0
        %1049 = vmatprep.subr.bf16.mxu0 0
        %1050 = vmatpush1.bf16.msra.mxu0 0
        %1051 = vmatprep.subr.bf16.mxu0 0
        %1052 = vmatpush1.bf16.msra.mxu0 0
        %1053 = vmatprep.subr.bf16.mxu0 0
        %1054 = vmatpush1.bf16.msra.mxu0 0
        %1055 = vmatprep.subr.bf16.mxu0 0
        %1056 = vmatpush1.bf16.msra.mxu0 0
        %1057 = vmatprep.subr.bf16.mxu0 0
        %1058 = vmatpush1.bf16.msra.mxu0 0
        %1059 = vmatprep.mubr.bf16.mxu0 0
        %1060 = vmatmul.mubr.bf16.gmra.mrb[0].mxu0 %v476
        %v1061 = vpop.f32.mrb[0].mxu0
        %v1062 = vadd.f32 0.0, %v1061
        %v1063 = vpop.f32.mrb[0].mxu0
        %v1064 = vpop.f32.mrb[0].mxu0
        %v1065 = vadd.f32 0.0, %v1064
        %v1066 = vpop.f32.mrb[0].mxu0
        %1067 = vmatprep.mubr.bf16.mxu0 0
        %1068 = vmatmul.mubr.bf16.gmra.mrb[0].mxu0 %v479
        %v1069 = vpop.f32.mrb[0].mxu0
        %v1070 = vadd.f32 0.0, %v1069
        %v1071 = vpop.f32.mrb[0].mxu0
        %v1072 = vpop.f32.mrb[0].mxu0
        %v1073 = vadd.f32 0.0, %v1072
        %v1074 = vpop.f32.mrb[0].mxu0
        %1075 = vdwg.mxu0
        %v1076 = vpack.c.bf16 %v1065, %v1062
        %v1077 = vpack.c.bf16 %v1073, %v1070
        %s1078 = scalar_lea.vmem %s2, 64
        %v1079 = vld [vmem:[%s1078] sm:$0xf]
        %v1080 = vld [vmem:[%s1078 + $0x4] sm:$0xf]
        %v1081 = vld [vmem:[%s1078 + $0x8] sm:$0xf]
        %v1082 = vld [vmem:[%s1078 + $0xc] sm:$0xf]
        %s1083 = scalar_lea.vmem %s3, 4
        %v1084 = vld [vmem:[%s1083] sm:$0x1]
        %v1086 = vlaneseq
        %v1087 = vshrl.u32 %v1086, 7
        %v1088 = vsub.s32 0, %v1087
        %v1089 = vrot.slane %v1084, %v1088
        %v1095 = vunpack.c.l.b16 %v1079
        %v1096 = vunpack.c.l.b16 %v1080
        %v1097 = vunpack.c.l.b16 %v1081
        %v1098 = vunpack.c.l.b16 %v1082
        %v1099 = vpack.c.b16 %v1096, %v1095
        %v1100 = vpack.c.b16 %v1098, %v1097
        %v1104 = vsel %vm474, %v1076, 0
        %v1107 = vsel %vm474, %v1077, 0
        %1109 = vmatprep.subr.bf16.mxu0 0
        %1110 = vmatpush1.bf16.msra.mxu0 %v1099
        %1111 = vmatprep.subr.bf16.mxu0 0
        %1112 = vmatpush1.bf16.msra.mxu0 %v1100
        %1113 = vmatprep.subr.bf16.mxu0 0
        %1114 = vmatpush1.bf16.msra.mxu0 0
        %1115 = vmatprep.subr.bf16.mxu0 0
        %1116 = vmatpush1.bf16.msra.mxu0 0
        %1117 = vmatprep.subr.bf16.mxu0 0
        %1118 = vmatpush1.bf16.msra.mxu0 0
        %1119 = vmatprep.subr.bf16.mxu0 0
        %1120 = vmatpush1.bf16.msra.mxu0 0
        %1121 = vmatprep.subr.bf16.mxu0 0
        %1122 = vmatpush1.bf16.msra.mxu0 0
        %1123 = vmatprep.subr.bf16.mxu0 0
        %1124 = vmatpush1.bf16.msra.mxu0 0
        %1125 = vmatprep.subr.bf16.mxu0 0
        %1126 = vmatpush1.bf16.msra.mxu0 0
        %1127 = vmatprep.subr.bf16.mxu0 0
        %1128 = vmatpush1.bf16.msra.mxu0 0
        %1129 = vmatprep.subr.bf16.mxu0 0
        %1130 = vmatpush1.bf16.msra.mxu0 0
        %1131 = vmatprep.subr.bf16.mxu0 0
        %1132 = vmatpush1.bf16.msra.mxu0 0
        %1133 = vmatprep.subr.bf16.mxu0 0
        %1134 = vmatpush1.bf16.msra.mxu0 0
        %1135 = vmatprep.subr.bf16.mxu0 0
        %1136 = vmatpush1.bf16.msra.mxu0 0
        %1137 = vmatprep.subr.bf16.mxu0 0
        %1138 = vmatpush1.bf16.msra.mxu0 0
        %1139 = vmatprep.subr.bf16.mxu0 0
        %1140 = vmatpush1.bf16.msra.mxu0 0
        %1141 = vmatprep.mubr.bf16.mxu0 0
        %1142 = vmatmul.mubr.bf16.gmra.mrb[0].mxu0 %v1104
        %v1143 = vpop.f32.mrb[0].mxu0
        %v1144 = vadd.f32 %v1089, %v1143
        %v1145 = vpop.f32.mrb[0].mxu0
        %v1146 = vpop.f32.mrb[0].mxu0
        %v1147 = vadd.f32 %v1089, %v1146
        %v1148 = vpop.f32.mrb[0].mxu0
        %1149 = vmatprep.mubr.bf16.mxu0 0
        %1150 = vmatmul.mubr.bf16.gmra.mrb[0].mxu0 %v1107
        %v1151 = vpop.f32.mrb[0].mxu0
        %v1152 = vadd.f32 %v1089, %v1151
        %v1153 = vpop.f32.mrb[0].mxu0
        %v1154 = vpop.f32.mrb[0].mxu0
        %v1155 = vadd.f32 %v1089, %v1154
        %v1156 = vpop.f32.mrb[0].mxu0
        %1157 = vdwg.mxu0
        %v1158 = vmax.f32 %v1144, 0.0
        %v1159 = vmax.f32 %v1147, 0.0
        %v1160 = vmax.f32 %v1152, 0.0
        %v1161 = vmax.f32 %v1155, 0.0
        %v1162 = vpack.c.bf16 %v1159, %v1158
        %v1163 = vpack.c.bf16 %v1161, %v1160
        %1164 = vmatprep.subr.bf16.mxu0 0
        %1165 = vmatpush1.bf16.msra.mxu0 %v1162
        %1166 = vmatprep.subr.bf16.mxu0 0
        %1167 = vmatpush1.bf16.msra.mxu0 %v1163
        %1168 = vmatprep.subr.bf16.mxu0 0
        %1169 = vmatpush1.bf16.msra.mxu0 0
        %1170 = vmatprep.subr.bf16.mxu0 0
        %1171 = vmatpush1.bf16.msra.mxu0 0
        %1172 = vmatprep.subr.bf16.mxu0 0
        %1173 = vmatpush1.bf16.msra.mxu0 0
        %1174 = vmatprep.subr.bf16.mxu0 0
        %1175 = vmatpush1.bf16.msra.mxu0 0
        %1176 = vmatprep.subr.bf16.mxu0 0
        %1177 = vmatpush1.bf16.msra.mxu0 0
        %1178 = vmatprep.subr.bf16.mxu0 0
        %1179 = vmatpush1.bf16.msra.mxu0 0
        %1180 = vmatprep.subr.bf16.mxu0 0
        %1181 = vmatpush1.bf16.msra.mxu0 0
        %1182 = vmatprep.subr.bf16.mxu0 0
        %1183 = vmatpush1.bf16.msra.mxu0 0
        %1184 = vmatprep.subr.bf16.mxu0 0
        %1185 = vmatpush1.bf16.msra.mxu0 0
        %1186 = vmatprep.subr.bf16.mxu0 0
        %1187 = vmatpush1.bf16.msra.mxu0 0
        %1188 = vmatprep.subr.bf16.mxu0 0
        %1189 = vmatpush1.bf16.msra.mxu0 0
        %1190 = vmatprep.subr.bf16.mxu0 0
        %1191 = vmatpush1.bf16.msra.mxu0 0
        %1192 = vmatprep.subr.bf16.mxu0 0
        %1193 = vmatpush1.bf16.msra.mxu0 0
        %1194 = vmatprep.subr.bf16.mxu0 0
        %1195 = vmatpush1.bf16.msra.mxu0 0
        %1196 = vmatprep.mubr.bf16.mxu0 0
        %1197 = vmatmul.mubr.bf16.gmra.mrb[0].mxu0 %v476
        %v1198 = vpop.f32.mrb[0].mxu0
        %v1199 = vadd.f32 0.0, %v1198
        %v1200 = vpop.f32.mrb[0].mxu0
        %v1201 = vpop.f32.mrb[0].mxu0
        %v1202 = vadd.f32 0.0, %v1201
        %v1203 = vpop.f32.mrb[0].mxu0
        %1204 = vmatprep.mubr.bf16.mxu0 0
        %1205 = vmatmul.mubr.bf16.gmra.mrb[0].mxu0 %v479
        %v1206 = vpop.f32.mrb[0].mxu0
        %v1207 = vadd.f32 0.0, %v1206
        %v1208 = vpop.f32.mrb[0].mxu0
        %v1209 = vpop.f32.mrb[0].mxu0
        %v1210 = vadd.f32 0.0, %v1209
        %v1211 = vpop.f32.mrb[0].mxu0
        %1212 = vdwg.mxu0
        %v1213 = vpack.c.bf16 %v1202, %v1199
        %v1214 = vpack.c.bf16 %v1210, %v1207
        %s1215 = scalar_lea.vmem %s2, 80
        %v1216 = vld [vmem:[%s1215] sm:$0xf]
        %v1217 = vld [vmem:[%s1215 + $0x4] sm:$0xf]
        %v1218 = vld [vmem:[%s1215 + $0x8] sm:$0xf]
        %v1219 = vld [vmem:[%s1215 + $0xc] sm:$0xf]
        %s1220 = scalar_lea.vmem %s3, 5
        %v1221 = vld [vmem:[%s1220] sm:$0x1]
        %v1223 = vlaneseq
        %v1224 = vshrl.u32 %v1223, 7
        %v1225 = vsub.s32 0, %v1224
        %v1226 = vrot.slane %v1221, %v1225
        %v1232 = vunpack.c.l.b16 %v1216
        %v1233 = vunpack.c.l.b16 %v1217
        %v1234 = vunpack.c.l.b16 %v1218
        %v1235 = vunpack.c.l.b16 %v1219
        %v1236 = vpack.c.b16 %v1233, %v1232
        %v1237 = vpack.c.b16 %v1235, %v1234
        %v1241 = vsel %vm474, %v1213, 0
        %v1244 = vsel %vm474, %v1214, 0
        %1246 = vmatprep.subr.bf16.mxu0 0
        %1247 = vmatpush1.bf16.msra.mxu0 %v1236
        %1248 = vmatprep.subr.bf16.mxu0 0
        %1249 = vmatpush1.bf16.msra.mxu0 %v1237
        %1250 = vmatprep.subr.bf16.mxu0 0
        %1251 = vmatpush1.bf16.msra.mxu0 0
        %1252 = vmatprep.subr.bf16.mxu0 0
        %1253 = vmatpush1.bf16.msra.mxu0 0
        %1254 = vmatprep.subr.bf16.mxu0 0
        %1255 = vmatpush1.bf16.msra.mxu0 0
        %1256 = vmatprep.subr.bf16.mxu0 0
        %1257 = vmatpush1.bf16.msra.mxu0 0
        %1258 = vmatprep.subr.bf16.mxu0 0
        %1259 = vmatpush1.bf16.msra.mxu0 0
        %1260 = vmatprep.subr.bf16.mxu0 0
        %1261 = vmatpush1.bf16.msra.mxu0 0
        %1262 = vmatprep.subr.bf16.mxu0 0
        %1263 = vmatpush1.bf16.msra.mxu0 0
        %1264 = vmatprep.subr.bf16.mxu0 0
        %1265 = vmatpush1.bf16.msra.mxu0 0
        %1266 = vmatprep.subr.bf16.mxu0 0
        %1267 = vmatpush1.bf16.msra.mxu0 0
        %1268 = vmatprep.subr.bf16.mxu0 0
        %1269 = vmatpush1.bf16.msra.mxu0 0
        %1270 = vmatprep.subr.bf16.mxu0 0
        %1271 = vmatpush1.bf16.msra.mxu0 0
        %1272 = vmatprep.subr.bf16.mxu0 0
        %1273 = vmatpush1.bf16.msra.mxu0 0
        %1274 = vmatprep.subr.bf16.mxu0 0
        %1275 = vmatpush1.bf16.msra.mxu0 0
        %1276 = vmatprep.subr.bf16.mxu0 0
        %1277 = vmatpush1.bf16.msra.mxu0 0
        %1278 = vmatprep.mubr.bf16.mxu0 0
        %1279 = vmatmul.mubr.bf16.gmra.mrb[0].mxu0 %v1241
        %v1280 = vpop.f32.mrb[0].mxu0
        %v1281 = vadd.f32 %v1226, %v1280
        %v1282 = vpop.f32.mrb[0].mxu0
        %v1283 = vpop.f32.mrb[0].mxu0
        %v1284 = vadd.f32 %v1226, %v1283
        %v1285 = vpop.f32.mrb[0].mxu0
        %1286 = vmatprep.mubr.bf16.mxu0 0
        %1287 = vmatmul.mubr.bf16.gmra.mrb[0].mxu0 %v1244
        %v1288 = vpop.f32.mrb[0].mxu0
        %v1289 = vadd.f32 %v1226, %v1288
        %v1290 = vpop.f32.mrb[0].mxu0
        %v1291 = vpop.f32.mrb[0].mxu0
        %v1292 = vadd.f32 %v1226, %v1291
        %v1293 = vpop.f32.mrb[0].mxu0
        %1294 = vdwg.mxu0
        %v1295 = vmax.f32 %v1281, 0.0
        %v1296 = vmax.f32 %v1284, 0.0
        %v1297 = vmax.f32 %v1289, 0.0
        %v1298 = vmax.f32 %v1292, 0.0
        %v1299 = vpack.c.bf16 %v1296, %v1295
        %v1300 = vpack.c.bf16 %v1298, %v1297
        %1301 = vmatprep.subr.bf16.mxu0 0
        %1302 = vmatpush1.bf16.msra.mxu0 %v1299
        %1303 = vmatprep.subr.bf16.mxu0 0
        %1304 = vmatpush1.bf16.msra.mxu0 %v1300
        %1305 = vmatprep.subr.bf16.mxu0 0
        %1306 = vmatpush1.bf16.msra.mxu0 0
        %1307 = vmatprep.subr.bf16.mxu0 0
        %1308 = vmatpush1.bf16.msra.mxu0 0
        %1309 = vmatprep.subr.bf16.mxu0 0
        %1310 = vmatpush1.bf16.msra.mxu0 0
        %1311 = vmatprep.subr.bf16.mxu0 0
        %1312 = vmatpush1.bf16.msra.mxu0 0
        %1313 = vmatprep.subr.bf16.mxu0 0
        %1314 = vmatpush1.bf16.msra.mxu0 0
        %1315 = vmatprep.subr.bf16.mxu0 0
        %1316 = vmatpush1.bf16.msra.mxu0 0
        %1317 = vmatprep.subr.bf16.mxu0 0
        %1318 = vmatpush1.bf16.msra.mxu0 0
        %1319 = vmatprep.subr.bf16.mxu0 0
        %1320 = vmatpush1.bf16.msra.mxu0 0
        %1321 = vmatprep.subr.bf16.mxu0 0
        %1322 = vmatpush1.bf16.msra.mxu0 0
        %1323 = vmatprep.subr.bf16.mxu0 0
        %1324 = vmatpush1.bf16.msra.mxu0 0
        %1325 = vmatprep.subr.bf16.mxu0 0
        %1326 = vmatpush1.bf16.msra.mxu0 0
        %1327 = vmatprep.subr.bf16.mxu0 0
        %1328 = vmatpush1.bf16.msra.mxu0 0
        %1329 = vmatprep.subr.bf16.mxu0 0
        %1330 = vmatpush1.bf16.msra.mxu0 0
        %1331 = vmatprep.subr.bf16.mxu0 0
        %1332 = vmatpush1.bf16.msra.mxu0 0
        %1333 = vmatprep.mubr.bf16.mxu0 0
        %1334 = vmatmul.mubr.bf16.gmra.mrb[0].mxu0 %v476
        %v1335 = vpop.f32.mrb[0].mxu0
        %v1336 = vadd.f32 0.0, %v1335
        %v1337 = vpop.f32.mrb[0].mxu0
        %v1338 = vpop.f32.mrb[0].mxu0
        %v1339 = vadd.f32 0.0, %v1338
        %v1340 = vpop.f32.mrb[0].mxu0
        %1341 = vmatprep.mubr.bf16.mxu0 0
        %1342 = vmatmul.mubr.bf16.gmra.mrb[0].mxu0 %v479
        %v1343 = vpop.f32.mrb[0].mxu0
        %v1344 = vadd.f32 0.0, %v1343
        %v1345 = vpop.f32.mrb[0].mxu0
        %v1346 = vpop.f32.mrb[0].mxu0
        %v1347 = vadd.f32 0.0, %v1346
        %v1348 = vpop.f32.mrb[0].mxu0
        %1349 = vdwg.mxu0
        %v1350 = vpack.c.bf16 %v1339, %v1336
        %v1351 = vpack.c.bf16 %v1347, %v1344
        %s1352 = scalar_lea.vmem %s2, 96
        %v1353 = vld [vmem:[%s1352] sm:$0xf]
        %v1354 = vld [vmem:[%s1352 + $0x4] sm:$0xf]
        %v1355 = vld [vmem:[%s1352 + $0x8] sm:$0xf]
        %v1356 = vld [vmem:[%s1352 + $0xc] sm:$0xf]
        %s1357 = scalar_lea.vmem %s3, 6
        %v1358 = vld [vmem:[%s1357] sm:$0x1]
        %v1360 = vlaneseq
        %v1361 = vshrl.u32 %v1360, 7
        %v1362 = vsub.s32 0, %v1361
        %v1363 = vrot.slane %v1358, %v1362
        %v1369 = vunpack.c.l.b16 %v1353
        %v1370 = vunpack.c.l.b16 %v1354
        %v1371 = vunpack.c.l.b16 %v1355
        %v1372 = vunpack.c.l.b16 %v1356
        %v1373 = vpack.c.b16 %v1370, %v1369
        %v1374 = vpack.c.b16 %v1372, %v1371
        %v1378 = vsel %vm474, %v1350, 0
        %v1381 = vsel %vm474, %v1351, 0
        %1383 = vmatprep.subr.bf16.mxu0 0
        %1384 = vmatpush1.bf16.msra.mxu0 %v1373
        %1385 = vmatprep.subr.bf16.mxu0 0
        %1386 = vmatpush1.bf16.msra.mxu0 %v1374
        %1387 = vmatprep.subr.bf16.mxu0 0
        %1388 = vmatpush1.bf16.msra.mxu0 0
        %1389 = vmatprep.subr.bf16.mxu0 0
        %1390 = vmatpush1.bf16.msra.mxu0 0
        %1391 = vmatprep.subr.bf16.mxu0 0
        %1392 = vmatpush1.bf16.msra.mxu0 0
        %1393 = vmatprep.subr.bf16.mxu0 0
        %1394 = vmatpush1.bf16.msra.mxu0 0
        %1395 = vmatprep.subr.bf16.mxu0 0
        %1396 = vmatpush1.bf16.msra.mxu0 0
        %1397 = vmatprep.subr.bf16.mxu0 0
        %1398 = vmatpush1.bf16.msra.mxu0 0
        %1399 = vmatprep.subr.bf16.mxu0 0
        %1400 = vmatpush1.bf16.msra.mxu0 0
        %1401 = vmatprep.subr.bf16.mxu0 0
        %1402 = vmatpush1.bf16.msra.mxu0 0
        %1403 = vmatprep.subr.bf16.mxu0 0
        %1404 = vmatpush1.bf16.msra.mxu0 0
        %1405 = vmatprep.subr.bf16.mxu0 0
        %1406 = vmatpush1.bf16.msra.mxu0 0
        %1407 = vmatprep.subr.bf16.mxu0 0
        %1408 = vmatpush1.bf16.msra.mxu0 0
        %1409 = vmatprep.subr.bf16.mxu0 0
        %1410 = vmatpush1.bf16.msra.mxu0 0
        %1411 = vmatprep.subr.bf16.mxu0 0
        %1412 = vmatpush1.bf16.msra.mxu0 0
        %1413 = vmatprep.subr.bf16.mxu0 0
        %1414 = vmatpush1.bf16.msra.mxu0 0
        %1415 = vmatprep.mubr.bf16.mxu0 0
        %1416 = vmatmul.mubr.bf16.gmra.mrb[0].mxu0 %v1378
        %v1417 = vpop.f32.mrb[0].mxu0
        %v1418 = vadd.f32 %v1363, %v1417
        %v1419 = vpop.f32.mrb[0].mxu0
        %v1420 = vpop.f32.mrb[0].mxu0
        %v1421 = vadd.f32 %v1363, %v1420
        %v1422 = vpop.f32.mrb[0].mxu0
        %1423 = vmatprep.mubr.bf16.mxu0 0
        %1424 = vmatmul.mubr.bf16.gmra.mrb[0].mxu0 %v1381
        %v1425 = vpop.f32.mrb[0].mxu0
        %v1426 = vadd.f32 %v1363, %v1425
        %v1427 = vpop.f32.mrb[0].mxu0
        %v1428 = vpop.f32.mrb[0].mxu0
        %v1429 = vadd.f32 %v1363, %v1428
        %v1430 = vpop.f32.mrb[0].mxu0
        %1431 = vdwg.mxu0
        %v1432 = vmax.f32 %v1418, 0.0
        %v1433 = vmax.f32 %v1421, 0.0
        %v1434 = vmax.f32 %v1426, 0.0
        %v1435 = vmax.f32 %v1429, 0.0
        %v1436 = vpack.c.bf16 %v1433, %v1432
        %v1437 = vpack.c.bf16 %v1435, %v1434
        %1438 = vmatprep.subr.bf16.mxu0 0
        %1439 = vmatpush1.bf16.msra.mxu0 %v1436
        %1440 = vmatprep.subr.bf16.mxu0 0
        %1441 = vmatpush1.bf16.msra.mxu0 %v1437
        %1442 = vmatprep.subr.bf16.mxu0 0
        %1443 = vmatpush1.bf16.msra.mxu0 0
        %1444 = vmatprep.subr.bf16.mxu0 0
        %1445 = vmatpush1.bf16.msra.mxu0 0
        %1446 = vmatprep.subr.bf16.mxu0 0
        %1447 = vmatpush1.bf16.msra.mxu0 0
        %1448 = vmatprep.subr.bf16.mxu0 0
        %1449 = vmatpush1.bf16.msra.mxu0 0
        %1450 = vmatprep.subr.bf16.mxu0 0
        %1451 = vmatpush1.bf16.msra.mxu0 0
        %1452 = vmatprep.subr.bf16.mxu0 0
        %1453 = vmatpush1.bf16.msra.mxu0 0
        %1454 = vmatprep.subr.bf16.mxu0 0
        %1455 = vmatpush1.bf16.msra.mxu0 0
        %1456 = vmatprep.subr.bf16.mxu0 0
        %1457 = vmatpush1.bf16.msra.mxu0 0
        %1458 = vmatprep.subr.bf16.mxu0 0
        %1459 = vmatpush1.bf16.msra.mxu0 0
        %1460 = vmatprep.subr.bf16.mxu0 0
        %1461 = vmatpush1.bf16.msra.mxu0 0
        %1462 = vmatprep.subr.bf16.mxu0 0
        %1463 = vmatpush1.bf16.msra.mxu0 0
        %1464 = vmatprep.subr.bf16.mxu0 0
        %1465 = vmatpush1.bf16.msra.mxu0 0
        %1466 = vmatprep.subr.bf16.mxu0 0
        %1467 = vmatpush1.bf16.msra.mxu0 0
        %1468 = vmatprep.subr.bf16.mxu0 0
        %1469 = vmatpush1.bf16.msra.mxu0 0
        %1470 = vmatprep.mubr.bf16.mxu0 0
        %1471 = vmatmul.mubr.bf16.gmra.mrb[0].mxu0 %v476
        %v1472 = vpop.f32.mrb[0].mxu0
        %v1473 = vadd.f32 0.0, %v1472
        %v1474 = vpop.f32.mrb[0].mxu0
        %v1475 = vpop.f32.mrb[0].mxu0
        %v1476 = vadd.f32 0.0, %v1475
        %v1477 = vpop.f32.mrb[0].mxu0
        %1478 = vmatprep.mubr.bf16.mxu0 0
        %1479 = vmatmul.mubr.bf16.gmra.mrb[0].mxu0 %v479
        %v1480 = vpop.f32.mrb[0].mxu0
        %v1481 = vadd.f32 0.0, %v1480
        %v1482 = vpop.f32.mrb[0].mxu0
        %v1483 = vpop.f32.mrb[0].mxu0
        %v1484 = vadd.f32 0.0, %v1483
        %v1485 = vpop.f32.mrb[0].mxu0
        %1486 = vdwg.mxu0
        %v1487 = vpack.c.bf16 %v1476, %v1473
        %v1488 = vpack.c.bf16 %v1484, %v1481
        %s1489 = scalar_lea.vmem %s2, 112
        %v1490 = vld [vmem:[%s1489] sm:$0xf]
        %v1491 = vld [vmem:[%s1489 + $0x4] sm:$0xf]
        %v1492 = vld [vmem:[%s1489 + $0x8] sm:$0xf]
        %v1493 = vld [vmem:[%s1489 + $0xc] sm:$0xf]
        %s1494 = scalar_lea.vmem %s3, 7
        %v1495 = vld [vmem:[%s1494] sm:$0x1]
        %v1497 = vlaneseq
        %v1498 = vshrl.u32 %v1497, 7
        %v1499 = vsub.s32 0, %v1498
        %v1500 = vrot.slane %v1495, %v1499
        %v1506 = vunpack.c.l.b16 %v1490
        %v1507 = vunpack.c.l.b16 %v1491
        %v1508 = vunpack.c.l.b16 %v1492
        %v1509 = vunpack.c.l.b16 %v1493
        %v1510 = vpack.c.b16 %v1507, %v1506
        %v1511 = vpack.c.b16 %v1509, %v1508
        %v1515 = vsel %vm474, %v1487, 0
        %v1518 = vsel %vm474, %v1488, 0
        %1520 = vmatprep.subr.bf16.mxu0 0
        %1521 = vmatpush1.bf16.msra.mxu0 %v1510
        %1522 = vmatprep.subr.bf16.mxu0 0
        %1523 = vmatpush1.bf16.msra.mxu0 %v1511
        %1524 = vmatprep.subr.bf16.mxu0 0
        %1525 = vmatpush1.bf16.msra.mxu0 0
        %1526 = vmatprep.subr.bf16.mxu0 0
        %1527 = vmatpush1.bf16.msra.mxu0 0
        %1528 = vmatprep.subr.bf16.mxu0 0
        %1529 = vmatpush1.bf16.msra.mxu0 0
        %1530 = vmatprep.subr.bf16.mxu0 0
        %1531 = vmatpush1.bf16.msra.mxu0 0
        %1532 = vmatprep.subr.bf16.mxu0 0
        %1533 = vmatpush1.bf16.msra.mxu0 0
        %1534 = vmatprep.subr.bf16.mxu0 0
        %1535 = vmatpush1.bf16.msra.mxu0 0
        %1536 = vmatprep.subr.bf16.mxu0 0
        %1537 = vmatpush1.bf16.msra.mxu0 0
        %1538 = vmatprep.subr.bf16.mxu0 0
        %1539 = vmatpush1.bf16.msra.mxu0 0
        %1540 = vmatprep.subr.bf16.mxu0 0
        %1541 = vmatpush1.bf16.msra.mxu0 0
        %1542 = vmatprep.subr.bf16.mxu0 0
        %1543 = vmatpush1.bf16.msra.mxu0 0
        %1544 = vmatprep.subr.bf16.mxu0 0
        %1545 = vmatpush1.bf16.msra.mxu0 0
        %1546 = vmatprep.subr.bf16.mxu0 0
        %1547 = vmatpush1.bf16.msra.mxu0 0
        %1548 = vmatprep.subr.bf16.mxu0 0
        %1549 = vmatpush1.bf16.msra.mxu0 0
        %1550 = vmatprep.subr.bf16.mxu0 0
        %1551 = vmatpush1.bf16.msra.mxu0 0
        %1552 = vmatprep.mubr.bf16.mxu0 0
        %1553 = vmatmul.mubr.bf16.gmra.mrb[0].mxu0 %v1515
        %v1554 = vpop.f32.mrb[0].mxu0
        %v1555 = vadd.f32 %v1500, %v1554
        %v1556 = vpop.f32.mrb[0].mxu0
        %v1557 = vpop.f32.mrb[0].mxu0
        %v1558 = vadd.f32 %v1500, %v1557
        %v1559 = vpop.f32.mrb[0].mxu0
        %1560 = vmatprep.mubr.bf16.mxu0 0
        %1561 = vmatmul.mubr.bf16.gmra.mrb[0].mxu0 %v1518
        %v1562 = vpop.f32.mrb[0].mxu0
        %v1563 = vadd.f32 %v1500, %v1562
        %v1564 = vpop.f32.mrb[0].mxu0
        %v1565 = vpop.f32.mrb[0].mxu0
        %v1566 = vadd.f32 %v1500, %v1565
        %v1567 = vpop.f32.mrb[0].mxu0
        %1568 = vdwg.mxu0
        %v1569 = vmax.f32 %v1555, 0.0
        %v1570 = vmax.f32 %v1558, 0.0
        %v1571 = vmax.f32 %v1563, 0.0
        %v1572 = vmax.f32 %v1566, 0.0
        %v1573 = vpack.c.bf16 %v1570, %v1569
        %v1574 = vpack.c.bf16 %v1572, %v1571
        %1575 = vmatprep.subr.bf16.mxu0 0
        %1576 = vmatpush1.bf16.msra.mxu0 %v1573
        %1577 = vmatprep.subr.bf16.mxu0 0
        %1578 = vmatpush1.bf16.msra.mxu0 %v1574
        %1579 = vmatprep.subr.bf16.mxu0 0
        %1580 = vmatpush1.bf16.msra.mxu0 0
        %1581 = vmatprep.subr.bf16.mxu0 0
        %1582 = vmatpush1.bf16.msra.mxu0 0
        %1583 = vmatprep.subr.bf16.mxu0 0
        %1584 = vmatpush1.bf16.msra.mxu0 0
        %1585 = vmatprep.subr.bf16.mxu0 0
        %1586 = vmatpush1.bf16.msra.mxu0 0
        %1587 = vmatprep.subr.bf16.mxu0 0
        %1588 = vmatpush1.bf16.msra.mxu0 0
        %1589 = vmatprep.subr.bf16.mxu0 0
        %1590 = vmatpush1.bf16.msra.mxu0 0
        %1591 = vmatprep.subr.bf16.mxu0 0
        %1592 = vmatpush1.bf16.msra.mxu0 0
        %1593 = vmatprep.subr.bf16.mxu0 0
        %1594 = vmatpush1.bf16.msra.mxu0 0
        %1595 = vmatprep.subr.bf16.mxu0 0
        %1596 = vmatpush1.bf16.msra.mxu0 0
        %1597 = vmatprep.subr.bf16.mxu0 0
        %1598 = vmatpush1.bf16.msra.mxu0 0
        %1599 = vmatprep.subr.bf16.mxu0 0
        %1600 = vmatpush1.bf16.msra.mxu0 0
        %1601 = vmatprep.subr.bf16.mxu0 0
        %1602 = vmatpush1.bf16.msra.mxu0 0
        %1603 = vmatprep.subr.bf16.mxu0 0
        %1604 = vmatpush1.bf16.msra.mxu0 0
        %1605 = vmatprep.subr.bf16.mxu0 0
        %1606 = vmatpush1.bf16.msra.mxu0 0
        %1607 = vmatprep.mubr.bf16.mxu0 0
        %1608 = vmatmul.mubr.bf16.gmra.mrb[0].mxu0 %v476
        %v1609 = vpop.f32.mrb[0].mxu0
        %v1610 = vadd.f32 0.0, %v1609
        %v1611 = vpop.f32.mrb[0].mxu0
        %v1612 = vpop.f32.mrb[0].mxu0
        %v1613 = vadd.f32 0.0, %v1612
        %v1614 = vpop.f32.mrb[0].mxu0
        %1615 = vmatprep.mubr.bf16.mxu0 0
        %1616 = vmatmul.mubr.bf16.gmra.mrb[0].mxu0 %v479
        %v1617 = vpop.f32.mrb[0].mxu0
        %v1618 = vadd.f32 0.0, %v1617
        %v1619 = vpop.f32.mrb[0].mxu0
        %v1620 = vpop.f32.mrb[0].mxu0
        %v1621 = vadd.f32 0.0, %v1620
        %v1622 = vpop.f32.mrb[0].mxu0
        %1623 = vdwg.mxu0
        %v1624 = vpack.c.bf16 %v1613, %v1610
        %v1625 = vpack.c.bf16 %v1621, %v1618
        %s1626 = scalar_lea.vmem %s2, 128
        %v1627 = vld [vmem:[%s1626] sm:$0xf]
        %v1628 = vld [vmem:[%s1626 + $0x4] sm:$0xf]
        %v1629 = vld [vmem:[%s1626 + $0x8] sm:$0xf]
        %v1630 = vld [vmem:[%s1626 + $0xc] sm:$0xf]
        %s1631 = scalar_lea.vmem %s3, 8
        %v1632 = vld [vmem:[%s1631] sm:$0x1]
        %v1634 = vlaneseq
        %v1635 = vshrl.u32 %v1634, 7
        %v1636 = vsub.s32 0, %v1635
        %v1637 = vrot.slane %v1632, %v1636
        %v1643 = vunpack.c.l.b16 %v1627
        %v1644 = vunpack.c.l.b16 %v1628
        %v1645 = vunpack.c.l.b16 %v1629
        %v1646 = vunpack.c.l.b16 %v1630
        %v1647 = vpack.c.b16 %v1644, %v1643
        %v1648 = vpack.c.b16 %v1646, %v1645
        %v1652 = vsel %vm474, %v1624, 0
        %v1655 = vsel %vm474, %v1625, 0
        %1657 = vmatprep.subr.bf16.mxu0 0
        %1658 = vmatpush1.bf16.msra.mxu0 %v1647
        %1659 = vmatprep.subr.bf16.mxu0 0
        %1660 = vmatpush1.bf16.msra.mxu0 %v1648
        %1661 = vmatprep.subr.bf16.mxu0 0
        %1662 = vmatpush1.bf16.msra.mxu0 0
        %1663 = vmatprep.subr.bf16.mxu0 0
        %1664 = vmatpush1.bf16.msra.mxu0 0
        %1665 = vmatprep.subr.bf16.mxu0 0
        %1666 = vmatpush1.bf16.msra.mxu0 0
        %1667 = vmatprep.subr.bf16.mxu0 0
        %1668 = vmatpush1.bf16.msra.mxu0 0
        %1669 = vmatprep.subr.bf16.mxu0 0
        %1670 = vmatpush1.bf16.msra.mxu0 0
        %1671 = vmatprep.subr.bf16.mxu0 0
        %1672 = vmatpush1.bf16.msra.mxu0 0
        %1673 = vmatprep.subr.bf16.mxu0 0
        %1674 = vmatpush1.bf16.msra.mxu0 0
        %1675 = vmatprep.subr.bf16.mxu0 0
        %1676 = vmatpush1.bf16.msra.mxu0 0
        %1677 = vmatprep.subr.bf16.mxu0 0
        %1678 = vmatpush1.bf16.msra.mxu0 0
        %1679 = vmatprep.subr.bf16.mxu0 0
        %1680 = vmatpush1.bf16.msra.mxu0 0
        %1681 = vmatprep.subr.bf16.mxu0 0
        %1682 = vmatpush1.bf16.msra.mxu0 0
        %1683 = vmatprep.subr.bf16.mxu0 0
        %1684 = vmatpush1.bf16.msra.mxu0 0
        %1685 = vmatprep.subr.bf16.mxu0 0
        %1686 = vmatpush1.bf16.msra.mxu0 0
        %1687 = vmatprep.subr.bf16.mxu0 0
        %1688 = vmatpush1.bf16.msra.mxu0 0
        %1689 = vmatprep.mubr.bf16.mxu0 0
        %1690 = vmatmul.mubr.bf16.gmra.mrb[0].mxu0 %v1652
        %v1691 = vpop.f32.mrb[0].mxu0
        %v1692 = vadd.f32 %v1637, %v1691
        %v1693 = vpop.f32.mrb[0].mxu0
        %v1694 = vpop.f32.mrb[0].mxu0
        %v1695 = vadd.f32 %v1637, %v1694
        %v1696 = vpop.f32.mrb[0].mxu0
        %1697 = vmatprep.mubr.bf16.mxu0 0
        %1698 = vmatmul.mubr.bf16.gmra.mrb[0].mxu0 %v1655
        %v1699 = vpop.f32.mrb[0].mxu0
        %v1700 = vadd.f32 %v1637, %v1699
        %v1701 = vpop.f32.mrb[0].mxu0
        %v1702 = vpop.f32.mrb[0].mxu0
        %v1703 = vadd.f32 %v1637, %v1702
        %v1704 = vpop.f32.mrb[0].mxu0
        %1705 = vdwg.mxu0
        %v1706 = vmax.f32 %v1692, 0.0
        %v1707 = vmax.f32 %v1695, 0.0
        %v1708 = vmax.f32 %v1700, 0.0
        %v1709 = vmax.f32 %v1703, 0.0
        %v1710 = vpack.c.bf16 %v1707, %v1706
        %v1711 = vpack.c.bf16 %v1709, %v1708
        %1712 = vmatprep.subr.bf16.mxu0 0
        %1713 = vmatpush1.bf16.msra.mxu0 %v1710
        %1714 = vmatprep.subr.bf16.mxu0 0
        %1715 = vmatpush1.bf16.msra.mxu0 %v1711
        %1716 = vmatprep.subr.bf16.mxu0 0
        %1717 = vmatpush1.bf16.msra.mxu0 0
        %1718 = vmatprep.subr.bf16.mxu0 0
        %1719 = vmatpush1.bf16.msra.mxu0 0
        %1720 = vmatprep.subr.bf16.mxu0 0
        %1721 = vmatpush1.bf16.msra.mxu0 0
        %1722 = vmatprep.subr.bf16.mxu0 0
        %1723 = vmatpush1.bf16.msra.mxu0 0
        %1724 = vmatprep.subr.bf16.mxu0 0
        %1725 = vmatpush1.bf16.msra.mxu0 0
        %1726 = vmatprep.subr.bf16.mxu0 0
        %1727 = vmatpush1.bf16.msra.mxu0 0
        %1728 = vmatprep.subr.bf16.mxu0 0
        %1729 = vmatpush1.bf16.msra.mxu0 0
        %1730 = vmatprep.subr.bf16.mxu0 0
        %1731 = vmatpush1.bf16.msra.mxu0 0
        %1732 = vmatprep.subr.bf16.mxu0 0
        %1733 = vmatpush1.bf16.msra.mxu0 0
        %1734 = vmatprep.subr.bf16.mxu0 0
        %1735 = vmatpush1.bf16.msra.mxu0 0
        %1736 = vmatprep.subr.bf16.mxu0 0
        %1737 = vmatpush1.bf16.msra.mxu0 0
        %1738 = vmatprep.subr.bf16.mxu0 0
        %1739 = vmatpush1.bf16.msra.mxu0 0
        %1740 = vmatprep.subr.bf16.mxu0 0
        %1741 = vmatpush1.bf16.msra.mxu0 0
        %1742 = vmatprep.subr.bf16.mxu0 0
        %1743 = vmatpush1.bf16.msra.mxu0 0
        %1744 = vmatprep.mubr.bf16.mxu0 0
        %1745 = vmatmul.mubr.bf16.gmra.mrb[0].mxu0 %v476
        %v1746 = vpop.f32.mrb[0].mxu0
        %v1747 = vadd.f32 0.0, %v1746
        %v1748 = vpop.f32.mrb[0].mxu0
        %v1749 = vpop.f32.mrb[0].mxu0
        %v1750 = vadd.f32 0.0, %v1749
        %v1751 = vpop.f32.mrb[0].mxu0
        %1752 = vmatprep.mubr.bf16.mxu0 0
        %1753 = vmatmul.mubr.bf16.gmra.mrb[0].mxu0 %v479
        %v1754 = vpop.f32.mrb[0].mxu0
        %v1755 = vadd.f32 0.0, %v1754
        %v1756 = vpop.f32.mrb[0].mxu0
        %v1757 = vpop.f32.mrb[0].mxu0
        %v1758 = vadd.f32 0.0, %v1757
        %v1759 = vpop.f32.mrb[0].mxu0
        %1760 = vdwg.mxu0
        %v1761 = vpack.c.bf16 %v1750, %v1747
        %v1762 = vpack.c.bf16 %v1758, %v1755
        %s1763 = scalar_lea.vmem %s2, 144
        %v1764 = vld [vmem:[%s1763] sm:$0xf]
        %v1765 = vld [vmem:[%s1763 + $0x4] sm:$0xf]
        %v1766 = vld [vmem:[%s1763 + $0x8] sm:$0xf]
        %v1767 = vld [vmem:[%s1763 + $0xc] sm:$0xf]
        %s1768 = scalar_lea.vmem %s3, 9
        %v1769 = vld [vmem:[%s1768] sm:$0x1]
        %v1771 = vlaneseq
        %v1772 = vshrl.u32 %v1771, 7
        %v1773 = vsub.s32 0, %v1772
        %v1774 = vrot.slane %v1769, %v1773
        %v1780 = vunpack.c.l.b16 %v1764
        %v1781 = vunpack.c.l.b16 %v1765
        %v1782 = vunpack.c.l.b16 %v1766
        %v1783 = vunpack.c.l.b16 %v1767
        %v1784 = vpack.c.b16 %v1781, %v1780
        %v1785 = vpack.c.b16 %v1783, %v1782
        %v1789 = vsel %vm474, %v1761, 0
        %v1792 = vsel %vm474, %v1762, 0
        %1794 = vmatprep.subr.bf16.mxu0 0
        %1795 = vmatpush1.bf16.msra.mxu0 %v1784
        %1796 = vmatprep.subr.bf16.mxu0 0
        %1797 = vmatpush1.bf16.msra.mxu0 %v1785
        %1798 = vmatprep.subr.bf16.mxu0 0
        %1799 = vmatpush1.bf16.msra.mxu0 0
        %1800 = vmatprep.subr.bf16.mxu0 0
        %1801 = vmatpush1.bf16.msra.mxu0 0
        %1802 = vmatprep.subr.bf16.mxu0 0
        %1803 = vmatpush1.bf16.msra.mxu0 0
        %1804 = vmatprep.subr.bf16.mxu0 0
        %1805 = vmatpush1.bf16.msra.mxu0 0
        %1806 = vmatprep.subr.bf16.mxu0 0
        %1807 = vmatpush1.bf16.msra.mxu0 0
        %1808 = vmatprep.subr.bf16.mxu0 0
        %1809 = vmatpush1.bf16.msra.mxu0 0
        %1810 = vmatprep.subr.bf16.mxu0 0
        %1811 = vmatpush1.bf16.msra.mxu0 0
        %1812 = vmatprep.subr.bf16.mxu0 0
        %1813 = vmatpush1.bf16.msra.mxu0 0
        %1814 = vmatprep.subr.bf16.mxu0 0
        %1815 = vmatpush1.bf16.msra.mxu0 0
        %1816 = vmatprep.subr.bf16.mxu0 0
        %1817 = vmatpush1.bf16.msra.mxu0 0
        %1818 = vmatprep.subr.bf16.mxu0 0
        %1819 = vmatpush1.bf16.msra.mxu0 0
        %1820 = vmatprep.subr.bf16.mxu0 0
        %1821 = vmatpush1.bf16.msra.mxu0 0
        %1822 = vmatprep.subr.bf16.mxu0 0
        %1823 = vmatpush1.bf16.msra.mxu0 0
        %1824 = vmatprep.subr.bf16.mxu0 0
        %1825 = vmatpush1.bf16.msra.mxu0 0
        %1826 = vmatprep.mubr.bf16.mxu0 0
        %1827 = vmatmul.mubr.bf16.gmra.mrb[0].mxu0 %v1789
        %v1828 = vpop.f32.mrb[0].mxu0
        %v1829 = vadd.f32 %v1774, %v1828
        %v1830 = vpop.f32.mrb[0].mxu0
        %v1831 = vpop.f32.mrb[0].mxu0
        %v1832 = vadd.f32 %v1774, %v1831
        %v1833 = vpop.f32.mrb[0].mxu0
        %1834 = vmatprep.mubr.bf16.mxu0 0
        %1835 = vmatmul.mubr.bf16.gmra.mrb[0].mxu0 %v1792
        %v1836 = vpop.f32.mrb[0].mxu0
        %v1837 = vadd.f32 %v1774, %v1836
        %v1838 = vpop.f32.mrb[0].mxu0
        %v1839 = vpop.f32.mrb[0].mxu0
        %v1840 = vadd.f32 %v1774, %v1839
        %v1841 = vpop.f32.mrb[0].mxu0
        %1842 = vdwg.mxu0
        %v1843 = vmax.f32 %v1829, 0.0
        %v1844 = vmax.f32 %v1832, 0.0
        %v1845 = vmax.f32 %v1837, 0.0
        %v1846 = vmax.f32 %v1840, 0.0
        %v1847 = vld [vmem:[%s445] sm:$0xff]
        %v1848 = vld [vmem:[%s445 + $0x8] sm:$0xff]
        %v1849 = vld [vmem:[%s445 + $0x10] sm:$0xff]
        %v1850 = vld [vmem:[%s445 + $0x18] sm:$0xff]
        %v1851 = vld [vmem:[%s448] sm:$0x1]
        %v1853 = vsel %vm474, %v1843, 0
        %v1856 = vsel %vm474, %v1844, 0
        %v1859 = vsel %vm474, %v1845, 0
        %v1862 = vsel %vm474, %v1846, 0
        %1864 = vmatprep.subr.mxu0 0.0
        %1865 = vmatpush1.xpose.msra.mxu0 %v1859
        %1866 = vmatprep.subr.mxu0 0.0
        %1867 = vmatpush1.xpose.msra.mxu0 %v1862
        %1868 = vmatprep.subr.mxu0 0.0
        %1869 = vmatpush1.xpose.msra.mxu0 0.0
        %1870 = vmatprep.subr.mxu0 0.0
        %1871 = vmatpush1.xpose.msra.mxu0 0.0
        %1872 = vmatprep.subr.mxu0 0.0
        %1873 = vmatpush1.xpose.msra.mxu0 0.0
        %1874 = vmatprep.subr.mxu0 0.0
        %1875 = vmatpush1.xpose.msra.mxu0 0.0
        %1876 = vmatprep.subr.mxu0 0.0
        %1877 = vmatpush1.xpose.msra.mxu0 0.0
        %1878 = vmatprep.subr.mxu0 0.0
        %1879 = vmatpush1.xpose.msra.mxu0 0.0
        %1880 = vmatprep.subr.mxu0 0.0
        %1881 = vmatpush1.xpose.msra.mxu0 0.0
        %1882 = vmatprep.subr.mxu0 0.0
        %1883 = vmatpush1.xpose.msra.mxu0 0.0
        %1884 = vmatprep.subr.mxu0 0.0
        %1885 = vmatpush1.xpose.msra.mxu0 0.0
        %1886 = vmatprep.subr.mxu0 0.0
        %1887 = vmatpush1.xpose.msra.mxu0 0.0
        %1888 = vmatprep.subr.mxu0 0.0
        %1889 = vmatpush1.xpose.msra.mxu0 0.0
        %1890 = vmatprep.subr.mxu0 0.0
        %1891 = vmatpush1.xpose.msra.mxu0 0.0
        %1892 = vmatprep.subr.mxu0 0.0
        %1893 = vmatpush1.xpose.msra.mxu0 0.0
        %1894 = vmatprep.subr.mxu0 0.0
        %1895 = vmatpush1.xpose.msra.mxu0 0.0
        %1896 = vmatprep.subr.mxu0 0.0
        %1897 = vmatpush1.xpose.msra.mxu0 0.0
        %1898 = vmatprep.subr.mxu0 0.0
        %1899 = vmatpush1.xpose.msra.mxu0 0.0
        %1900 = vmatprep.subr.mxu0 0.0
        %1901 = vmatpush1.xpose.msra.mxu0 0.0
        %1902 = vmatprep.subr.mxu0 0.0
        %1903 = vmatpush1.xpose.msra.mxu0 0.0
        %1904 = vmatprep.subr.mxu0 0.0
        %1905 = vmatpush1.xpose.msra.mxu0 0.0
        %1906 = vmatprep.subr.mxu0 0.0
        %1907 = vmatpush1.xpose.msra.mxu0 0.0
        %1908 = vmatprep.subr.mxu0 0.0
        %1909 = vmatpush1.xpose.msra.mxu0 0.0
        %1910 = vmatprep.subr.mxu0 0.0
        %1911 = vmatpush1.xpose.msra.mxu0 0.0
        %1912 = vmatprep.subr.mxu0 0.0
        %1913 = vmatpush1.xpose.msra.mxu0 0.0
        %1914 = vmatprep.subr.mxu0 0.0
        %1915 = vmatpush1.xpose.msra.mxu0 0.0
        %1916 = vmatprep.subr.mxu0 0.0
        %1917 = vmatpush1.xpose.msra.mxu0 0.0
        %1918 = vmatprep.subr.mxu0 0.0
        %1919 = vmatpush1.xpose.msra.mxu0 0.0
        %1920 = vmatprep.subr.mxu0 0.0
        %1921 = vmatpush1.xpose.msra.mxu0 0.0
        %1922 = vmatprep.subr.mxu0 0.0
        %1923 = vmatpush1.xpose.msra.mxu0 0.0
        %1924 = vmatprep.subr.mxu0 0.0
        %1925 = vmatpush1.xpose.msra.mxu0 0.0
        %1926 = vmatprep.subr.mxu0 0.0
        %1927 = vmatpush1.xpose.msra.mxu0 0.0
        %1928 = vmatprep.mubr.f32.mxu0 0.0
        %1929 = vmatmul.mubr.f32.gmra.mrb[0].mxu0 %v1853
        %v1930 = vpop.f32.mrb[0].mxu0
        %v1931 = vadd.f32 0.0, %v1930
        %v1932 = vpop.f32.mrb[0].mxu0
        %1933 = vmatprep.mubr.f32.mxu0 0.0
        %1934 = vmatmul.mubr.f32.gmra.mrb[0].mxu0 %v1856
        %v1935 = vpop.f32.mrb[0].mxu0
        %v1936 = vadd.f32 0.0, %v1935
        %v1937 = vpop.f32.mrb[0].mxu0
        %1938 = vdwg.mxu0
        %1940 = vset.pattern.permute.xlu0 0
        %1941 = vperm.xlu0 %1940, %v1847
        %v1942 = vpop.permute.xlu0 %1941
        %1945 = vset.pattern.permute.xlu0 0
        %1946 = vperm.xlu0 %1945, %v1848
        %v1947 = vpop.permute.xlu0 %1946
        %v1950 = vlaneseq
        %v1951 = vshrl.u32 %v1950, 7
        %v1952 = vsub.s32 0, %v1951
        %v1953 = vrot.slane %v1851, %v1952
        %v1955 = vmul.f32 %v1942, %v1953
        %v1956 = vmul.f32 %v1947, %v1953
        %vm1957 = vcmp.gt.f32.partialorder %v1955, 0.0
        %vm1958 = vcmp.gt.f32.partialorder %v1956, 0.0
        %v1959 = vmul.f32 %v1931, 200.0
        %v1960 = vmul.f32 %v1936, 200.0
        %v1961 = vsel %vm1957, %v1959, -1e+30
        %v1962 = vsel %vm1958, %v1960, -1e+30
        %vm1963 = vcmask 130048
        %v1964 = vsel %vm1963, %v1961, -inf
        %1965 = vmax.xlane.f32.xlu0 %v1964
        %v1966 = vpop.xlane.xlu0 %1965
        %v1967 = vsel %vm1963, %v1962, -inf
        %1968 = vmax.xlane.f32.xlu0 %v1967
        %v1969 = vpop.xlane.xlu0 %1968
        %v1970 = vsub.f32 %v1961, %v1966
        %v1971 = vsub.f32 %v1962, %v1969
        %v1972 = vmul.f32 %v1970, 1.442695
        %v1973 = vpow.pop %v1972
        %v1974 = vmul.f32 %v1971, 1.442695
        %v1975 = vpow.pop %v1974
        %v1976 = vsel %vm1963, %v1973, 0.0
        %1977 = vadd.xlane.f32.xlu0 %v1976
        %v1978 = vpop.xlane.xlu0 %1977
        %v1979 = vsel %vm1963, %v1975, 0.0
        %1980 = vadd.xlane.f32.xlu0 %v1979
        %v1981 = vpop.xlane.xlu0 %1980
        %v1982 = vlog2.pop %v1978
        %v1983 = vmul.f32 %v1982, 0.6931472
        %v1984 = vlog2.pop %v1981
        %v1985 = vmul.f32 %v1984, 0.6931472
        %v1986 = vadd.f32 %v1966, %v1983
        %v1987 = vadd.f32 %v1969, %v1985
        %v1988 = vsub.f32 %v1961, %v1986
        %v1989 = vsub.f32 %v1962, %v1987
        %v1990 = vsel %vm1963, %v1988, -inf
        %v1991 = vsel %vm1963, %v1989, -inf
        %v1992 = vmax.f32 %v1990, %v1991
        %v1993 = vrot.slane %v1992, 4
        %v1994 = vmax.f32 %v1992, %v1993
        %v1995 = vrot.slane %v1994, 2
        %v1996 = vmax.f32 %v1994, %v1995
        %v1997 = vrot.slane %v1996, 1
        %v1998 = vmax.f32 %v1996, %v1997
        %v1999 = vsub.f32 %v1988, %v1998
        %v2000 = vsub.f32 %v1989, %v1998
        %v2001 = vmul.f32 %v1999, 1.442695
        %v2002 = vpow.pop %v2001
        %v2003 = vmul.f32 %v2000, 1.442695
        %v2004 = vpow.pop %v2003
        %v2005 = vsel %vm1963, %v2002, 0.0
        %v2006 = vsel %vm1963, %v2004, 0.0
        %v2007 = vadd.f32 %v2005, %v2006
        %v2008 = vrot.slane %v2007, 4
        %v2009 = vadd.f32 %v2007, %v2008
        %v2010 = vrot.slane %v2009, 2
        %v2011 = vadd.f32 %v2009, %v2010
        %v2012 = vrot.slane %v2011, 1
        %v2013 = vadd.f32 %v2011, %v2012
        %v2014 = vlog2.pop %v2013
        %v2015 = vmul.f32 %v2014, 0.6931472
        %v2016 = vadd.f32 %v1998, %v2015
        %v2017 = vsub.f32 %v1988, %v2016
        %v2018 = vsub.f32 %v1989, %v2016
        %v2019 = vsel %vm1963, %v2017, -inf
        %2020 = vmax.xlane.f32.xlu0 %v2019
        %v2021 = vpop.xlane.xlu0 %2020
        %v2022 = vsel %vm1963, %v2018, -inf
        %2023 = vmax.xlane.f32.xlu0 %v2022
        %v2024 = vpop.xlane.xlu0 %2023
        %v2025 = vsub.f32 %v2017, %v2021
        %v2026 = vsub.f32 %v2018, %v2024
        %v2027 = vmul.f32 %v2025, 1.442695
        %v2028 = vpow.pop %v2027
        %v2029 = vmul.f32 %v2026, 1.442695
        %v2030 = vpow.pop %v2029
        %v2031 = vsel %vm1963, %v2028, 0.0
        %2032 = vadd.xlane.f32.xlu0 %v2031
        %v2033 = vpop.xlane.xlu0 %2032
        %v2034 = vsel %vm1963, %v2030, 0.0
        %2035 = vadd.xlane.f32.xlu0 %v2034
        %v2036 = vpop.xlane.xlu0 %2035
        %v2037 = vlog2.pop %v2033
        %v2038 = vmul.f32 %v2037, 0.6931472
        %v2039 = vlog2.pop %v2036
        %v2040 = vmul.f32 %v2039, 0.6931472
        %v2041 = vadd.f32 %v2021, %v2038
        %v2042 = vadd.f32 %v2024, %v2040
        %v2043 = vsub.f32 %v2017, %v2041
        %v2044 = vsub.f32 %v2018, %v2042
        %v2045 = vsel %vm1963, %v2043, -inf
        %v2046 = vsel %vm1963, %v2044, -inf
        %v2047 = vmax.f32 %v2045, %v2046
        %v2048 = vrot.slane %v2047, 4
        %v2049 = vmax.f32 %v2047, %v2048
        %v2050 = vrot.slane %v2049, 2
        %v2051 = vmax.f32 %v2049, %v2050
        %v2052 = vrot.slane %v2051, 1
        %v2053 = vmax.f32 %v2051, %v2052
        %v2054 = vsub.f32 %v2043, %v2053
        %v2055 = vsub.f32 %v2044, %v2053
        %v2056 = vmul.f32 %v2054, 1.442695
        %v2057 = vpow.pop %v2056
        %v2058 = vmul.f32 %v2055, 1.442695
        %v2059 = vpow.pop %v2058
        %v2060 = vsel %vm1963, %v2057, 0.0
        %v2061 = vsel %vm1963, %v2059, 0.0
        %v2062 = vadd.f32 %v2060, %v2061
        %v2063 = vrot.slane %v2062, 4
        %v2064 = vadd.f32 %v2062, %v2063
        %v2065 = vrot.slane %v2064, 2
        %v2066 = vadd.f32 %v2064, %v2065
        %v2067 = vrot.slane %v2066, 1
        %v2068 = vadd.f32 %v2066, %v2067
        %v2069 = vlog2.pop %v2068
        %v2070 = vmul.f32 %v2069, 0.6931472
        %v2071 = vadd.f32 %v2053, %v2070
        %v2072 = vsub.f32 %v2043, %v2071
        %v2073 = vsub.f32 %v2044, %v2071
        %v2074 = vsel %vm1963, %v2072, -inf
        %2075 = vmax.xlane.f32.xlu0 %v2074
        %v2076 = vpop.xlane.xlu0 %2075
        %v2077 = vsel %vm1963, %v2073, -inf
        %2078 = vmax.xlane.f32.xlu0 %v2077
        %v2079 = vpop.xlane.xlu0 %2078
        %v2080 = vsub.f32 %v2072, %v2076
        %v2081 = vsub.f32 %v2073, %v2079
        %v2082 = vmul.f32 %v2080, 1.442695
        %v2083 = vpow.pop %v2082
        %v2084 = vmul.f32 %v2081, 1.442695
        %v2085 = vpow.pop %v2084
        %v2086 = vsel %vm1963, %v2083, 0.0
        %2087 = vadd.xlane.f32.xlu0 %v2086
        %v2088 = vpop.xlane.xlu0 %2087
        %v2089 = vsel %vm1963, %v2085, 0.0
        %2090 = vadd.xlane.f32.xlu0 %v2089
        %v2091 = vpop.xlane.xlu0 %2090
        %v2092 = vlog2.pop %v2088
        %v2093 = vmul.f32 %v2092, 0.6931472
        %v2094 = vlog2.pop %v2091
        %v2095 = vmul.f32 %v2094, 0.6931472
        %v2096 = vadd.f32 %v2076, %v2093
        %v2097 = vadd.f32 %v2079, %v2095
        %v2098 = vsub.f32 %v2072, %v2096
        %v2099 = vsub.f32 %v2073, %v2097
        %v2100 = vsel %vm1963, %v2098, -inf
        %v2101 = vsel %vm1963, %v2099, -inf
        %v2102 = vmax.f32 %v2100, %v2101
        %v2103 = vrot.slane %v2102, 4
        %v2104 = vmax.f32 %v2102, %v2103
        %v2105 = vrot.slane %v2104, 2
        %v2106 = vmax.f32 %v2104, %v2105
        %v2107 = vrot.slane %v2106, 1
        %v2108 = vmax.f32 %v2106, %v2107
        %v2109 = vsub.f32 %v2098, %v2108
        %v2110 = vsub.f32 %v2099, %v2108
        %v2111 = vmul.f32 %v2109, 1.442695
        %v2112 = vpow.pop %v2111
        %v2113 = vmul.f32 %v2110, 1.442695
        %v2114 = vpow.pop %v2113
        %v2115 = vsel %vm1963, %v2112, 0.0
        %v2116 = vsel %vm1963, %v2114, 0.0
        %v2117 = vadd.f32 %v2115, %v2116
        %v2118 = vrot.slane %v2117, 4
        %v2119 = vadd.f32 %v2117, %v2118
        %v2120 = vrot.slane %v2119, 2
        %v2121 = vadd.f32 %v2119, %v2120
        %v2122 = vrot.slane %v2121, 1
        %v2123 = vadd.f32 %v2121, %v2122
        %v2124 = vlog2.pop %v2123
        %v2125 = vmul.f32 %v2124, 0.6931472
        %v2126 = vadd.f32 %v2108, %v2125
        %v2127 = vsub.f32 %v2098, %v2126
        %v2128 = vsub.f32 %v2099, %v2126
        %v2129 = vsel %vm1963, %v2127, -inf
        %2130 = vmax.xlane.f32.xlu0 %v2129
        %v2131 = vpop.xlane.xlu0 %2130
        %v2132 = vsel %vm1963, %v2128, -inf
        %2133 = vmax.xlane.f32.xlu0 %v2132
        %v2134 = vpop.xlane.xlu0 %2133
        %v2135 = vsub.f32 %v2127, %v2131
        %v2136 = vsub.f32 %v2128, %v2134
        %v2137 = vmul.f32 %v2135, 1.442695
        %v2138 = vpow.pop %v2137
        %v2139 = vmul.f32 %v2136, 1.442695
        %v2140 = vpow.pop %v2139
        %v2141 = vsel %vm1963, %v2138, 0.0
        %2142 = vadd.xlane.f32.xlu0 %v2141
        %v2143 = vpop.xlane.xlu0 %2142
        %v2144 = vsel %vm1963, %v2140, 0.0
        %2145 = vadd.xlane.f32.xlu0 %v2144
        %v2146 = vpop.xlane.xlu0 %2145
        %v2147 = vlog2.pop %v2143
        %v2148 = vmul.f32 %v2147, 0.6931472
        %v2149 = vlog2.pop %v2146
        %v2150 = vmul.f32 %v2149, 0.6931472
        %v2151 = vadd.f32 %v2131, %v2148
        %v2152 = vadd.f32 %v2134, %v2150
        %v2153 = vsub.f32 %v2127, %v2151
        %v2154 = vsub.f32 %v2128, %v2152
        %v2155 = vsel %vm1963, %v2153, -inf
        %v2156 = vsel %vm1963, %v2154, -inf
        %v2157 = vmax.f32 %v2155, %v2156
        %v2158 = vrot.slane %v2157, 4
        %v2159 = vmax.f32 %v2157, %v2158
        %v2160 = vrot.slane %v2159, 2
        %v2161 = vmax.f32 %v2159, %v2160
        %v2162 = vrot.slane %v2161, 1
        %v2163 = vmax.f32 %v2161, %v2162
        %v2164 = vsub.f32 %v2153, %v2163
        %v2165 = vsub.f32 %v2154, %v2163
        %v2166 = vmul.f32 %v2164, 1.442695
        %v2167 = vpow.pop %v2166
        %v2168 = vmul.f32 %v2165, 1.442695
        %v2169 = vpow.pop %v2168
        %v2170 = vsel %vm1963, %v2167, 0.0
        %v2171 = vsel %vm1963, %v2169, 0.0
        %v2172 = vadd.f32 %v2170, %v2171
        %v2173 = vrot.slane %v2172, 4
        %v2174 = vadd.f32 %v2172, %v2173
        %v2175 = vrot.slane %v2174, 2
        %v2176 = vadd.f32 %v2174, %v2175
        %v2177 = vrot.slane %v2176, 1
        %v2178 = vadd.f32 %v2176, %v2177
        %v2179 = vlog2.pop %v2178
        %v2180 = vmul.f32 %v2179, 0.6931472
        %v2181 = vadd.f32 %v2163, %v2180
        %v2182 = vsub.f32 %v2153, %v2181
        %v2183 = vsub.f32 %v2154, %v2181
        %v2184 = vsel %vm1963, %v2182, -inf
        %2185 = vmax.xlane.f32.xlu0 %v2184
        %v2186 = vpop.xlane.xlu0 %2185
        %v2187 = vsel %vm1963, %v2183, -inf
        %2188 = vmax.xlane.f32.xlu0 %v2187
        %v2189 = vpop.xlane.xlu0 %2188
        %v2190 = vsub.f32 %v2182, %v2186
        %v2191 = vsub.f32 %v2183, %v2189
        %v2192 = vmul.f32 %v2190, 1.442695
        %v2193 = vpow.pop %v2192
        %v2194 = vmul.f32 %v2191, 1.442695
        %v2195 = vpow.pop %v2194
        %v2196 = vsel %vm1963, %v2193, 0.0
        %2197 = vadd.xlane.f32.xlu0 %v2196
        %v2198 = vpop.xlane.xlu0 %2197
        %v2199 = vsel %vm1963, %v2195, 0.0
        %2200 = vadd.xlane.f32.xlu0 %v2199
        %v2201 = vpop.xlane.xlu0 %2200
        %v2202 = vlog2.pop %v2198
        %v2203 = vmul.f32 %v2202, 0.6931472
        %v2204 = vlog2.pop %v2201
        %v2205 = vmul.f32 %v2204, 0.6931472
        %v2206 = vadd.f32 %v2186, %v2203
        %v2207 = vadd.f32 %v2189, %v2205
        %v2208 = vsub.f32 %v2182, %v2206
        %v2209 = vsub.f32 %v2183, %v2207
        %v2210 = vsel %vm1963, %v2208, -inf
        %v2211 = vsel %vm1963, %v2209, -inf
        %v2212 = vmax.f32 %v2210, %v2211
        %v2213 = vrot.slane %v2212, 4
        %v2214 = vmax.f32 %v2212, %v2213
        %v2215 = vrot.slane %v2214, 2
        %v2216 = vmax.f32 %v2214, %v2215
        %v2217 = vrot.slane %v2216, 1
        %v2218 = vmax.f32 %v2216, %v2217
        %v2219 = vsub.f32 %v2208, %v2218
        %v2220 = vsub.f32 %v2209, %v2218
        %v2221 = vmul.f32 %v2219, 1.442695
        %v2222 = vpow.pop %v2221
        %v2223 = vmul.f32 %v2220, 1.442695
        %v2224 = vpow.pop %v2223
        %v2225 = vsel %vm1963, %v2222, 0.0
        %v2226 = vsel %vm1963, %v2224, 0.0
        %v2227 = vadd.f32 %v2225, %v2226
        %v2228 = vrot.slane %v2227, 4
        %v2229 = vadd.f32 %v2227, %v2228
        %v2230 = vrot.slane %v2229, 2
        %v2231 = vadd.f32 %v2229, %v2230
        %v2232 = vrot.slane %v2231, 1
        %v2233 = vadd.f32 %v2231, %v2232
        %v2234 = vlog2.pop %v2233
        %v2235 = vmul.f32 %v2234, 0.6931472
        %v2236 = vadd.f32 %v2218, %v2235
        %v2237 = vsub.f32 %v2208, %v2236
        %v2238 = vsub.f32 %v2209, %v2236
        %v2239 = vsel %vm1963, %v2237, -inf
        %2240 = vmax.xlane.f32.xlu0 %v2239
        %v2241 = vpop.xlane.xlu0 %2240
        %v2242 = vsel %vm1963, %v2238, -inf
        %2243 = vmax.xlane.f32.xlu0 %v2242
        %v2244 = vpop.xlane.xlu0 %2243
        %v2245 = vsub.f32 %v2237, %v2241
        %v2246 = vsub.f32 %v2238, %v2244
        %v2247 = vmul.f32 %v2245, 1.442695
        %v2248 = vpow.pop %v2247
        %v2249 = vmul.f32 %v2246, 1.442695
        %v2250 = vpow.pop %v2249
        %v2251 = vsel %vm1963, %v2248, 0.0
        %2252 = vadd.xlane.f32.xlu0 %v2251
        %v2253 = vpop.xlane.xlu0 %2252
        %v2254 = vsel %vm1963, %v2250, 0.0
        %2255 = vadd.xlane.f32.xlu0 %v2254
        %v2256 = vpop.xlane.xlu0 %2255
        %v2257 = vlog2.pop %v2253
        %v2258 = vmul.f32 %v2257, 0.6931472
        %v2259 = vlog2.pop %v2256
        %v2260 = vmul.f32 %v2259, 0.6931472
        %v2261 = vadd.f32 %v2241, %v2258
        %v2262 = vadd.f32 %v2244, %v2260
        %v2263 = vsub.f32 %v2237, %v2261
        %v2264 = vsub.f32 %v2238, %v2262
        %v2265 = vsel %vm1963, %v2263, -inf
        %v2266 = vsel %vm1963, %v2264, -inf
        %v2267 = vmax.f32 %v2265, %v2266
        %v2268 = vrot.slane %v2267, 4
        %v2269 = vmax.f32 %v2267, %v2268
        %v2270 = vrot.slane %v2269, 2
        %v2271 = vmax.f32 %v2269, %v2270
        %v2272 = vrot.slane %v2271, 1
        %v2273 = vmax.f32 %v2271, %v2272
        %v2274 = vsub.f32 %v2263, %v2273
        %v2275 = vsub.f32 %v2264, %v2273
        %v2276 = vmul.f32 %v2274, 1.442695
        %v2277 = vpow.pop %v2276
        %v2278 = vmul.f32 %v2275, 1.442695
        %v2279 = vpow.pop %v2278
        %v2280 = vsel %vm1963, %v2277, 0.0
        %v2281 = vsel %vm1963, %v2279, 0.0
        %v2282 = vadd.f32 %v2280, %v2281
        %v2283 = vrot.slane %v2282, 4
        %v2284 = vadd.f32 %v2282, %v2283
        %v2285 = vrot.slane %v2284, 2
        %v2286 = vadd.f32 %v2284, %v2285
        %v2287 = vrot.slane %v2286, 1
        %v2288 = vadd.f32 %v2286, %v2287
        %v2289 = vlog2.pop %v2288
        %v2290 = vmul.f32 %v2289, 0.6931472
        %v2291 = vadd.f32 %v2273, %v2290
        %v2292 = vsub.f32 %v2263, %v2291
        %v2293 = vsub.f32 %v2264, %v2291
        %v2294 = vsel %vm1963, %v2292, -inf
        %2295 = vmax.xlane.f32.xlu0 %v2294
        %v2296 = vpop.xlane.xlu0 %2295
        %v2297 = vsel %vm1963, %v2293, -inf
        %2298 = vmax.xlane.f32.xlu0 %v2297
        %v2299 = vpop.xlane.xlu0 %2298
        %v2300 = vsub.f32 %v2292, %v2296
        %v2301 = vsub.f32 %v2293, %v2299
        %v2302 = vmul.f32 %v2300, 1.442695
        %v2303 = vpow.pop %v2302
        %v2304 = vmul.f32 %v2301, 1.442695
        %v2305 = vpow.pop %v2304
        %v2306 = vsel %vm1963, %v2303, 0.0
        %2307 = vadd.xlane.f32.xlu0 %v2306
        %v2308 = vpop.xlane.xlu0 %2307
        %v2309 = vsel %vm1963, %v2305, 0.0
        %2310 = vadd.xlane.f32.xlu0 %v2309
        %v2311 = vpop.xlane.xlu0 %2310
        %v2312 = vlog2.pop %v2308
        %v2313 = vmul.f32 %v2312, 0.6931472
        %v2314 = vlog2.pop %v2311
        %v2315 = vmul.f32 %v2314, 0.6931472
        %v2316 = vadd.f32 %v2296, %v2313
        %v2317 = vadd.f32 %v2299, %v2315
        %v2318 = vsub.f32 %v2292, %v2316
        %v2319 = vsub.f32 %v2293, %v2317
        %v2320 = vsel %vm1963, %v2318, -inf
        %v2321 = vsel %vm1963, %v2319, -inf
        %v2322 = vmax.f32 %v2320, %v2321
        %v2323 = vrot.slane %v2322, 4
        %v2324 = vmax.f32 %v2322, %v2323
        %v2325 = vrot.slane %v2324, 2
        %v2326 = vmax.f32 %v2324, %v2325
        %v2327 = vrot.slane %v2326, 1
        %v2328 = vmax.f32 %v2326, %v2327
        %v2329 = vsub.f32 %v2318, %v2328
        %v2330 = vsub.f32 %v2319, %v2328
        %v2331 = vmul.f32 %v2329, 1.442695
        %v2332 = vpow.pop %v2331
        %v2333 = vmul.f32 %v2330, 1.442695
        %v2334 = vpow.pop %v2333
        %v2335 = vsel %vm1963, %v2332, 0.0
        %v2336 = vsel %vm1963, %v2334, 0.0
        %v2337 = vadd.f32 %v2335, %v2336
        %v2338 = vrot.slane %v2337, 4
        %v2339 = vadd.f32 %v2337, %v2338
        %v2340 = vrot.slane %v2339, 2
        %v2341 = vadd.f32 %v2339, %v2340
        %v2342 = vrot.slane %v2341, 1
        %v2343 = vadd.f32 %v2341, %v2342
        %v2344 = vlog2.pop %v2343
        %v2345 = vmul.f32 %v2344, 0.6931472
        %v2346 = vadd.f32 %v2328, %v2345
        %v2347 = vsub.f32 %v2318, %v2346
        %v2348 = vsub.f32 %v2319, %v2346
        %v2349 = vsel %vm1963, %v2347, -inf
        %2350 = vmax.xlane.f32.xlu0 %v2349
        %v2351 = vpop.xlane.xlu0 %2350
        %v2352 = vsel %vm1963, %v2348, -inf
        %2353 = vmax.xlane.f32.xlu0 %v2352
        %v2354 = vpop.xlane.xlu0 %2353
        %v2355 = vsub.f32 %v2347, %v2351
        %v2356 = vsub.f32 %v2348, %v2354
        %v2357 = vmul.f32 %v2355, 1.442695
        %v2358 = vpow.pop %v2357
        %v2359 = vmul.f32 %v2356, 1.442695
        %v2360 = vpow.pop %v2359
        %v2361 = vsel %vm1963, %v2358, 0.0
        %2362 = vadd.xlane.f32.xlu0 %v2361
        %v2363 = vpop.xlane.xlu0 %2362
        %v2364 = vsel %vm1963, %v2360, 0.0
        %2365 = vadd.xlane.f32.xlu0 %v2364
        %v2366 = vpop.xlane.xlu0 %2365
        %v2367 = vlog2.pop %v2363
        %v2368 = vmul.f32 %v2367, 0.6931472
        %v2369 = vlog2.pop %v2366
        %v2370 = vmul.f32 %v2369, 0.6931472
        %v2371 = vadd.f32 %v2351, %v2368
        %v2372 = vadd.f32 %v2354, %v2370
        %v2373 = vsub.f32 %v2347, %v2371
        %v2374 = vsub.f32 %v2348, %v2372
        %v2375 = vsel %vm1963, %v2373, -inf
        %v2376 = vsel %vm1963, %v2374, -inf
        %v2377 = vmax.f32 %v2375, %v2376
        %v2378 = vrot.slane %v2377, 4
        %v2379 = vmax.f32 %v2377, %v2378
        %v2380 = vrot.slane %v2379, 2
        %v2381 = vmax.f32 %v2379, %v2380
        %v2382 = vrot.slane %v2381, 1
        %v2383 = vmax.f32 %v2381, %v2382
        %v2384 = vsub.f32 %v2373, %v2383
        %v2385 = vsub.f32 %v2374, %v2383
        %v2386 = vmul.f32 %v2384, 1.442695
        %v2387 = vpow.pop %v2386
        %v2388 = vmul.f32 %v2385, 1.442695
        %v2389 = vpow.pop %v2388
        %v2390 = vsel %vm1963, %v2387, 0.0
        %v2391 = vsel %vm1963, %v2389, 0.0
        %v2392 = vadd.f32 %v2390, %v2391
        %v2393 = vrot.slane %v2392, 4
        %v2394 = vadd.f32 %v2392, %v2393
        %v2395 = vrot.slane %v2394, 2
        %v2396 = vadd.f32 %v2394, %v2395
        %v2397 = vrot.slane %v2396, 1
        %v2398 = vadd.f32 %v2396, %v2397
        %v2399 = vlog2.pop %v2398
        %v2400 = vmul.f32 %v2399, 0.6931472
        %v2401 = vadd.f32 %v2383, %v2400
        %v2402 = vsub.f32 %v2373, %v2401
        %v2403 = vsub.f32 %v2374, %v2401
        %v2404 = vsel %vm1963, %v2402, -inf
        %2405 = vmax.xlane.f32.xlu0 %v2404
        %v2406 = vpop.xlane.xlu0 %2405
        %v2407 = vsel %vm1963, %v2403, -inf
        %2408 = vmax.xlane.f32.xlu0 %v2407
        %v2409 = vpop.xlane.xlu0 %2408
        %v2410 = vsub.f32 %v2402, %v2406
        %v2411 = vsub.f32 %v2403, %v2409
        %v2412 = vmul.f32 %v2410, 1.442695
        %v2413 = vpow.pop %v2412
        %v2414 = vmul.f32 %v2411, 1.442695
        %v2415 = vpow.pop %v2414
        %v2416 = vsel %vm1963, %v2413, 0.0
        %2417 = vadd.xlane.f32.xlu0 %v2416
        %v2418 = vpop.xlane.xlu0 %2417
        %v2419 = vsel %vm1963, %v2415, 0.0
        %2420 = vadd.xlane.f32.xlu0 %v2419
        %v2421 = vpop.xlane.xlu0 %2420
        %v2422 = vlog2.pop %v2418
        %v2423 = vmul.f32 %v2422, 0.6931472
        %v2424 = vlog2.pop %v2421
        %v2425 = vmul.f32 %v2424, 0.6931472
        %v2426 = vadd.f32 %v2406, %v2423
        %v2427 = vadd.f32 %v2409, %v2425
        %v2428 = vsub.f32 %v2402, %v2426
        %v2429 = vsub.f32 %v2403, %v2427
        %v2430 = vsel %vm1963, %v2428, -inf
        %v2431 = vsel %vm1963, %v2429, -inf
        %v2432 = vmax.f32 %v2430, %v2431
        %v2433 = vrot.slane %v2432, 4
        %v2434 = vmax.f32 %v2432, %v2433
        %v2435 = vrot.slane %v2434, 2
        %v2436 = vmax.f32 %v2434, %v2435
        %v2437 = vrot.slane %v2436, 1
        %v2438 = vmax.f32 %v2436, %v2437
        %v2439 = vsub.f32 %v2428, %v2438
        %v2440 = vsub.f32 %v2429, %v2438
        %v2441 = vmul.f32 %v2439, 1.442695
        %v2442 = vpow.pop %v2441
        %v2443 = vmul.f32 %v2440, 1.442695
        %v2444 = vpow.pop %v2443
        %v2445 = vsel %vm1963, %v2442, 0.0
        %v2446 = vsel %vm1963, %v2444, 0.0
        %v2447 = vadd.f32 %v2445, %v2446
        %v2448 = vrot.slane %v2447, 4
        %v2449 = vadd.f32 %v2447, %v2448
        %v2450 = vrot.slane %v2449, 2
        %v2451 = vadd.f32 %v2449, %v2450
        %v2452 = vrot.slane %v2451, 1
        %v2453 = vadd.f32 %v2451, %v2452
        %v2454 = vlog2.pop %v2453
        %v2455 = vmul.f32 %v2454, 0.6931472
        %v2456 = vadd.f32 %v2438, %v2455
        %v2457 = vsub.f32 %v2428, %v2456
        %v2458 = vsub.f32 %v2429, %v2456
        %v2459 = vsel %vm1963, %v2457, -inf
        %2460 = vmax.xlane.f32.xlu0 %v2459
        %v2461 = vpop.xlane.xlu0 %2460
        %v2462 = vsel %vm1963, %v2458, -inf
        %2463 = vmax.xlane.f32.xlu0 %v2462
        %v2464 = vpop.xlane.xlu0 %2463
        %v2465 = vsub.f32 %v2457, %v2461
        %v2466 = vsub.f32 %v2458, %v2464
        %v2467 = vmul.f32 %v2465, 1.442695
        %v2468 = vpow.pop %v2467
        %v2469 = vmul.f32 %v2466, 1.442695
        %v2470 = vpow.pop %v2469
        %v2471 = vsel %vm1963, %v2468, 0.0
        %2472 = vadd.xlane.f32.xlu0 %v2471
        %v2473 = vpop.xlane.xlu0 %2472
        %v2474 = vsel %vm1963, %v2470, 0.0
        %2475 = vadd.xlane.f32.xlu0 %v2474
        %v2476 = vpop.xlane.xlu0 %2475
        %v2477 = vlog2.pop %v2473
        %v2478 = vmul.f32 %v2477, 0.6931472
        %v2479 = vlog2.pop %v2476
        %v2480 = vmul.f32 %v2479, 0.6931472
        %v2481 = vadd.f32 %v2461, %v2478
        %v2482 = vadd.f32 %v2464, %v2480
        %v2483 = vsub.f32 %v2457, %v2481
        %v2484 = vsub.f32 %v2458, %v2482
        %v2485 = vsel %vm1963, %v2483, -inf
        %v2486 = vsel %vm1963, %v2484, -inf
        %v2487 = vmax.f32 %v2485, %v2486
        %v2488 = vrot.slane %v2487, 4
        %v2489 = vmax.f32 %v2487, %v2488
        %v2490 = vrot.slane %v2489, 2
        %v2491 = vmax.f32 %v2489, %v2490
        %v2492 = vrot.slane %v2491, 1
        %v2493 = vmax.f32 %v2491, %v2492
        %v2494 = vsub.f32 %v2483, %v2493
        %v2495 = vsub.f32 %v2484, %v2493
        %v2496 = vmul.f32 %v2494, 1.442695
        %v2497 = vpow.pop %v2496
        %v2498 = vmul.f32 %v2495, 1.442695
        %v2499 = vpow.pop %v2498
        %v2500 = vsel %vm1963, %v2497, 0.0
        %v2501 = vsel %vm1963, %v2499, 0.0
        %v2502 = vadd.f32 %v2500, %v2501
        %v2503 = vrot.slane %v2502, 4
        %v2504 = vadd.f32 %v2502, %v2503
        %v2505 = vrot.slane %v2504, 2
        %v2506 = vadd.f32 %v2504, %v2505
        %v2507 = vrot.slane %v2506, 1
        %v2508 = vadd.f32 %v2506, %v2507
        %v2509 = vlog2.pop %v2508
        %v2510 = vmul.f32 %v2509, 0.6931472
        %v2511 = vadd.f32 %v2493, %v2510
        %v2512 = vsub.f32 %v2483, %v2511
        %v2513 = vsub.f32 %v2484, %v2511
        %v2514 = vmul.f32 %v2512, 1.442695
        %v2515 = vpow.pop %v2514
        %v2516 = vmul.f32 %v2513, 1.442695
        %v2517 = vpow.pop %v2516
        %v2518 = vsel %vm1957, %v2515, 0.0
        %v2519 = vsel %vm1958, %v2517, 0.0
        %v2520 = vld [vmem:[%s440] sm:$0xff]
        %v2521 = vld [vmem:[%s440 + $0x8] sm:$0xff]
        %v2522 = vsel %vm1963, %v2520, 0.0
        %2523 = vadd.xlane.f32.xlu0 %v2522
        %v2524 = vpop.xlane.xlu0 %2523
        %v2525 = vsel %vm1963, %v2521, 0.0
        %2526 = vadd.xlane.f32.xlu0 %v2525
        %v2527 = vpop.xlane.xlu0 %2526
        %vm2528 = vcmp.gt.f32.partialorder %v2524, 0.0
        %vm2529 = vcmp.gt.f32.partialorder %v2527, 0.0
        %v2530 = vadd.f32 %v2522, %v2525
        %v2531 = vrot.slane %v2530, 4
        %v2532 = vadd.f32 %v2530, %v2531
        %v2533 = vrot.slane %v2532, 2
        %v2534 = vadd.f32 %v2532, %v2533
        %v2535 = vrot.slane %v2534, 1
        %v2536 = vadd.f32 %v2534, %v2535
        %vm2537 = vcmp.gt.f32.partialorder %v2536, 0.0
        %v2538 = vsel %vm2528, 1, 0
        %v2539 = vsel %vm2529, 1, 0
        %vm2540 = vcmp.eq.s32.totalorder %v2538, 1
        %vm2541 = vcmp.eq.s32.totalorder %v2539, 1
        %v2542 = vsel %vm2540, 0.0, %v2518
        %v2543 = vsel %vm2541, 0.0, %v2519
        %v2544 = vsel %vm2537, 1, 0
        %vm2545 = vcmp.eq.s32.totalorder %v2544, 1
        %v2546 = vsel %vm2545, 0.0, %v2542
        %v2547 = vsel %vm2545, 0.0, %v2543
        %v2548 = vadd.f32 %v2546, %v2520
        %v2549 = vadd.f32 %v2547, %v2521
        %v2551 = vsel %vm1963, %v2548, 0
        %v2554 = vsel %vm1963, %v2549, 0
        %2556 = vmatprep.subr.mxu0 0.0
        %2557 = vmatpush1.msra.mxu0 %v1845
        %2558 = vmatprep.subr.mxu0 0.0
        %2559 = vmatpush1.msra.mxu0 %v1846
        %2560 = vmatprep.subr.mxu0 0.0
        %2561 = vmatpush1.msra.mxu0 0.0
        %2562 = vmatprep.subr.mxu0 0.0
        %2563 = vmatpush1.msra.mxu0 0.0
        %2564 = vmatprep.subr.mxu0 0.0
        %2565 = vmatpush1.msra.mxu0 0.0
        %2566 = vmatprep.subr.mxu0 0.0
        %2567 = vmatpush1.msra.mxu0 0.0
        %2568 = vmatprep.subr.mxu0 0.0
        %2569 = vmatpush1.msra.mxu0 0.0
        %2570 = vmatprep.subr.mxu0 0.0
        %2571 = vmatpush1.msra.mxu0 0.0
        %2572 = vmatprep.subr.mxu0 0.0
        %2573 = vmatpush1.msra.mxu0 0.0
        %2574 = vmatprep.subr.mxu0 0.0
        %2575 = vmatpush1.msra.mxu0 0.0
        %2576 = vmatprep.subr.mxu0 0.0
        %2577 = vmatpush1.msra.mxu0 0.0
        %2578 = vmatprep.subr.mxu0 0.0
        %2579 = vmatpush1.msra.mxu0 0.0
        %2580 = vmatprep.subr.mxu0 0.0
        %2581 = vmatpush1.msra.mxu0 0.0
        %2582 = vmatprep.subr.mxu0 0.0
        %2583 = vmatpush1.msra.mxu0 0.0
        %2584 = vmatprep.subr.mxu0 0.0
        %2585 = vmatpush1.msra.mxu0 0.0
        %2586 = vmatprep.subr.mxu0 0.0
        %2587 = vmatpush1.msra.mxu0 0.0
        %2588 = vmatprep.subr.mxu0 0.0
        %2589 = vmatpush1.msra.mxu0 0.0
        %2590 = vmatprep.subr.mxu0 0.0
        %2591 = vmatpush1.msra.mxu0 0.0
        %2592 = vmatprep.subr.mxu0 0.0
        %2593 = vmatpush1.msra.mxu0 0.0
        %2594 = vmatprep.subr.mxu0 0.0
        %2595 = vmatpush1.msra.mxu0 0.0
        %2596 = vmatprep.subr.mxu0 0.0
        %2597 = vmatpush1.msra.mxu0 0.0
        %2598 = vmatprep.subr.mxu0 0.0
        %2599 = vmatpush1.msra.mxu0 0.0
        %2600 = vmatprep.subr.mxu0 0.0
        %2601 = vmatpush1.msra.mxu0 0.0
        %2602 = vmatprep.subr.mxu0 0.0
        %2603 = vmatpush1.msra.mxu0 0.0
        %2604 = vmatprep.subr.mxu0 0.0
        %2605 = vmatpush1.msra.mxu0 0.0
        %2606 = vmatprep.subr.mxu0 0.0
        %2607 = vmatpush1.msra.mxu0 0.0
        %2608 = vmatprep.subr.mxu0 0.0
        %2609 = vmatpush1.msra.mxu0 0.0
        %2610 = vmatprep.subr.mxu0 0.0
        %2611 = vmatpush1.msra.mxu0 0.0
        %2612 = vmatprep.subr.mxu0 0.0
        %2613 = vmatpush1.msra.mxu0 0.0
        %2614 = vmatprep.subr.mxu0 0.0
        %2615 = vmatpush1.msra.mxu0 0.0
        %2616 = vmatprep.subr.mxu0 0.0
        %2617 = vmatpush1.msra.mxu0 0.0
        %2618 = vmatprep.subr.mxu0 0.0
        %2619 = vmatpush1.msra.mxu0 0.0
        %2620 = vmatprep.mubr.f32.mxu0 0.0
        %2621 = vmatmul.mubr.f32.gmra.mrb[0].mxu0 %v2551
        %v2622 = vpop.f32.mrb[0].mxu0
        %v2623 = vadd.f32 0.0, %v2622
        %v2624 = vpop.f32.mrb[0].mxu0
        %2625 = vmatprep.mubr.f32.mxu0 0.0
        %2626 = vmatmul.mubr.f32.gmra.mrb[0].mxu0 %v2554
        %v2627 = vpop.f32.mrb[0].mxu0
        %v2628 = vadd.f32 0.0, %v2627
        %v2629 = vpop.f32.mrb[0].mxu0
        %2630 = vdwg.mxu0
        %v2631 = vsub.f32 %v1843, %v2623
        %v2632 = vsub.f32 %v1844, %v2628
        %2633 = vst.msk [vmem:[%s412] sm:$0xff] %vm474, %v2631
        %2634 = vst.msk [vmem:[%s412 + $0x8] sm:$0xff] %vm474, %v2632
        %2635 = vst.msk [vmem:[%s419] sm:$0xff] %vm474, %v1845
        %2636 = vst.msk [vmem:[%s419 + $0x8] sm:$0xff] %vm474, %v1846
        %v2637 = vmul.f32 %v1843, %v1942
        %v2638 = vmul.f32 %v1844, %v1947
        %2640 = vset.pattern.permute.xlu0 0
        %2641 = vperm.xlu0 %2640, %v1849
        %v2642 = vpop.permute.xlu0 %2641
        %2645 = vset.pattern.permute.xlu0 0
        %2646 = vperm.xlu0 %2645, %v1850
        %v2647 = vpop.permute.xlu0 %2646
        %v2649 = vmul.f32 %v1845, %v2642
        %v2650 = vmul.f32 %v1846, %v2647
        %vm2651 = vcmask 7168
        %v2652 = vsel %vm2651, %v1847, 0.0
        %v2653 = vsel %vm2651, %v1848, 0.0
        %v2654 = vadd.f32 %v2652, %v2653
        %v2655 = vrot.slane %v2654, 4
        %v2656 = vadd.f32 %v2654, %v2655
        %v2657 = vrot.slane %v2656, 2
        %v2658 = vadd.f32 %v2656, %v2657
        %v2659 = vrot.slane %v2658, 1
        %v2660 = vadd.f32 %v2658, %v2659
        %v2661 = vsel %vm2651, %v1849, 0.0
        %v2662 = vsel %vm2651, %v1850, 0.0
        %v2663 = vadd.f32 %v2661, %v2662
        %v2664 = vrot.slane %v2663, 4
        %v2665 = vadd.f32 %v2663, %v2664
        %v2666 = vrot.slane %v2665, 2
        %v2667 = vadd.f32 %v2665, %v2666
        %v2668 = vrot.slane %v2667, 1
        %v2669 = vadd.f32 %v2667, %v2668
        %v2670 = vsel %vm474, %v2637, 0.0
        %v2671 = vsel %vm474, %v2638, 0.0
        %v2672 = vadd.f32 %v2670, %v2671
        %v2673 = vrot.slane %v2672, 4
        %v2674 = vadd.f32 %v2672, %v2673
        %v2675 = vrot.slane %v2674, 2
        %v2676 = vadd.f32 %v2674, %v2675
        %v2677 = vrot.slane %v2676, 1
        %v2678 = vadd.f32 %v2676, %v2677
        %v2679 = vrcp.pop %v2660
        %2681 = vset.pattern.permute.xlu0 0
        %2682 = vperm.xlu0 %2681, %v2679
        %v2683 = vpop.permute.xlu0 %2682
        %v2685 = vmul.f32 %v2678, %v2683
        %v2686 = vsel %vm474, %v2649, 0.0
        %v2687 = vsel %vm474, %v2650, 0.0
        %v2688 = vadd.f32 %v2686, %v2687
        %v2689 = vrot.slane %v2688, 4
        %v2690 = vadd.f32 %v2688, %v2689
        %v2691 = vrot.slane %v2690, 2
        %v2692 = vadd.f32 %v2690, %v2691
        %v2693 = vrot.slane %v2692, 1
        %v2694 = vadd.f32 %v2692, %v2693
        %v2695 = vrcp.pop %v2669
        %2697 = vset.pattern.permute.xlu0 0
        %2698 = vperm.xlu0 %2697, %v2695
        %v2699 = vpop.permute.xlu0 %2698
        %v2701 = vmul.f32 %v2694, %v2699
        %vm2702 = vcmask 1040384
        %v2703 = vsel %vm2702, %v2685, %v2701
        %v2704 = vld [vmem:[%s4] sm:$0xff]
        %v2705 = vld [vmem:[%s4 + $0x8] sm:$0xff]
        %v2706 = vld [vmem:[%s4 + $0x10] sm:$0xff]
        %v2707 = vld [vmem:[%s4 + $0x18] sm:$0xff]
        %v2709 = vsel %vm474, %v2703, 0
        %2711 = vmatprep.subr.mxu0 0.0
        %2712 = vmatpush1.msra.mxu0 %v2704
        %2713 = vmatprep.subr.mxu0 0.0
        %2714 = vmatpush1.msra.mxu0 %v2705
        %2715 = vmatprep.subr.mxu0 0.0
        %2716 = vmatpush1.msra.mxu0 %v2706
        %2717 = vmatprep.subr.mxu0 0.0
        %2718 = vmatpush1.msra.mxu0 %v2707
        %2719 = vmatprep.subr.mxu0 0.0
        %2720 = vmatpush1.msra.mxu0 0.0
        %2721 = vmatprep.subr.mxu0 0.0
        %2722 = vmatpush1.msra.mxu0 0.0
        %2723 = vmatprep.subr.mxu0 0.0
        %2724 = vmatpush1.msra.mxu0 0.0
        %2725 = vmatprep.subr.mxu0 0.0
        %2726 = vmatpush1.msra.mxu0 0.0
        %2727 = vmatprep.subr.mxu0 0.0
        %2728 = vmatpush1.msra.mxu0 0.0
        %2729 = vmatprep.subr.mxu0 0.0
        %2730 = vmatpush1.msra.mxu0 0.0
        %2731 = vmatprep.subr.mxu0 0.0
        %2732 = vmatpush1.msra.mxu0 0.0
        %2733 = vmatprep.subr.mxu0 0.0
        %2734 = vmatpush1.msra.mxu0 0.0
        %2735 = vmatprep.subr.mxu0 0.0
        %2736 = vmatpush1.msra.mxu0 0.0
        %2737 = vmatprep.subr.mxu0 0.0
        %2738 = vmatpush1.msra.mxu0 0.0
        %2739 = vmatprep.subr.mxu0 0.0
        %2740 = vmatpush1.msra.mxu0 0.0
        %2741 = vmatprep.subr.mxu0 0.0
        %2742 = vmatpush1.msra.mxu0 0.0
        %2743 = vmatprep.subr.mxu0 0.0
        %2744 = vmatpush1.msra.mxu0 0.0
        %2745 = vmatprep.subr.mxu0 0.0
        %2746 = vmatpush1.msra.mxu0 0.0
        %2747 = vmatprep.subr.mxu0 0.0
        %2748 = vmatpush1.msra.mxu0 0.0
        %2749 = vmatprep.subr.mxu0 0.0
        %2750 = vmatpush1.msra.mxu0 0.0
        %2751 = vmatprep.subr.mxu0 0.0
        %2752 = vmatpush1.msra.mxu0 0.0
        %2753 = vmatprep.subr.mxu0 0.0
        %2754 = vmatpush1.msra.mxu0 0.0
        %2755 = vmatprep.subr.mxu0 0.0
        %2756 = vmatpush1.msra.mxu0 0.0
        %2757 = vmatprep.subr.mxu0 0.0
        %2758 = vmatpush1.msra.mxu0 0.0
        %2759 = vmatprep.subr.mxu0 0.0
        %2760 = vmatpush1.msra.mxu0 0.0
        %2761 = vmatprep.subr.mxu0 0.0
        %2762 = vmatpush1.msra.mxu0 0.0
        %2763 = vmatprep.subr.mxu0 0.0
        %2764 = vmatpush1.msra.mxu0 0.0
        %2765 = vmatprep.subr.mxu0 0.0
        %2766 = vmatpush1.msra.mxu0 0.0
        %2767 = vmatprep.subr.mxu0 0.0
        %2768 = vmatpush1.msra.mxu0 0.0
        %2769 = vmatprep.subr.mxu0 0.0
        %2770 = vmatpush1.msra.mxu0 0.0
        %2771 = vmatprep.subr.mxu0 0.0
        %2772 = vmatpush1.msra.mxu0 0.0
        %2773 = vmatprep.subr.mxu0 0.0
        %2774 = vmatpush1.msra.mxu0 0.0
        %2775 = vmatprep.mubr.f32.mxu0 0.0
        %2776 = vmatmul.mubr.f32.gmra.mrb[0].mxu0 %v2709
        %v2777 = vpop.f32.mrb[0].mxu0
        %v2778 = vadd.f32 0.0, %v2777
        %v2779 = vpop.f32.mrb[0].mxu0
        %2780 = vdwg.mxu0
        %v2781 = vtanh.pop %v2778
        %v2782 = vlaneseq
        %v2783 = vshrl.u32 %v2782, 7
        %v2784 = vsub.s32 0, %v2783
        %v2785 = vrot.slane %v2781, %v2784
        %v2786 = vmul.f32 %v1843, %v2785
        %v2787 = vmul.f32 %v1844, %v2785
        %v2788 = vsel %vm474, %v2786, 0.0
        %2789 = vadd.xlane.f32.xlu0 %v2788
        %v2790 = vpop.xlane.xlu0 %2789
        %v2791 = vsel %vm474, %v2787, 0.0
        %2792 = vadd.xlane.f32.xlu0 %v2791
        %v2793 = vpop.xlane.xlu0 %2792
        %v2794 = vxor.u32 %v2790, 2147483648
        %v2795 = vxor.u32 %v2793, 2147483648
        %v2796 = vmul.f32 %v2794, 1.442695
        %v2797 = vpow.pop %v2796
        %v2798 = vmul.f32 %v2795, 1.442695
        %v2799 = vpow.pop %v2798
        %v2800 = vadd.f32 %v2797, 1.0
        %v2801 = vadd.f32 %v2799, 1.0
        %v2802 = vrcp.pop %v2800
        %v2803 = vmul.f32 1.0, %v2802
        %v2804 = vrcp.pop %v2801
        %v2805 = vmul.f32 1.0, %v2804
        %v2806 = vlaneseq
        %v2807 = vshrl.u32 %v2806, 7
        %v2808 = vsub.s32 1, %v2807
        %v2809 = vrot.slane %v2781, %v2808
        %v2810 = vmul.f32 %v1845, %v2809
        %v2811 = vmul.f32 %v1846, %v2809
        %v2812 = vsel %vm474, %v2810, 0.0
        %2813 = vadd.xlane.f32.xlu0 %v2812
        %v2814 = vpop.xlane.xlu0 %2813
        %v2815 = vsel %vm474, %v2811, 0.0
        %2816 = vadd.xlane.f32.xlu0 %v2815
        %v2817 = vpop.xlane.xlu0 %2816
        %v2818 = vxor.u32 %v2814, 2147483648
        %v2819 = vxor.u32 %v2817, 2147483648
        %v2820 = vmul.f32 %v2818, 1.442695
        %v2821 = vpow.pop %v2820
        %v2822 = vmul.f32 %v2819, 1.442695
        %v2823 = vpow.pop %v2822
        %v2824 = vadd.f32 %v2821, 1.0
        %v2825 = vadd.f32 %v2823, 1.0
        %v2826 = vrcp.pop %v2824
        %v2827 = vmul.f32 1.0, %v2826
        %v2828 = vrcp.pop %v2825
        %v2829 = vmul.f32 1.0, %v2828
        %v2830 = vmul.f32 %v2803, %v2637
        %v2831 = vmul.f32 %v2805, %v2638
        %v2832 = vsel %vm474, %v2830, 0.0
        %v2833 = vsel %vm474, %v2831, 0.0
        %v2834 = vadd.f32 %v2832, %v2833
        %v2835 = vrot.slane %v2834, 4
        %v2836 = vadd.f32 %v2834, %v2835
        %v2837 = vrot.slane %v2836, 2
        %v2838 = vadd.f32 %v2836, %v2837
        %v2839 = vrot.slane %v2838, 1
        %v2840 = vadd.f32 %v2838, %v2839
        %vm2841 = vcmask 253952
        %2842 = vst.msk [vmem:[%s452] sm:$0x1] %vm2841, %v2840
        %v2843 = vmul.f32 %v2827, %v2649
        %v2844 = vmul.f32 %v2829, %v2650
        %v2845 = vsel %vm474, %v2843, 0.0
        %v2846 = vsel %vm474, %v2844, 0.0
        %v2847 = vadd.f32 %v2845, %v2846
        %v2848 = vrot.slane %v2847, 4
        %v2849 = vadd.f32 %v2847, %v2848
        %v2850 = vrot.slane %v2849, 2
        %v2851 = vadd.f32 %v2849, %v2850
        %v2852 = vrot.slane %v2851, 1
        %v2853 = vadd.f32 %v2851, %v2852
        %2854 = vst.msk [vmem:[%s452 + $0x1] sm:$0x1] %vm2841, %v2853
        %s2855 = sand.u32 %s229, 1
        %s2856 = scalar_lea.sflag [#allocation3], %s2855
        %s2857 = sand.u32 %s229, 1
        %s2858 = smul.addr %s2857, 16
        %s2859 = scalar_lea.vmem [#allocation2], %s2858
        %s2860 = sand.u32 %s255, 1
        %s2861 = scalar_lea.sflag [#allocation5], %s2860
        %s2862 = sand.u32 %s255, 1
        %s2863 = smul.addr %s2862, 16
        %s2864 = scalar_lea.vmem [#allocation4], %s2863
        %p2865 = scmp.lt.s32.totalorder %s28, 1
        %s2866 = scalar_select %p2865, %s28, 1
        %s2867 = smul.addr %s2866, 2
        %s2868 = scalar_lea.vmem %s10, %s2867
        // Predicated region
        $region53: #{graph_encoder_forward.1} parent=51 // pred_check
          %p2869 = pneg %p239
        $region54: #{graph_encoder_forward.1} parent=51 // pred_check_branch
          %2871 = sbr.rel (%p2869) target = $region56
        $region55: #{graph_encoder_forward.1} parent=51 // pred_region
          %s2873 = ssub.s32 256, 256
          %2874 = vsyncadd %s2856, %s2873
          %s2875 = smul.addr %s28, 2
          %s2876 = smul.addr %s2875, 128
          %s2877 = scalar_lea.hbm %s8, %s2876
          %s2878 = sshll.u32 %s2859, 4
          %s2879 = int_to_ptr.vmem [resolvable:$true] %s2878
          %2884 = dma.vmem_to_hbm [thread:$0]  %s2879, 256, %s2877, %s2856, 128, 128, 8
        $region56: #{graph_encoder_forward.1} parent=51 // pred_fallthru
          _
        // Predicated region
        $region57: #{graph_encoder_forward.1} parent=51 // pred_check
          %p2885 = pneg %p265
        $region58: #{graph_encoder_forward.1} parent=51 // pred_check_branch
          %2887 = sbr.rel (%p2885) target = $region60
        $region59: #{graph_encoder_forward.1} parent=51 // pred_region
          %s2889 = ssub.s32 256, 256
          %2890 = vsyncadd %s2861, %s2889
          %s2891 = smul.addr %s28, 2
          %s2892 = smul.addr %s2891, 128
          %s2893 = scalar_lea.hbm %s9, %s2892
          %s2894 = sshll.u32 %s2864, 4
          %s2895 = int_to_ptr.vmem [resolvable:$true] %s2894
          %2900 = dma.vmem_to_hbm [thread:$0]  %s2895, 256, %s2893, %s2861, 128, 128, 8
        $region60: #{graph_encoder_forward.1} parent=51 // pred_fallthru
          _
        // Predicated region
        $region61: #{graph_encoder_forward.1} parent=51 // pred_check
          %p2901 = pneg %p291
        $region62: #{graph_encoder_forward.1} parent=51 // pred_check_branch
          %2903 = sbr.rel (%p2901) target = $region64
        $region63: #{graph_encoder_forward.1} parent=51 // pred_region
          _
        $region64: #{graph_encoder_forward.1} parent=51 // pred_fallthru
          _
      $region52: #{graph_encoder_forward.1} parent=5 // pred_fallthru
        _
      %p2904 = scmp.le.s32.totalorder 2, %s23
      // Predicated region
      $region65: #{graph_encoder_forward.1} parent=5 // pred_check
        %p2905 = pneg %p2904
      $region66: #{graph_encoder_forward.1} parent=5 // pred_check_branch
        %2907 = sbr.rel (%p2905) target = $region68
      $region67: #{graph_encoder_forward.1} parent=5 // pred_region
        %s2908 = ssub.s32 %s23, 2
        // Predicated region
        $region69: #{graph_encoder_forward.1} parent=67 // pred_check
          %p2909 = pneg %p245
        $region70: #{graph_encoder_forward.1} parent=67 // pred_check_branch
          %2911 = sbr.rel (%p2909) target = $region72
        $region71: #{graph_encoder_forward.1} parent=67 // pred_region
          %s2912 = sand.u32 %s230, 1
          %s2913 = scalar_lea.sflag [#allocation3], %s2912
          %s2914 = sand.u32 %s230, 1
          %s2915 = smul.addr %s2914, 16
          %s2916 = scalar_lea.vmem [#allocation2], %s2915
          %2917 = dma.done %s2913, 256
        $region72: #{graph_encoder_forward.1} parent=67 // pred_fallthru
          _
        // Predicated region
        $region73: #{graph_encoder_forward.1} parent=67 // pred_check
          %p2918 = pneg %p271
        $region74: #{graph_encoder_forward.1} parent=67 // pred_check_branch
          %2920 = sbr.rel (%p2918) target = $region76
        $region75: #{graph_encoder_forward.1} parent=67 // pred_region
          %s2921 = sand.u32 %s256, 1
          %s2922 = scalar_lea.sflag [#allocation5], %s2921
          %s2923 = sand.u32 %s256, 1
          %s2924 = smul.addr %s2923, 16
          %s2925 = scalar_lea.vmem [#allocation4], %s2924
          %2926 = dma.done %s2922, 256
        $region76: #{graph_encoder_forward.1} parent=67 // pred_fallthru
          _
        // Predicated region
        $region77: #{graph_encoder_forward.1} parent=67 // pred_check
          %p2927 = pneg %p297
        $region78: #{graph_encoder_forward.1} parent=67 // pred_check_branch
          %2929 = sbr.rel (%p2927) target = $region80
        $region79: #{graph_encoder_forward.1} parent=67 // pred_region
          %p2930 = scmp.lt.s32.totalorder %s29, 1
          %s2931 = scalar_select %p2930, %s29, 1
          %s2932 = smul.addr %s2931, 2
          %s2933 = scalar_lea.vmem %s10, %s2932
        $region80: #{graph_encoder_forward.1} parent=67 // pred_fallthru
          _
      $region68: #{graph_encoder_forward.1} parent=5 // pred_fallthru
        _
    $region6: #{graph_encoder_forward.1} parent=1 // loop_footer
      %s27 = sadd.s32 1, %s23
    $region7: #{graph_encoder_forward.1} parent=1 // loop_footer_branch
      %22 = sbr.rel target = $region3
    $region8: #{graph_encoder_forward.1} parent=1 // loop_exit
      _
    %2934 = vsyncpa [#allocation3], 1
    %s2935 = scalar_lea.sflag [#allocation3], 1
    %2936 = vsyncpa %s2935, 1
    %2937 = vsyncpa [#allocation5], 1
    %s2938 = scalar_lea.sflag [#allocation5], 1
    %2939 = vsyncpa %s2938, 1

</llo_original>
